<compile_context>
chip_gen: v7x
topology: tpu7x:2x2x1
jax: 0.10.0
libtpu: 0.0.40
codegen_flags: <defaults>
</compile_context>

<pallas_src>
import functools

import jax
import jax.numpy as jnp
from jax import lax
from jax.experimental import pallas as pl
from jax.experimental.pallas import tpu as pltpu


def _vq_kernel(xt_ref, e_ref, et_ref, e2_ref,
               qt_ref, idx_ref, sse_ref, cnt_ref, *, n_valid):
    xt = xt_ref[...]                   # (D, TN)  f32, feature-major activations
    e = e_ref[...]                     # (Kp, D)  f32 padded codebook
    et = et_ref[...]                   # (D, Kp)  f32 codebook transpose
    e2 = e2_ref[...]                   # (Kp, 1)  f32, padded entries ~1e30
    D, TN = xt.shape
    Kp = e.shape[0]

    # distances^T = ||x||^2 + ||e||^2 - 2 E@X   (no transposes needed anywhere)
    x2 = jnp.sum(xt * xt, axis=0, keepdims=True)                    # (1, TN)
    ex = jnp.dot(e, xt, preferred_element_type=jnp.float32)         # (Kp, TN)
    d = x2 + e2 - 2.0 * ex                                          # (Kp, TN)

    # argmin over the codebook (sublane) axis, first occurrence on ties
    min_d = jnp.min(d, axis=0, keepdims=True)                       # (1, TN)
    ids = lax.broadcasted_iota(jnp.int32, d.shape, 0)               # (Kp, TN)
    idx = jnp.min(jnp.where(d == min_d, ids, Kp), axis=0,
                  keepdims=True)                                    # (1, TN) int32

    enc = (ids == idx).astype(jnp.float32)                          # (Kp, TN)
    qt = jnp.dot(et, enc, preferred_element_type=jnp.float32)       # (D, TN)

    qt_ref[...] = qt                                                # lane-dense
    idx_ref[...] = idx                                              # lane-dense

    # mask columns beyond the true N (ragged last block reads undefined data,
    # so use where — a plain multiply could turn Inf garbage into NaN)
    col = pl.program_id(0) * TN + lax.broadcasted_iota(jnp.int32, (1, TN), 1)
    valid = col < n_valid                                           # (1, TN) bool

    diff = jnp.where(valid, qt - xt, 0.0)                           # (D, TN)
    sse_ref[...] = jnp.sum(diff * diff, axis=1,
                           keepdims=True).reshape(1, D, 1)          # (1, D, 1)
    cnt_ref[...] = jnp.sum(jnp.where(valid, enc, 0.0), axis=1,
                           keepdims=True).reshape(1, Kp, 1)         # (1, Kp, 1)


def _pick_tile(n, tn):
    """Lane-aligned row tile; keep >= 2 blocks when N allows (v7x megacore)."""
    tn = max(128, ((tn + 127) // 128) * 128)
    half = (((n + 1) // 2) + 127) // 128 * 128
    return max(128, min(tn, half))


@functools.partial(jax.jit,
                   static_argnames=("commitment_cost", "tn", "return_encodings"))
def vq_forward(x_nchw, embedding_w, commitment_cost=0.25, tn=2048,
               return_encodings=True):
    """Forward of VectorQuantizer.

    Args:
      x_nchw:      (B, C, H, W) float32, C == embedding_dim
      embedding_w: (K, D) float32 codebook
    Returns:
      (loss, quantized_nchw, perplexity, encodings (N, K) or None,
       indices (B, 1, H, W)), matching the PyTorch module's forward.
    """
    B, C, H, W = x_nchw.shape
    K, D = embedding_w.shape
    assert C == D
    N = B * H * W

    # Feature-major activations: column n = ((b*H + h)*W + w), same row order
    # as the PyTorch flat_input.  Single transpose pass (was needed anyway).
    x_t = jnp.transpose(x_nchw, (1, 0, 2, 3)).reshape(D, N).astype(jnp.float32)

    TN = _pick_tile(N, tn)
    n_blocks = pl.cdiv(N, TN)

    # Codebook prep hoisted out of the kernel; pad K to full 128 lanes.
    Kp = max(128, ((K + 127) // 128) * 128)
    e_f32 = embedding_w.astype(jnp.float32)
    e_pad = jnp.pad(e_f32, ((0, Kp - K), (0, 0)))                   # zero rows
    et_pad = jnp.transpose(e_pad)                                   # (D, Kp)
    e2 = jnp.sum(e_f32 * e_f32, axis=1)                             # (K,)
    e2_pad = jnp.pad(e2, (0, Kp - K),
                     constant_values=jnp.float32(1e30)).reshape(Kp, 1)

    out_shapes = (
        jax.ShapeDtypeStruct((D, N), jnp.float32),          # quantized^T
        jax.ShapeDtypeStruct((1, N), jnp.int32),            # indices (lane-dense)
        jax.ShapeDtypeStruct((n_blocks, D, 1), jnp.float32),   # per-block SSE
        jax.ShapeDtypeStruct((n_blocks, Kp, 1), jnp.float32),  # per-block counts
    )

    kernel = functools.partial(_vq_kernel, n_valid=N)

    # VMEM budget derived from actual block sizes (double-buffered blocks plus
    # generous slack for the (Kp, TN) distance/one-hot intermediates).
    blk_in = (D * TN + Kp * D + D * Kp + Kp) * 4
    blk_out = (D * TN + TN + D + Kp) * 4
    vmem_limit = int(max(4 * 2**20,
                         2 * (blk_in + blk_out) + 8 * Kp * TN * 4 + 2 * 2**20))

    qt, idx2d, sse_part, cnt_part = pl.pallas_call(
        kernel,
        out_shape=out_shapes,
        grid_spec=pltpu.PrefetchScalarGridSpec(
            num_scalar_prefetch=0,
            grid=(n_blocks,),
            in_specs=[
                pl.BlockSpec((D, TN), lambda i: (0, i)),     # activations tile
                pl.BlockSpec((Kp, D), lambda i: (0, 0)),     # codebook (constant)
                pl.BlockSpec((D, Kp), lambda i: (0, 0)),     # codebook^T (constant)
                pl.BlockSpec((Kp, 1), lambda i: (0, 0)),     # ||e||^2 (constant)
            ],
            out_specs=[
                pl.BlockSpec((D, TN), lambda i: (0, i)),
                pl.BlockSpec((1, TN), lambda i: (0, i)),
                pl.BlockSpec((1, D, 1), lambda i: (i, 0, 0)),
                pl.BlockSpec((1, Kp, 1), lambda i: (i, 0, 0)),
            ],
        ),
        compiler_params=pltpu.CompilerParams(
            # no carried accumulators -> single grid axis is parallel
            dimension_semantics=("parallel",),
            vmem_limit_bytes=vmem_limit,
        ),
    )(x_t, e_pad, et_pad, e2_pad)

    # ---- cheap glue ----
    sse = jnp.sum(sse_part)
    cnt = jnp.sum(cnt_part[:, :K, 0], axis=0)                       # (K,)

    mse = sse / (N * D)                 # == F.mse_loss(quantized, inputs) fwd
    e_latent_loss = mse                 # mse(quantized.detach(), inputs)
    q_latent_loss = mse                 # mse(quantized, inputs.detach())
    loss = q_latent_loss + commitment_cost * e_latent_loss

    q_nchw = jnp.transpose(qt.reshape(D, B, H, W), (1, 0, 2, 3))
    # straight-through estimator: numerically equal to quantized in the forward
    x_f32 = x_nchw.astype(jnp.float32)
    quantized_nchw = x_f32 + lax.stop_gradient(q_nchw - x_f32)

    avg_probs = cnt / N
    perplexity = jnp.exp(-jnp.sum(avg_probs * jnp.log(avg_probs + 1e-10)))

    idx_flat = idx2d[0]                                             # (N,)
    indices = idx_flat.reshape(B, H, W)[:, None, :, :]              # (B,1,H,W)

    # Dense one-hot is rebuilt outside the kernel only when requested — it is
    # never part of the kernel's HBM write traffic.
    encodings = (jax.nn.one_hot(idx_flat, K, dtype=jnp.float32)
                 if return_encodings else None)

    return loss, quantized_nchw, perplexity, encodings, indices


def _reference(x_nchw, embedding_w, commitment_cost=0.25):
    """Pure-JAX transcription of the PyTorch forward (for verification)."""
    inputs = jnp.transpose(x_nchw, (0, 2, 3, 1))
    B, H, W, D = inputs.shape
    flat = inputs.reshape(-1, D)
    d = (jnp.sum(flat ** 2, 1, keepdims=True) + jnp.sum(embedding_w ** 2, 1)
         - 2.0 * flat @ embedding_w.T)
    idx = jnp.argmin(d, axis=1)
    enc = jax.nn.one_hot(idx, embedding_w.shape[0], dtype=jnp.float32)
    q = (enc @ embedding_w).reshape(inputs.shape)
    mse = jnp.mean((q - inputs) ** 2)
    loss = mse + commitment_cost * mse
    q_st = inputs + lax.stop_gradient(q - inputs)
    avg = jnp.mean(enc, 0)
    perp = jnp.exp(-jnp.sum(avg * jnp.log(avg + 1e-10)))
    indices = idx.reshape(B, H, W)[:, None, :, :]
    return loss, jnp.transpose(q_st, (0, 3, 1, 2)), perp, enc, indices


if __name__ == "__main__":
    # Module hyperparameters (synthetic, deterministic init matching the module).
    num_embeddings = 32
    embedding_dim = 16
    commitment_cost = 0.25

    key = jax.random.PRNGKey(0)
    k_emb, k_x = jax.random.split(key)
    # _embedding.weight ~ U(-1/K, 1/K) as in the PyTorch module
    embedding_w = jax.random.uniform(
        k_emb, (num_embeddings, embedding_dim), dtype=jnp.float32,
        minval=-1.0 / num_embeddings, maxval=1.0 / num_embeddings)

    # Input: NCHW with C == embedding_dim.  N = 2*20*20 = 800 -> tile 512 with
    # two grid blocks and a ragged second block (exercises the masking path).
    x = jax.random.normal(k_x, (2, embedding_dim, 20, 20), dtype=jnp.float32)

    loss, quantized, perplexity, encodings, indices = jax.block_until_ready(
        vq_forward(x, embedding_w, commitment_cost=commitment_cost))

    # Sanity check against a pure-JAX reference.
    r_loss, r_q, r_perp, r_enc, r_idx = _reference(x, embedding_w, commitment_cost)
    assert jnp.allclose(loss, r_loss, atol=1e-4), (loss, r_loss)
    assert jnp.allclose(quantized, r_q, atol=1e-5)
    assert jnp.allclose(perplexity, r_perp, atol=1e-3), (perplexity, r_perp)
    assert jnp.allclose(encodings, r_enc)
    assert jnp.all(indices == r_idx.astype(indices.dtype))
    assert quantized.shape == x.shape
    assert indices.shape == (2, 1, 20, 20)
    assert encodings.shape == (2 * 20 * 20, num_embeddings)

    print("KERNEL_OK")
</pallas_src>

<mosaic_0001>
module attributes {stable_mosaic.version = 11 : i64} {
  func.func @_vq_kernel(%arg0: i32, %arg1: memref<16x512xf32, #tpu.memory_space<vmem>>, %arg2: memref<128x16xf32, #tpu.memory_space<vmem>>, %arg3: memref<16x128xf32, #tpu.memory_space<vmem>>, %arg4: memref<128x1xf32, #tpu.memory_space<vmem>>, %arg5: memref<16x512xf32, #tpu.memory_space<vmem>>, %arg6: memref<1x512xi32, #tpu.memory_space<vmem>>, %arg7: memref<1x16x1xf32, #tpu.memory_space<vmem>>, %arg8: memref<1x128x1xf32, #tpu.memory_space<vmem>>) attributes {dimension_semantics = [#tpu.dimension_semantics<parallel>], iteration_bounds = array<i64: 2>, scalar_prefetch = 0 : i64, scratch_operands = 0 : i64, tpu.core_type = #tpu.core_type<tc>, window_params = [{transform_indices = @transform_0, window_bounds = array<i64: 16, 512>}, {pipeline_mode = #tpu.pipeline_mode<synchronous>, transform_indices = @transform_1, window_bounds = array<i64: 128, 16>}, {pipeline_mode = #tpu.pipeline_mode<synchronous>, transform_indices = @transform_2, window_bounds = array<i64: 16, 128>}, {pipeline_mode = #tpu.pipeline_mode<synchronous>, transform_indices = @transform_3, window_bounds = array<i64: 128, 1>}, {transform_indices = @transform_4, window_bounds = array<i64: 16, 512>}, {transform_indices = @transform_5, window_bounds = array<i64: 1, 512>}, {transform_indices = @transform_6, window_bounds = array<i64: 1, 16, 1>}, {transform_indices = @transform_7, window_bounds = array<i64: 1, 128, 1>}]} {
    %c0 = arith.constant 0 : index
    %c0_0 = arith.constant 0 : index
    %0 = vector.load %arg1[%c0, %c0_0] : memref<16x512xf32, #tpu.memory_space<vmem>>, vector<16x512xf32>
    %c0_1 = arith.constant 0 : index
    %c0_2 = arith.constant 0 : index
    %1 = vector.load %arg2[%c0_1, %c0_2] : memref<128x16xf32, #tpu.memory_space<vmem>>, vector<128x16xf32>
    %c0_3 = arith.constant 0 : index
    %c0_4 = arith.constant 0 : index
    %2 = vector.load %arg3[%c0_3, %c0_4] : memref<16x128xf32, #tpu.memory_space<vmem>>, vector<16x128xf32>
    %c0_5 = arith.constant 0 : index
    %c0_6 = arith.constant 0 : index
    %3 = vector.load %arg4[%c0_5, %c0_6] : memref<128x1xf32, #tpu.memory_space<vmem>>, vector<128x1xf32>
    %4 = arith.mulf %0, %0 : vector<16x512xf32>
    %cst = arith.constant dense<0.000000e+00> : vector<512xf32>
    %5 = vector.multi_reduction <add>, %4, %cst [0] : vector<16x512xf32> to vector<512xf32>
    %6 = vector.shape_cast %5 : vector<512xf32> to vector<1x512xf32>
    %cst_7 = arith.constant dense<0.000000e+00> : vector<128x512xf32>
    %7 = tpu.matmul %1, %0, %cst_7 {dimension_numbers = #tpu.dot_dimension_numbers<[1], [0], [0], [1], [0, 0, 1, 1], [], []>} : vector<128x16xf32>, vector<16x512xf32>, vector<128x512xf32> -> vector<128x512xf32>
    %8 = vector.broadcast %6 : vector<1x512xf32> to vector<128x512xf32>
    %9 = vector.broadcast %3 : vector<128x1xf32> to vector<128x512xf32>
    %10 = arith.addf %8, %9 : vector<128x512xf32>
    %cst_8 = arith.constant 2.000000e+00 : f32
    %11 = vector.broadcast %cst_8 : f32 to vector<128x512xf32>
    %12 = arith.mulf %11, %7 : vector<128x512xf32>
    %13 = arith.subf %10, %12 : vector<128x512xf32>
    %cst_9 = arith.constant dense<0x7F800000> : vector<512xf32>
    %14 = vector.multi_reduction <minimumf>, %13, %cst_9 [0] : vector<128x512xf32> to vector<512xf32>
    %15 = vector.shape_cast %14 : vector<512xf32> to vector<1x512xf32>
    %16 = tpu.iota {dimensions = array<i32: 0>} : vector<128x512xi32>
    %17 = vector.broadcast %15 : vector<1x512xf32> to vector<128x512xf32>
    %18 = arith.cmpf oeq, %13, %17 : vector<128x512xf32>
    %c128_i32 = arith.constant 128 : i32
    %19 = vector.broadcast %c128_i32 : i32 to vector<128x512xi32>
    %20 = arith.select %18, %16, %19 : vector<128x512xi1>, vector<128x512xi32>
    %cst_10 = arith.constant dense<2147483647> : vector<512xi32>
    %21 = vector.multi_reduction <minsi>, %20, %cst_10 [0] : vector<128x512xi32> to vector<512xi32>
    %22 = vector.shape_cast %21 : vector<512xi32> to vector<1x512xi32>
    %23 = vector.broadcast %22 : vector<1x512xi32> to vector<128x512xi32>
    %24 = arith.cmpi eq, %16, %23 : vector<128x512xi32>
    %25 = arith.extui %24 : vector<128x512xi1> to vector<128x512xi32>
    %26 = arith.sitofp %25 : vector<128x512xi32> to vector<128x512xf32>
    %cst_11 = arith.constant dense<0.000000e+00> : vector<16x512xf32>
    %27 = tpu.matmul %2, %26, %cst_11 {dimension_numbers = #tpu.dot_dimension_numbers<[1], [0], [0], [1], [0, 0, 1, 1], [], []>} : vector<16x128xf32>, vector<128x512xf32>, vector<16x512xf32> -> vector<16x512xf32>
    %c0_12 = arith.constant 0 : index
    %c0_13 = arith.constant 0 : index
    %28 = vector.load %arg5[%c0_12, %c0_13] : memref<16x512xf32, #tpu.memory_space<vmem>>, vector<16x512xf32>
    tpu.vector_store %arg5[%c0_12, %c0_13], %27 {strides = array<i32>} : memref<16x512xf32, #tpu.memory_space<vmem>>, vector<16x512xf32>,
    %c0_14 = arith.constant 0 : index
    %c0_15 = arith.constant 0 : index
    %29 = vector.load %arg6[%c0_14, %c0_15] : memref<1x512xi32, #tpu.memory_space<vmem>>, vector<1x512xi32>
    tpu.vector_store %arg6[%c0_14, %c0_15], %22 {strides = array<i32>} : memref<1x512xi32, #tpu.memory_space<vmem>>, vector<1x512xi32>,
    %c512_i32 = arith.constant 512 : i32
    %30 = arith.muli %arg0, %c512_i32 : i32
    %31 = tpu.iota {dimensions = array<i32: 1>} : vector<1x512xi32>
    %32 = vector.broadcast %30 : i32 to vector<1x512xi32>
    %33 = arith.addi %32, %31 : vector<1x512xi32>
    %c800_i32 = arith.constant 800 : i32
    %34 = vector.broadcast %c800_i32 : i32 to vector<1x512xi32>
    %35 = arith.cmpi slt, %33, %34 : vector<1x512xi32>
    %36 = arith.subf %27, %0 : vector<16x512xf32>
    %cst_16 = arith.constant 0.000000e+00 : f32
    %37 = vector.shape_cast %35 : vector<1x512xi1> to vector<1x512xi1>
    %38 = vector.broadcast %37 : vector<1x512xi1> to vector<16x512xi1>
    %39 = vector.broadcast %cst_16 : f32 to vector<16x512xf32>
    %40 = arith.select %38, %36, %39 : vector<16x512xi1>, vector<16x512xf32>
    %41 = arith.mulf %40, %40 : vector<16x512xf32>
    %cst_17 = arith.constant dense<0.000000e+00> : vector<16xf32>
    %42 = vector.multi_reduction <add>, %41, %cst_17 [1] : vector<16x512xf32> to vector<16xf32>
    %43 = vector.shape_cast %42 : vector<16xf32> to vector<16x1xf32>
    %44 = vector.shape_cast %43 : vector<16x1xf32> to vector<1x16x1xf32>
    %c0_18 = arith.constant 0 : index
    %c0_19 = arith.constant 0 : index
    %c0_20 = arith.constant 0 : index
    %45 = vector.load %arg7[%c0_18, %c0_19, %c0_20] : memref<1x16x1xf32, #tpu.memory_space<vmem>>, vector<1x16x1xf32>
    tpu.vector_store %arg7[%c0_18, %c0_19, %c0_20], %44 {strides = array<i32>} : memref<1x16x1xf32, #tpu.memory_space<vmem>>, vector<1x16x1xf32>,
    %cst_21 = arith.constant 0.000000e+00 : f32
    %46 = vector.shape_cast %35 : vector<1x512xi1> to vector<1x512xi1>
    %47 = vector.broadcast %46 : vector<1x512xi1> to vector<128x512xi1>
    %48 = vector.broadcast %cst_21 : f32 to vector<128x512xf32>
    %49 = arith.select %47, %26, %48 : vector<128x512xi1>, vector<128x512xf32>
    %cst_22 = arith.constant dense<0.000000e+00> : vector<128xf32>
    %50 = vector.multi_reduction <add>, %49, %cst_22 [1] : vector<128x512xf32> to vector<128xf32>
    %51 = vector.shape_cast %50 : vector<128xf32> to vector<128x1xf32>
    %52 = vector.shape_cast %51 : vector<128x1xf32> to vector<1x128x1xf32>
    %c0_23 = arith.constant 0 : index
    %c0_24 = arith.constant 0 : index
    %c0_25 = arith.constant 0 : index
    %53 = vector.load %arg8[%c0_23, %c0_24, %c0_25] : memref<1x128x1xf32, #tpu.memory_space<vmem>>, vector<1x128x1xf32>
    tpu.vector_store %arg8[%c0_23, %c0_24, %c0_25], %52 {strides = array<i32>} : memref<1x128x1xf32, #tpu.memory_space<vmem>>, vector<1x128x1xf32>,
    return
  }
  func.func @transform_0(%arg0: i32) -> (i32, i32) {
    %c0_i32 = arith.constant 0 : i32
    %c0_i32_0 = arith.constant 0 : i32
    return %c0_i32, %arg0 : i32, i32
  }
  func.func @transform_1(%arg0: i32) -> (i32, i32) {
    %c0_i32 = arith.constant 0 : i32
    %c0_i32_0 = arith.constant 0 : i32
    %c0_i32_1 = arith.constant 0 : i32
    return %c0_i32, %c0_i32_0 : i32, i32
  }
  func.func @transform_2(%arg0: i32) -> (i32, i32) {
    %c0_i32 = arith.constant 0 : i32
    %c0_i32_0 = arith.constant 0 : i32
    %c0_i32_1 = arith.constant 0 : i32
    return %c0_i32, %c0_i32_0 : i32, i32
  }
  func.func @transform_3(%arg0: i32) -> (i32, i32) {
    %c0_i32 = arith.constant 0 : i32
    %c0_i32_0 = arith.constant 0 : i32
    %c0_i32_1 = arith.constant 0 : i32
    return %c0_i32, %c0_i32_0 : i32, i32
  }
  func.func @transform_4(%arg0: i32) -> (i32, i32) {
    %c0_i32 = arith.constant 0 : i32
    %c0_i32_0 = arith.constant 0 : i32
    return %c0_i32, %arg0 : i32, i32
  }
  func.func @transform_5(%arg0: i32) -> (i32, i32) {
    %c0_i32 = arith.constant 0 : i32
    %c0_i32_0 = arith.constant 0 : i32
    return %c0_i32, %arg0 : i32, i32
  }
  func.func @transform_6(%arg0: i32) -> (i32, i32, i32) {
    %c0_i32 = arith.constant 0 : i32
    %c0_i32_0 = arith.constant 0 : i32
    %c0_i32_1 = arith.constant 0 : i32
    return %arg0, %c0_i32, %c0_i32_0 : i32, i32, i32
  }
  func.func @transform_7(%arg0: i32) -> (i32, i32, i32) {
    %c0_i32 = arith.constant 0 : i32
    %c0_i32_0 = arith.constant 0 : i32
    %c0_i32_1 = arith.constant 0 : i32
    return %arg0, %c0_i32, %c0_i32_0 : i32, i32, i32
  }
}

</mosaic_0001>

<llo_original>
// kernel: squeeze.0
$region0: #{squeeze.0}
  %s0 = inlined_call_operand.vmem [shape: s32[800], index: 0, kind: input, shape index: {}]
  %s1 = inlined_call_operand.hbm [shape: s32[2,1,20,20], index: 1, kind: output, shape index: {}]
  $region1: #{squeeze.0} parent=0
    #allocation0 [shape = 'u8[20480]{0}', space=vmem, size = 0x5000, scoped, tag = 'operand span for operand 1']
    #allocation1 [shape = 's32[1]{0}', space=sflag, size = 0x4, scoped, tag = 'scoped memory for squeeze.0']
    #allocation2 [shape = 'u8[163840]{0}', space=vmem, size = 0x28000, scoped, tag = 'scoped mem for output reshape']
    %2 = vsyncpa [#allocation1], 0
    %s3 = smov 3
    %v4 = vld [vmem:[%s0] ss:$5 sm:%s3]
    %vm5 = vcmask 162816
    %6 = vst.msk [vmem:[#allocation2] sm:$0x1] %vm5, %v4
    %s7 = scalar_lea.vmem [#allocation2], 255
    %8 = vst.msk [vmem:[%s7] sm:$0x2] %vm5, %v4
    %s9 = scalar_lea.vmem %s0, 2
    %v10 = vld [vmem:[%s9] sm:$0x1]
    %11 = vrot.lane.b32.xlu0 %v10, 124
    %v12 = vpop.permute.xlu0 %11
    %vm13 = vcmask 162816
    %s14 = scalar_lea.vmem [#allocation2], 104
    %15 = vst.msk [vmem:[%s14] sm:$0x1] %vm13, %v12
    %s16 = scalar_lea.vmem %s0, 4
    %v17 = vld [vmem:[%s16] sm:$0x1]
    %18 = vrot.lane.b32.xlu0 %v17, 120
    %v19 = vpop.permute.xlu0 %18
    %vm20 = vcmask 162816
    %s21 = scalar_lea.vmem [#allocation2], 208
    %22 = vst.msk [vmem:[%s21] sm:$0x1] %vm20, %v19
    %s23 = scalar_lea.vmem %s0, 1
    %s24 = smov 3
    %v25 = vld [vmem:[%s23] ss:$5 sm:%s24]
    %26 = vrot.lane.b32.xlu0 %v25, 116
    %v27 = vpop.permute.xlu0 %26
    %vm28 = vcmask 162816
    %s29 = scalar_lea.vmem [#allocation2], 56
    %30 = vst.msk [vmem:[%s29] sm:$0x1] %vm28, %v27
    %s31 = scalar_lea.vmem [#allocation2], 311
    %32 = vst.msk [vmem:[%s31] sm:$0x2] %vm28, %v27
    %s33 = scalar_lea.vmem %s0, 3
    %v34 = vld [vmem:[%s33] sm:$0x1]
    %35 = vrot.lane.b32.xlu0 %v34, 112
    %v36 = vpop.permute.xlu0 %35
    %vm37 = vcmask 162816
    %s38 = scalar_lea.vmem [#allocation2], 160
    %39 = vst.msk [vmem:[%s38] sm:$0x1] %vm37, %v36
    %s40 = smov 3
    %v41 = vld [vmem:[%s0] ss:$5 sm:%s40]
    %42 = vrot.lane.b32.xlu0 %v41, 108
    %v43 = vpop.permute.xlu0 %42
    %vm44 = vcmask 162816
    %s45 = scalar_lea.vmem [#allocation2], 8
    %46 = vst.msk [vmem:[%s45] sm:$0x1] %vm44, %v43
    %s47 = scalar_lea.vmem [#allocation2], 263
    %48 = vst.msk [vmem:[%s47] sm:$0x2] %vm44, %v43
    %s49 = scalar_lea.vmem %s0, 2
    %v50 = vld [vmem:[%s49] sm:$0x1]
    %51 = vrot.lane.b32.xlu0 %v50, 104
    %v52 = vpop.permute.xlu0 %51
    %vm53 = vcmask 162816
    %s54 = scalar_lea.vmem [#allocation2], 112
    %55 = vst.msk [vmem:[%s54] sm:$0x1] %vm53, %v52
    %s56 = scalar_lea.vmem %s0, 4
    %v57 = vld [vmem:[%s56] sm:$0x1]
    %58 = vrot.lane.b32.xlu0 %v57, 100
    %v59 = vpop.permute.xlu0 %58
    %vm60 = vcmask 162816
    %s61 = scalar_lea.vmem [#allocation2], 216
    %62 = vst.msk [vmem:[%s61] sm:$0x1] %vm60, %v59
    %s63 = scalar_lea.vmem %s0, 1
    %v64 = vld [vmem:[%s63] sm:$0x1]
    %65 = vrot.lane.b32.xlu0 %v64, 96
    %v66 = vpop.permute.xlu0 %65
    %vm67 = vcmask 162816
    %s68 = scalar_lea.vmem [#allocation2], 64
    %69 = vst.msk [vmem:[%s68] sm:$0x1] %vm67, %v66
    %s70 = scalar_lea.vmem %s0, 3
    %v71 = vld [vmem:[%s70] sm:$0x1]
    %72 = vrot.lane.b32.xlu0 %v71, 92
    %v73 = vpop.permute.xlu0 %72
    %vm74 = vcmask 162816
    %s75 = scalar_lea.vmem [#allocation2], 168
    %76 = vst.msk [vmem:[%s75] sm:$0x1] %vm74, %v73
    %s77 = smov 3
    %v78 = vld [vmem:[%s0] ss:$5 sm:%s77]
    %79 = vrot.lane.b32.xlu0 %v78, 88
    %v80 = vpop.permute.xlu0 %79
    %vm81 = vcmask 162816
    %s82 = scalar_lea.vmem [#allocation2], 16
    %83 = vst.msk [vmem:[%s82] sm:$0x1] %vm81, %v80
    %s84 = scalar_lea.vmem [#allocation2], 271
    %85 = vst.msk [vmem:[%s84] sm:$0x2] %vm81, %v80
    %s86 = scalar_lea.vmem %s0, 2
    %v87 = vld [vmem:[%s86] sm:$0x1]
    %88 = vrot.lane.b32.xlu0 %v87, 84
    %v89 = vpop.permute.xlu0 %88
    %vm90 = vcmask 162816
    %s91 = scalar_lea.vmem [#allocation2], 120
    %92 = vst.msk [vmem:[%s91] sm:$0x1] %vm90, %v89
    %s93 = scalar_lea.vmem %s0, 4
    %v94 = vld [vmem:[%s93] sm:$0x1]
    %95 = vrot.lane.b32.xlu0 %v94, 80
    %v96 = vpop.permute.xlu0 %95
    %vm97 = vcmask 162816
    %s98 = scalar_lea.vmem [#allocation2], 224
    %99 = vst.msk [vmem:[%s98] sm:$0x1] %vm97, %v96
    %s100 = scalar_lea.vmem %s0, 1
    %v101 = vld [vmem:[%s100] sm:$0x1]
    %102 = vrot.lane.b32.xlu0 %v101, 76
    %v103 = vpop.permute.xlu0 %102
    %vm104 = vcmask 162816
    %s105 = scalar_lea.vmem [#allocation2], 72
    %106 = vst.msk [vmem:[%s105] sm:$0x1] %vm104, %v103
    %s107 = scalar_lea.vmem %s0, 3
    %v108 = vld [vmem:[%s107] sm:$0x1]
    %109 = vrot.lane.b32.xlu0 %v108, 72
    %v110 = vpop.permute.xlu0 %109
    %vm111 = vcmask 162816
    %s112 = scalar_lea.vmem [#allocation2], 176
    %113 = vst.msk [vmem:[%s112] sm:$0x1] %vm111, %v110
    %s114 = smov 3
    %v115 = vld [vmem:[%s0] ss:$5 sm:%s114]
    %116 = vrot.lane.b32.xlu0 %v115, 68
    %v117 = vpop.permute.xlu0 %116
    %vm118 = vcmask 162816
    %s119 = scalar_lea.vmem [#allocation2], 24
    %120 = vst.msk [vmem:[%s119] sm:$0x1] %vm118, %v117
    %s121 = scalar_lea.vmem [#allocation2], 279
    %122 = vst.msk [vmem:[%s121] sm:$0x2] %vm118, %v117
    %s123 = scalar_lea.vmem %s0, 2
    %v124 = vld [vmem:[%s123] sm:$0x1]
    %125 = vrot.lane.b32.xlu0 %v124, 64
    %v126 = vpop.permute.xlu0 %125
    %vm127 = vcmask 162816
    %s128 = scalar_lea.vmem [#allocation2], 128
    %129 = vst.msk [vmem:[%s128] sm:$0x1] %vm127, %v126
    %s130 = scalar_lea.vmem %s0, 4
    %v131 = vld [vmem:[%s130] sm:$0x1]
    %132 = vrot.lane.b32.xlu0 %v131, 60
    %v133 = vpop.permute.xlu0 %132
    %vm134 = vcmask 162816
    %s135 = scalar_lea.vmem [#allocation2], 232
    %136 = vst.msk [vmem:[%s135] sm:$0x1] %vm134, %v133
    %s137 = scalar_lea.vmem %s0, 1
    %v138 = vld [vmem:[%s137] sm:$0x1]
    %139 = vrot.lane.b32.xlu0 %v138, 56
    %v140 = vpop.permute.xlu0 %139
    %vm141 = vcmask 162816
    %s142 = scalar_lea.vmem [#allocation2], 80
    %143 = vst.msk [vmem:[%s142] sm:$0x1] %vm141, %v140
    %s144 = scalar_lea.vmem %s0, 3
    %v145 = vld [vmem:[%s144] sm:$0x1]
    %146 = vrot.lane.b32.xlu0 %v145, 52
    %v147 = vpop.permute.xlu0 %146
    %vm148 = vcmask 162816
    %s149 = scalar_lea.vmem [#allocation2], 184
    %150 = vst.msk [vmem:[%s149] sm:$0x1] %vm148, %v147
    %s151 = smov 3
    %v152 = vld [vmem:[%s0] ss:$5 sm:%s151]
    %153 = vrot.lane.b32.xlu0 %v152, 48
    %v154 = vpop.permute.xlu0 %153
    %vm155 = vcmask 162816
    %s156 = scalar_lea.vmem [#allocation2], 32
    %157 = vst.msk [vmem:[%s156] sm:$0x1] %vm155, %v154
    %s158 = scalar_lea.vmem [#allocation2], 287
    %159 = vst.msk [vmem:[%s158] sm:$0x2] %vm155, %v154
    %s160 = scalar_lea.vmem %s0, 2
    %v161 = vld [vmem:[%s160] sm:$0x1]
    %162 = vrot.lane.b32.xlu0 %v161, 44
    %v163 = vpop.permute.xlu0 %162
    %vm164 = vcmask 162816
    %s165 = scalar_lea.vmem [#allocation2], 136
    %166 = vst.msk [vmem:[%s165] sm:$0x1] %vm164, %v163
    %s167 = scalar_lea.vmem %s0, 4
    %v168 = vld [vmem:[%s167] sm:$0x1]
    %169 = vrot.lane.b32.xlu0 %v168, 40
    %v170 = vpop.permute.xlu0 %169
    %vm171 = vcmask 162816
    %s172 = scalar_lea.vmem [#allocation2], 240
    %173 = vst.msk [vmem:[%s172] sm:$0x1] %vm171, %v170
    %s174 = scalar_lea.vmem %s0, 1
    %v175 = vld [vmem:[%s174] sm:$0x1]
    %176 = vrot.lane.b32.xlu0 %v175, 36
    %v177 = vpop.permute.xlu0 %176
    %vm178 = vcmask 162816
    %s179 = scalar_lea.vmem [#allocation2], 88
    %180 = vst.msk [vmem:[%s179] sm:$0x1] %vm178, %v177
    %s181 = scalar_lea.vmem %s0, 3
    %v182 = vld [vmem:[%s181] sm:$0x1]
    %183 = vrot.lane.b32.xlu0 %v182, 32
    %v184 = vpop.permute.xlu0 %183
    %vm185 = vcmask 162816
    %s186 = scalar_lea.vmem [#allocation2], 192
    %187 = vst.msk [vmem:[%s186] sm:$0x1] %vm185, %v184
    %s188 = smov 3
    %v189 = vld [vmem:[%s0] ss:$5 sm:%s188]
    %190 = vrot.lane.b32.xlu0 %v189, 28
    %v191 = vpop.permute.xlu0 %190
    %vm192 = vcmask 162816
    %s193 = scalar_lea.vmem [#allocation2], 40
    %194 = vst.msk [vmem:[%s193] sm:$0x1] %vm192, %v191
    %s195 = scalar_lea.vmem [#allocation2], 295
    %196 = vst.msk [vmem:[%s195] sm:$0x2] %vm192, %v191
    %s197 = scalar_lea.vmem %s0, 2
    %v198 = vld [vmem:[%s197] sm:$0x1]
    %199 = vrot.lane.b32.xlu0 %v198, 24
    %v200 = vpop.permute.xlu0 %199
    %vm201 = vcmask 162816
    %s202 = scalar_lea.vmem [#allocation2], 144
    %203 = vst.msk [vmem:[%s202] sm:$0x1] %vm201, %v200
    %s204 = scalar_lea.vmem %s0, 4
    %v205 = vld [vmem:[%s204] sm:$0x1]
    %206 = vrot.lane.b32.xlu0 %v205, 20
    %v207 = vpop.permute.xlu0 %206
    %vm208 = vcmask 162816
    %s209 = scalar_lea.vmem [#allocation2], 248
    %210 = vst.msk [vmem:[%s209] sm:$0x1] %vm208, %v207
    %s211 = scalar_lea.vmem %s0, 1
    %v212 = vld [vmem:[%s211] sm:$0x1]
    %s213 = scalar_lea.vmem %s0, 2
    %v214 = vld [vmem:[%s213] sm:$0x1]
    %vm215 = vcmask 916480
    %v216 = vsel %vm215, %v214, %v212
    %217 = vrot.lane.b32.xlu0 %v216, 16
    %v218 = vpop.permute.xlu0 %217
    %vm219 = vcmask 130048
    %s220 = scalar_lea.vmem [#allocation2], 96
    %221 = vst.msk [vmem:[%s220] sm:$0x1] %vm219, %v218
    %vm222 = vcmask 162944
    %s223 = scalar_lea.vmem [#allocation2], 96
    %224 = vst.msk [vmem:[%s223] sm:$0x1] %vm222, %v218
    %s225 = scalar_lea.vmem %s0, 3
    %v226 = vld [vmem:[%s225] sm:$0x1]
    %s227 = scalar_lea.vmem %s0, 4
    %v228 = vld [vmem:[%s227] sm:$0x1]
    %vm229 = vcmask 949248
    %v230 = vsel %vm229, %v228, %v226
    %231 = vrot.lane.b32.xlu0 %v230, 12
    %v232 = vpop.permute.xlu0 %231
    %vm233 = vcmask 97280
    %s234 = scalar_lea.vmem [#allocation2], 200
    %235 = vst.msk [vmem:[%s234] sm:$0x1] %vm233, %v232
    %vm236 = vcmask 162912
    %s237 = scalar_lea.vmem [#allocation2], 200
    %238 = vst.msk [vmem:[%s237] sm:$0x1] %vm236, %v232
    %s239 = smov 3
    %v240 = vld [vmem:[%s0] ss:$5 sm:%s239]
    %s241 = scalar_lea.vmem %s0, 1
    %s242 = smov 3
    %v243 = vld [vmem:[%s241] ss:$5 sm:%s242]
    %vm244 = vcmask 982016
    %v245 = vsel %vm244, %v243, %v240
    %246 = vrot.lane.b32.xlu0 %v245, 8
    %v247 = vpop.permute.xlu0 %246
    %vm248 = vcmask 64512
    %s249 = scalar_lea.vmem [#allocation2], 48
    %250 = vst.msk [vmem:[%s249] sm:$0x1] %vm248, %v247
    %s251 = scalar_lea.vmem [#allocation2], 303
    %252 = vst.msk [vmem:[%s251] sm:$0x2] %vm248, %v247
    %vm253 = vcmask 162880
    %s254 = scalar_lea.vmem [#allocation2], 48
    %255 = vst.msk [vmem:[%s254] sm:$0x1] %vm253, %v247
    %s256 = scalar_lea.vmem [#allocation2], 303
    %257 = vst.msk [vmem:[%s256] sm:$0x2] %vm253, %v247
    %s258 = scalar_lea.vmem %s0, 2
    %v259 = vld [vmem:[%s258] sm:$0x1]
    %s260 = scalar_lea.vmem %s0, 3
    %v261 = vld [vmem:[%s260] sm:$0x1]
    %vm262 = vcmask 1014784
    %v263 = vsel %vm262, %v261, %v259
    %264 = vrot.lane.b32.xlu0 %v263, 4
    %v265 = vpop.permute.xlu0 %264
    %vm266 = vcmask 31744
    %s267 = scalar_lea.vmem [#allocation2], 152
    %268 = vst.msk [vmem:[%s267] sm:$0x1] %vm266, %v265
    %vm269 = vcmask 162848
    %s270 = scalar_lea.vmem [#allocation2], 152
    %271 = vst.msk [vmem:[%s270] sm:$0x1] %vm269, %v265
    %s273 = sshllo.u32 0, 1
    %v275 = vld [vmem:[#allocation2] sm:%s273]
    %s276 = sshllo.u32 0, 1
    %277 = vst [vmem:[#allocation0] sm:%s276] %v275
    %s278 = scalar_lea.vmem [#allocation2], 8
    %v279 = vld [vmem:[%s278] sm:%s273]
    %s280 = sshllo.u32 0, 1
    %s281 = scalar_lea.vmem [#allocation0], 1
    %282 = vst [vmem:[%s281] sm:%s280] %v279
    %s283 = scalar_lea.vmem [#allocation2], 16
    %v284 = vld [vmem:[%s283] sm:%s273]
    %s285 = sshllo.u32 0, 1
    %s286 = smul.addr 1, 2
    %s287 = scalar_lea.vmem [#allocation0], %s286
    %288 = vst [vmem:[%s287] sm:%s285] %v284
    %s289 = scalar_lea.vmem [#allocation2], 24
    %v290 = vld [vmem:[%s289] sm:%s273]
    %s291 = sshllo.u32 0, 1
    %s292 = smul.addr 1, 3
    %s293 = scalar_lea.vmem [#allocation0], %s292
    %294 = vst [vmem:[%s293] sm:%s291] %v290
    %s295 = scalar_lea.vmem [#allocation2], 32
    %v296 = vld [vmem:[%s295] sm:%s273]
    %s297 = sshllo.u32 0, 1
    %s298 = smul.addr 1, 4
    %s299 = scalar_lea.vmem [#allocation0], %s298
    %300 = vst [vmem:[%s299] sm:%s297] %v296
    %s301 = scalar_lea.vmem [#allocation2], 40
    %v302 = vld [vmem:[%s301] sm:%s273]
    %s303 = sshllo.u32 0, 1
    %s304 = smul.addr 1, 5
    %s305 = scalar_lea.vmem [#allocation0], %s304
    %306 = vst [vmem:[%s305] sm:%s303] %v302
    %s307 = scalar_lea.vmem [#allocation2], 48
    %v308 = vld [vmem:[%s307] sm:%s273]
    %s309 = sshllo.u32 0, 1
    %s310 = smul.addr 1, 6
    %s311 = scalar_lea.vmem [#allocation0], %s310
    %312 = vst [vmem:[%s311] sm:%s309] %v308
    %s313 = scalar_lea.vmem [#allocation2], 56
    %v314 = vld [vmem:[%s313] sm:%s273]
    %s315 = sshllo.u32 0, 1
    %s316 = smul.addr 1, 7
    %s317 = scalar_lea.vmem [#allocation0], %s316
    %318 = vst [vmem:[%s317] sm:%s315] %v314
    %s319 = scalar_lea.vmem [#allocation2], 64
    %v320 = vld [vmem:[%s319] sm:%s273]
    %s321 = sshllo.u32 0, 1
    %s322 = smul.addr 1, 8
    %s323 = scalar_lea.vmem [#allocation0], %s322
    %324 = vst [vmem:[%s323] sm:%s321] %v320
    %s325 = scalar_lea.vmem [#allocation2], 72
    %v326 = vld [vmem:[%s325] sm:%s273]
    %s327 = sshllo.u32 0, 1
    %s328 = smul.addr 1, 9
    %s329 = scalar_lea.vmem [#allocation0], %s328
    %330 = vst [vmem:[%s329] sm:%s327] %v326
    %s331 = scalar_lea.vmem [#allocation2], 80
    %v332 = vld [vmem:[%s331] sm:%s273]
    %s333 = sshllo.u32 0, 1
    %s334 = smul.addr 1, 10
    %s335 = scalar_lea.vmem [#allocation0], %s334
    %336 = vst [vmem:[%s335] sm:%s333] %v332
    %s337 = scalar_lea.vmem [#allocation2], 88
    %v338 = vld [vmem:[%s337] sm:%s273]
    %s339 = sshllo.u32 0, 1
    %s340 = smul.addr 1, 11
    %s341 = scalar_lea.vmem [#allocation0], %s340
    %342 = vst [vmem:[%s341] sm:%s339] %v338
    %s343 = scalar_lea.vmem [#allocation2], 96
    %v344 = vld [vmem:[%s343] sm:%s273]
    %s345 = sshllo.u32 0, 1
    %s346 = smul.addr 1, 12
    %s347 = scalar_lea.vmem [#allocation0], %s346
    %348 = vst [vmem:[%s347] sm:%s345] %v344
    %s349 = scalar_lea.vmem [#allocation2], 104
    %v350 = vld [vmem:[%s349] sm:%s273]
    %s351 = sshllo.u32 0, 1
    %s352 = smul.addr 1, 13
    %s353 = scalar_lea.vmem [#allocation0], %s352
    %354 = vst [vmem:[%s353] sm:%s351] %v350
    %s355 = scalar_lea.vmem [#allocation2], 112
    %v356 = vld [vmem:[%s355] sm:%s273]
    %s357 = sshllo.u32 0, 1
    %s358 = smul.addr 1, 14
    %s359 = scalar_lea.vmem [#allocation0], %s358
    %360 = vst [vmem:[%s359] sm:%s357] %v356
    %s361 = scalar_lea.vmem [#allocation2], 120
    %v362 = vld [vmem:[%s361] sm:%s273]
    %s363 = sshllo.u32 0, 1
    %s364 = smul.addr 1, 15
    %s365 = scalar_lea.vmem [#allocation0], %s364
    %366 = vst [vmem:[%s365] sm:%s363] %v362
    %s367 = scalar_lea.vmem [#allocation2], 128
    %v368 = vld [vmem:[%s367] sm:%s273]
    %s369 = sshllo.u32 0, 1
    %s370 = smul.addr 1, 16
    %s371 = scalar_lea.vmem [#allocation0], %s370
    %372 = vst [vmem:[%s371] sm:%s369] %v368
    %s373 = scalar_lea.vmem [#allocation2], 136
    %v374 = vld [vmem:[%s373] sm:%s273]
    %s375 = sshllo.u32 0, 1
    %s376 = smul.addr 1, 17
    %s377 = scalar_lea.vmem [#allocation0], %s376
    %378 = vst [vmem:[%s377] sm:%s375] %v374
    %s379 = scalar_lea.vmem [#allocation2], 144
    %v380 = vld [vmem:[%s379] sm:%s273]
    %s381 = sshllo.u32 0, 1
    %s382 = smul.addr 1, 18
    %s383 = scalar_lea.vmem [#allocation0], %s382
    %384 = vst [vmem:[%s383] sm:%s381] %v380
    %s385 = scalar_lea.vmem [#allocation2], 152
    %v386 = vld [vmem:[%s385] sm:%s273]
    %s387 = sshllo.u32 0, 1
    %s388 = smul.addr 1, 19
    %s389 = scalar_lea.vmem [#allocation0], %s388
    %390 = vst [vmem:[%s389] sm:%s387] %v386
    %s391 = scalar_lea.vmem [#allocation2], 160
    %v392 = vld [vmem:[%s391] sm:%s273]
    %s393 = sshllo.u32 0, 1
    %s394 = smul.addr 1, 20
    %s395 = scalar_lea.vmem [#allocation0], %s394
    %396 = vst [vmem:[%s395] sm:%s393] %v392
    %s397 = scalar_lea.vmem [#allocation2], 168
    %v398 = vld [vmem:[%s397] sm:%s273]
    %s399 = sshllo.u32 0, 1
    %s400 = smul.addr 1, 21
    %s401 = scalar_lea.vmem [#allocation0], %s400
    %402 = vst [vmem:[%s401] sm:%s399] %v398
    %s403 = scalar_lea.vmem [#allocation2], 176
    %v404 = vld [vmem:[%s403] sm:%s273]
    %s405 = sshllo.u32 0, 1
    %s406 = smul.addr 1, 22
    %s407 = scalar_lea.vmem [#allocation0], %s406
    %408 = vst [vmem:[%s407] sm:%s405] %v404
    %s409 = scalar_lea.vmem [#allocation2], 184
    %v410 = vld [vmem:[%s409] sm:%s273]
    %s411 = sshllo.u32 0, 1
    %s412 = smul.addr 1, 23
    %s413 = scalar_lea.vmem [#allocation0], %s412
    %414 = vst [vmem:[%s413] sm:%s411] %v410
    %s415 = scalar_lea.vmem [#allocation2], 192
    %v416 = vld [vmem:[%s415] sm:%s273]
    %s417 = sshllo.u32 0, 1
    %s418 = smul.addr 1, 24
    %s419 = scalar_lea.vmem [#allocation0], %s418
    %420 = vst [vmem:[%s419] sm:%s417] %v416
    %s421 = scalar_lea.vmem [#allocation2], 200
    %v422 = vld [vmem:[%s421] sm:%s273]
    %s423 = sshllo.u32 0, 1
    %s424 = smul.addr 1, 25
    %s425 = scalar_lea.vmem [#allocation0], %s424
    %426 = vst [vmem:[%s425] sm:%s423] %v422
    %s427 = scalar_lea.vmem [#allocation2], 208
    %v428 = vld [vmem:[%s427] sm:%s273]
    %s429 = sshllo.u32 0, 1
    %s430 = smul.addr 1, 26
    %s431 = scalar_lea.vmem [#allocation0], %s430
    %432 = vst [vmem:[%s431] sm:%s429] %v428
    %s433 = scalar_lea.vmem [#allocation2], 216
    %v434 = vld [vmem:[%s433] sm:%s273]
    %s435 = sshllo.u32 0, 1
    %s436 = smul.addr 1, 27
    %s437 = scalar_lea.vmem [#allocation0], %s436
    %438 = vst [vmem:[%s437] sm:%s435] %v434
    %s439 = scalar_lea.vmem [#allocation2], 224
    %v440 = vld [vmem:[%s439] sm:%s273]
    %s441 = sshllo.u32 0, 1
    %s442 = smul.addr 1, 28
    %s443 = scalar_lea.vmem [#allocation0], %s442
    %444 = vst [vmem:[%s443] sm:%s441] %v440
    %s445 = scalar_lea.vmem [#allocation2], 232
    %v446 = vld [vmem:[%s445] sm:%s273]
    %s447 = sshllo.u32 0, 1
    %s448 = smul.addr 1, 29
    %s449 = scalar_lea.vmem [#allocation0], %s448
    %450 = vst [vmem:[%s449] sm:%s447] %v446
    %s451 = scalar_lea.vmem [#allocation2], 240
    %v452 = vld [vmem:[%s451] sm:%s273]
    %s453 = sshllo.u32 0, 1
    %s454 = smul.addr 1, 30
    %s455 = scalar_lea.vmem [#allocation0], %s454
    %456 = vst [vmem:[%s455] sm:%s453] %v452
    %s457 = scalar_lea.vmem [#allocation2], 248
    %v458 = vld [vmem:[%s457] sm:%s273]
    %s459 = sshllo.u32 0, 1
    %s460 = smul.addr 1, 31
    %s461 = scalar_lea.vmem [#allocation0], %s460
    %462 = vst [vmem:[%s461] sm:%s459] %v458
    %s463 = scalar_lea.vmem [#allocation2], 256
    %v464 = vld [vmem:[%s463] sm:%s273]
    %s465 = sshllo.u32 0, 1
    %s466 = smul.addr 1, 32
    %s467 = scalar_lea.vmem [#allocation0], %s466
    %468 = vst [vmem:[%s467] sm:%s465] %v464
    %s469 = scalar_lea.vmem [#allocation2], 264
    %v470 = vld [vmem:[%s469] sm:%s273]
    %s471 = sshllo.u32 0, 1
    %s472 = smul.addr 1, 33
    %s473 = scalar_lea.vmem [#allocation0], %s472
    %474 = vst [vmem:[%s473] sm:%s471] %v470
    %s475 = scalar_lea.vmem [#allocation2], 272
    %v476 = vld [vmem:[%s475] sm:%s273]
    %s477 = sshllo.u32 0, 1
    %s478 = smul.addr 1, 34
    %s479 = scalar_lea.vmem [#allocation0], %s478
    %480 = vst [vmem:[%s479] sm:%s477] %v476
    %s481 = scalar_lea.vmem [#allocation2], 280
    %v482 = vld [vmem:[%s481] sm:%s273]
    %s483 = sshllo.u32 0, 1
    %s484 = smul.addr 1, 35
    %s485 = scalar_lea.vmem [#allocation0], %s484
    %486 = vst [vmem:[%s485] sm:%s483] %v482
    %s487 = scalar_lea.vmem [#allocation2], 288
    %v488 = vld [vmem:[%s487] sm:%s273]
    %s489 = sshllo.u32 0, 1
    %s490 = smul.addr 1, 36
    %s491 = scalar_lea.vmem [#allocation0], %s490
    %492 = vst [vmem:[%s491] sm:%s489] %v488
    %s493 = scalar_lea.vmem [#allocation2], 296
    %v494 = vld [vmem:[%s493] sm:%s273]
    %s495 = sshllo.u32 0, 1
    %s496 = smul.addr 1, 37
    %s497 = scalar_lea.vmem [#allocation0], %s496
    %498 = vst [vmem:[%s497] sm:%s495] %v494
    %s499 = scalar_lea.vmem [#allocation2], 304
    %v500 = vld [vmem:[%s499] sm:%s273]
    %s501 = sshllo.u32 0, 1
    %s502 = smul.addr 1, 38
    %s503 = scalar_lea.vmem [#allocation0], %s502
    %504 = vst [vmem:[%s503] sm:%s501] %v500
    %s505 = scalar_lea.vmem [#allocation2], 312
    %v506 = vld [vmem:[%s505] sm:%s273]
    %s507 = sshllo.u32 0, 1
    %s508 = smul.addr 1, 39
    %s509 = scalar_lea.vmem [#allocation0], %s508
    %510 = vst [vmem:[%s509] sm:%s507] %v506
    %s512 = ssub.s32 640, 640
    %513 = vsyncadd [#allocation1], %s512
    %s515 = sshll.u32 [#allocation0], 4
    %s516 = int_to_ptr.vmem [resolvable:$true] %s515
    %518 = dma.vmem_to_hbm [thread:$0]  %s516, 640, %s1, [#allocation1]
    %519 = dma.done [#allocation1], 640
    %520 = vsyncpa [#allocation1], 1

// kernel: vq_forward.1
$region0: #{vq_forward.1}
  #allocation0 [shape = 'u32[]', space=smem, size = 0x4, offset = 0x4, fixed_abs, tag = 'smem constant byte address 0x4 - core index']
  #allocation1 [shape = 'u32[144,128]{1,0:T(1,128)}', space=vmem, size = 0x12000, scoped, tag = 'internal scratch']
  %s0 = inlined_call_operand.vmem [shape: f32[16,800], index: 0, kind: input, shape index: {}]
  %s1 = inlined_call_operand.vmem [shape: f32[128,16], index: 1, kind: input, shape index: {}]
  %s2 = inlined_call_operand.vmem [shape: f32[16,128], index: 2, kind: input, shape index: {}]
  %s3 = inlined_call_operand.vmem [shape: f32[128,1], index: 3, kind: input, shape index: {}]
  %s4 = inlined_call_operand.vmem [shape: f32[16,800], index: 4, kind: output, shape index: {0}]
  %s5 = inlined_call_operand.vmem [shape: s32[1,800], index: 5, kind: output, shape index: {1}]
  %s6 = inlined_call_operand.vmem [shape: f32[2,16,1], index: 6, kind: output, shape index: {2}]
  %s7 = inlined_call_operand.vmem [shape: f32[2,128,1], index: 7, kind: output, shape index: {3}]
  %8 = xla_tuple %s4, %s5, %s6, %s7
  %s9 = sld [smem:[#allocation0]]
  $region263: #{vq_forward.1} parent=0
    _
  %s11 = ssub.s32 1, %s9
  %s12 = scalar_select 0, %s11, %s9
  $region1: #{vq_forward.1} parent=0
    #allocation2 [shape = 'u8[65536]{0}', space=vmem, size = 0x10000, scoped, tag = 'input window, operand 0']
    #allocation3 [shape = 'u8[65536]{0}', space=vmem, size = 0x10000, scoped, tag = 'output window, operand 0']
    #allocation4 [shape = 'u8[4096]{0}', space=vmem, size = 0x1000, scoped, tag = 'output window, operand 1']
    loop: start=0, step=1, limit=4
    $region2: #{vq_forward.1} parent=1 // loop_pre_header
      _
    $region3: #{vq_forward.1} parent=1 // loop_header
      %s14 = sphi 0, %s18
      %p15 = scmp.ge.s32.totalorder %s14, 4
      %s24 = sphi 0, %s26
      %s27 = sphi 0, %s24
      %s28 = sphi 0, %s27
      %s44 = sphi 0, %s28
      %s48 = sphi 0, %s48
      %s50 = sphi 0, %s48
      %s51 = sphi 0, %s50
      %s65 = sphi 0, %s51
      %s69 = sphi 0, %s69
      %s71 = sphi 0, %s69
      %s72 = sphi 0, %s71
      %s86 = sphi 0, %s72
      %s90 = sphi 0, %s90
      %s92 = sphi 0, %s90
      %s93 = sphi 0, %s92
      %s107 = sphi 0, %s93
      %s113 = sphi 0, %s115
      %s116 = sphi 0, %s113
      %s117 = sphi 0, %s116
      %s133 = sphi 0, %s117
      %s139 = sphi 0, %s141
      %s142 = sphi 0, %s139
      %s143 = sphi 0, %s142
      %s159 = sphi 0, %s143
      %s165 = sphi 0, %s167
      %s168 = sphi 0, %s165
      %s169 = sphi 0, %s168
      %s185 = sphi 0, %s169
      %s191 = sphi 0, %s193
      %s194 = sphi 0, %s191
      %s195 = sphi 0, %s194
      %s211 = sphi 0, %s195
    $region4: #{vq_forward.1} parent=1 // loop_header_branch
      %17 = sbr.rel (%p15) target = $region8
    $region5: #{vq_forward.1} parent=1 // loop_body
      %s19 = ssub.s32 %s14, 1
      %s20 = ssub.s32 %s14, 2
      %s21 = sadd.s32 %s14, 1
      %s22 = ssub.s32 %s14, %s21
      %p23 = scmp.eq.s32.totalorder %s22, 0
      %s25 = sadd.s32 %s24, 1
      %s26 = scalar_select %p23, %s24, %s25
      %p29 = pneg %p23
      %p30 = scmp.eq.s32.totalorder %s14, 1
      %p31 = por %p29, %p30
      %p32 = scmp.ne.s32.totalorder %s24, %s27
      %p33 = scmp.eq.s32.totalorder %s14, 0
      %p34 = por %p32, %p33
      %p35 = scmp.ne.s32.totalorder %s24, %s27
      %p36 = scmp.eq.s32.totalorder %s19, 1
      %p37 = por %p35, %p36
      %p38 = scmp.ne.s32.totalorder %s27, %s28
      %p39 = scmp.eq.s32.totalorder %s19, 0
      %p40 = por %p38, %p39
      %p41 = scmp.ne.s32.totalorder %s27, %s28
      %p42 = scmp.eq.s32.totalorder %s20, 1
      %p43 = por %p41, %p42
      %p45 = scmp.ne.s32.totalorder %s28, %s44
      %p46 = scmp.eq.s32.totalorder %s20, 0
      %p47 = por %p45, %p46
      %s49 = sadd.s32 %s48, 1
      %p52 = scmp.eq.s32.totalorder %s14, 1
      %p53 = scmp.ne.s32.totalorder %s48, %s50
      %p54 = scmp.eq.s32.totalorder %s14, 0
      %p55 = por %p53, %p54
      %p56 = scmp.ne.s32.totalorder %s48, %s50
      %p57 = scmp.eq.s32.totalorder %s19, 1
      %p58 = por %p56, %p57
      %p59 = scmp.ne.s32.totalorder %s50, %s51
      %p60 = scmp.eq.s32.totalorder %s19, 0
      %p61 = por %p59, %p60
      %p62 = scmp.ne.s32.totalorder %s50, %s51
      %p63 = scmp.eq.s32.totalorder %s20, 1
      %p64 = por %p62, %p63
      %p66 = scmp.ne.s32.totalorder %s51, %s65
      %p67 = scmp.eq.s32.totalorder %s20, 0
      %p68 = por %p66, %p67
      %s70 = sadd.s32 %s69, 1
      %p73 = scmp.eq.s32.totalorder %s14, 1
      %p74 = scmp.ne.s32.totalorder %s69, %s71
      %p75 = scmp.eq.s32.totalorder %s14, 0
      %p76 = por %p74, %p75
      %p77 = scmp.ne.s32.totalorder %s69, %s71
      %p78 = scmp.eq.s32.totalorder %s19, 1
      %p79 = por %p77, %p78
      %p80 = scmp.ne.s32.totalorder %s71, %s72
      %p81 = scmp.eq.s32.totalorder %s19, 0
      %p82 = por %p80, %p81
      %p83 = scmp.ne.s32.totalorder %s71, %s72
      %p84 = scmp.eq.s32.totalorder %s20, 1
      %p85 = por %p83, %p84
      %p87 = scmp.ne.s32.totalorder %s72, %s86
      %p88 = scmp.eq.s32.totalorder %s20, 0
      %p89 = por %p87, %p88
      %s91 = sadd.s32 %s90, 1
      %p94 = scmp.eq.s32.totalorder %s14, 1
      %p95 = scmp.ne.s32.totalorder %s90, %s92
      %p96 = scmp.eq.s32.totalorder %s14, 0
      %p97 = por %p95, %p96
      %p98 = scmp.ne.s32.totalorder %s90, %s92
      %p99 = scmp.eq.s32.totalorder %s19, 1
      %p100 = por %p98, %p99
      %p101 = scmp.ne.s32.totalorder %s92, %s93
      %p102 = scmp.eq.s32.totalorder %s19, 0
      %p103 = por %p101, %p102
      %p104 = scmp.ne.s32.totalorder %s92, %s93
      %p105 = scmp.eq.s32.totalorder %s20, 1
      %p106 = por %p104, %p105
      %p108 = scmp.ne.s32.totalorder %s93, %s107
      %p109 = scmp.eq.s32.totalorder %s20, 0
      %p110 = por %p108, %p109
      %s111 = ssub.s32 %s14, %s21
      %p112 = scmp.eq.s32.totalorder %s111, 0
      %s114 = sadd.s32 %s113, 1
      %s115 = scalar_select %p112, %s113, %s114
      %p118 = pneg %p112
      %p119 = scmp.eq.s32.totalorder %s14, 1
      %p120 = por %p118, %p119
      %p121 = scmp.ne.s32.totalorder %s113, %s116
      %p122 = scmp.eq.s32.totalorder %s14, 0
      %p123 = por %p121, %p122
      %p124 = scmp.ne.s32.totalorder %s113, %s116
      %p125 = scmp.eq.s32.totalorder %s19, 1
      %p126 = por %p124, %p125
      %p127 = scmp.ne.s32.totalorder %s116, %s117
      %p128 = scmp.eq.s32.totalorder %s19, 0
      %p129 = por %p127, %p128
      %p130 = scmp.ne.s32.totalorder %s116, %s117
      %p131 = scmp.eq.s32.totalorder %s20, 1
      %p132 = por %p130, %p131
      %p134 = scmp.ne.s32.totalorder %s117, %s133
      %p135 = scmp.eq.s32.totalorder %s20, 0
      %p136 = por %p134, %p135
      %s137 = ssub.s32 %s14, %s21
      %p138 = scmp.eq.s32.totalorder %s137, 0
      %s140 = sadd.s32 %s139, 1
      %s141 = scalar_select %p138, %s139, %s140
      %p144 = pneg %p138
      %p145 = scmp.eq.s32.totalorder %s14, 1
      %p146 = por %p144, %p145
      %p147 = scmp.ne.s32.totalorder %s139, %s142
      %p148 = scmp.eq.s32.totalorder %s14, 0
      %p149 = por %p147, %p148
      %p150 = scmp.ne.s32.totalorder %s139, %s142
      %p151 = scmp.eq.s32.totalorder %s19, 1
      %p152 = por %p150, %p151
      %p153 = scmp.ne.s32.totalorder %s142, %s143
      %p154 = scmp.eq.s32.totalorder %s19, 0
      %p155 = por %p153, %p154
      %p156 = scmp.ne.s32.totalorder %s142, %s143
      %p157 = scmp.eq.s32.totalorder %s20, 1
      %p158 = por %p156, %p157
      %p160 = scmp.ne.s32.totalorder %s143, %s159
      %p161 = scmp.eq.s32.totalorder %s20, 0
      %p162 = por %p160, %p161
      %s163 = ssub.s32 %s14, %s21
      %p164 = scmp.eq.s32.totalorder %s163, 0
      %s166 = sadd.s32 %s165, 1
      %s167 = scalar_select %p164, %s165, %s166
      %p170 = pneg %p164
      %p171 = scmp.eq.s32.totalorder %s14, 1
      %p172 = por %p170, %p171
      %p173 = scmp.ne.s32.totalorder %s165, %s168
      %p174 = scmp.eq.s32.totalorder %s14, 0
      %p175 = por %p173, %p174
      %p176 = scmp.ne.s32.totalorder %s165, %s168
      %p177 = scmp.eq.s32.totalorder %s19, 1
      %p178 = por %p176, %p177
      %p179 = scmp.ne.s32.totalorder %s168, %s169
      %p180 = scmp.eq.s32.totalorder %s19, 0
      %p181 = por %p179, %p180
      %p182 = scmp.ne.s32.totalorder %s168, %s169
      %p183 = scmp.eq.s32.totalorder %s20, 1
      %p184 = por %p182, %p183
      %p186 = scmp.ne.s32.totalorder %s169, %s185
      %p187 = scmp.eq.s32.totalorder %s20, 0
      %p188 = por %p186, %p187
      %s189 = ssub.s32 %s14, %s21
      %p190 = scmp.eq.s32.totalorder %s189, 0
      %s192 = sadd.s32 %s191, 1
      %s193 = scalar_select %p190, %s191, %s192
      %p196 = pneg %p190
      %p197 = scmp.eq.s32.totalorder %s14, 1
      %p198 = por %p196, %p197
      %p199 = scmp.ne.s32.totalorder %s191, %s194
      %p200 = scmp.eq.s32.totalorder %s14, 0
      %p201 = por %p199, %p200
      %p202 = scmp.ne.s32.totalorder %s191, %s194
      %p203 = scmp.eq.s32.totalorder %s19, 1
      %p204 = por %p202, %p203
      %p205 = scmp.ne.s32.totalorder %s194, %s195
      %p206 = scmp.eq.s32.totalorder %s19, 0
      %p207 = por %p205, %p206
      %p208 = scmp.ne.s32.totalorder %s194, %s195
      %p209 = scmp.eq.s32.totalorder %s20, 1
      %p210 = por %p208, %p209
      %p212 = scmp.ne.s32.totalorder %s195, %s211
      %p213 = scmp.eq.s32.totalorder %s20, 0
      %p214 = por %p212, %p213
      %p215 = scmp.le.s32.totalorder 1, %s14
      %p216 = scmp.lt.s32.totalorder %s14, 3
      %p217 = pnand %p215, %p216
      %p218 = pneg %p217
      // Predicated region
      $region9: #{vq_forward.1} parent=5 // pred_check
        _
      $region10: #{vq_forward.1} parent=5 // pred_check_branch
        %220 = sbr.rel (%p217) target = $region12
      $region11: #{vq_forward.1} parent=5 // pred_region
        %s221 = ssub.s32 %s14, 1
        // Predicated region
        $region13: #{vq_forward.1} parent=11 // pred_check
          %p222 = pneg %p61
        $region14: #{vq_forward.1} parent=11 // pred_check_branch
          %224 = sbr.rel (%p222) target = $region16
        $region15: #{vq_forward.1} parent=11 // pred_region
          _
        $region16: #{vq_forward.1} parent=11 // pred_fallthru
          _
        // Predicated region
        $region17: #{vq_forward.1} parent=11 // pred_check
          %p225 = pneg %p82
        $region18: #{vq_forward.1} parent=11 // pred_check_branch
          %227 = sbr.rel (%p225) target = $region20
        $region19: #{vq_forward.1} parent=11 // pred_region
          _
        $region20: #{vq_forward.1} parent=11 // pred_fallthru
          _
        // Predicated region
        $region21: #{vq_forward.1} parent=11 // pred_check
          %p228 = pneg %p103
        $region22: #{vq_forward.1} parent=11 // pred_check_branch
          %230 = sbr.rel (%p228) target = $region24
        $region23: #{vq_forward.1} parent=11 // pred_region
          _
        $region24: #{vq_forward.1} parent=11 // pred_fallthru
          _
      $region12: #{vq_forward.1} parent=5 // pred_fallthru
        _
      %p231 = scmp.lt.s32.totalorder %s14, 2
      // Predicated region
      $region25: #{vq_forward.1} parent=5 // pred_check
        %p232 = pneg %p231
      $region26: #{vq_forward.1} parent=5 // pred_check_branch
        %234 = sbr.rel (%p232) target = $region28
      $region27: #{vq_forward.1} parent=5 // pred_region
        // Predicated region
        $region29: #{vq_forward.1} parent=27 // pred_check
          %p235 = pneg %p34
        $region30: #{vq_forward.1} parent=27 // pred_check_branch
          %237 = sbr.rel (%p235) target = $region32
        $region31: #{vq_forward.1} parent=27 // pred_region
          %s238 = sand.u32 %s24, 1
          %s239 = sand.u32 %s24, 1
          %s240 = smul.addr %s239, 64
          %s241 = scalar_lea.vmem [#allocation2], %s240
          %s242 = smul.u32 4, %s14
          %s243 = ssub.s32 7, %s242
          %p244 = scmp.lt.s32.totalorder %s243, 4
          %s245 = scalar_select %p244, %s243, 4
          %s246 = smul.u32 256, %s245
          %p247 = scmp.ne.s32.totalorder 0, %s246
          %s248 = smul.addr %s242, 8
          %s249 = scalar_lea.vmem %s0, %s248
          %s250 = smul.u32 %s245, 8
          // Predicated region
          $region33: #{vq_forward.1} parent=31 // pred_check
            %p251 = pneg %p247
          $region34: #{vq_forward.1} parent=31 // pred_check_branch
            %253 = sbr.rel (%p251) target = $region36
          $region35: #{vq_forward.1} parent=31 // pred_region
            %p254 = scmp.lt.u32.totalorder %s250, 8
            %p255 = pneg %p254
            // Predicated region
            $region37: #{vq_forward.1} parent=35 // pred_check
              _
            $region38: #{vq_forward.1} parent=35 // pred_check_branch
              %257 = sbr.rel (%p254) target = $region40
            $region39: #{vq_forward.1} parent=35 // pred_region
              %s274 = sand.u32 %s250, 7
              %p275 = scmp.eq.s32.totalorder %s274, 0
              // Predicated region
              $region52: #{vq_forward.1} parent=39 // pred_check
                %p276 = pneg %p275
              $region53: #{vq_forward.1} parent=39 // pred_check_branch
                %278 = sbr.rel (%p276) target = $region55
              $region54: #{vq_forward.1} parent=39 // pred_region
                %s279 = sshrl.u32 %s250, 3
                %s280 = sshrl.u32 %s279, 5
                // While loop
                $region56: #{vq_forward.1} parent=54 // loop_pre_header
                  _
                $region57: #{vq_forward.1} parent=54 // loop_header
                  %s284 = sphi 0, %s286
                  %p285 = scmp.ge.s32.totalorder %s284, %s280
                  %s289 = sphi 0, %s422
                  %s290 = sphi %s249, %s425
                  %s291 = sphi %s241, %s426
                $region58: #{vq_forward.1} parent=54 // loop_header_branch
                  %288 = sbr.rel (%p285) target = $region62
                $region59: #{vq_forward.1} parent=54 // loop_body
                  %v292 = vld [vmem:[%s290] sm:$0xff]
                  %293 = vst [vmem:[%s291] sm:$0xff] %v292
                  %v294 = vld [vmem:[%s290 + $0x8] sm:$0xff]
                  %295 = vst [vmem:[%s291 + $0x8] sm:$0xff] %v294
                  %v296 = vld [vmem:[%s290 + $0x10] sm:$0xff]
                  %297 = vst [vmem:[%s291 + $0x10] sm:$0xff] %v296
                  %v298 = vld [vmem:[%s290 + $0x18] sm:$0xff]
                  %299 = vst [vmem:[%s291 + $0x18] sm:$0xff] %v298
                  %v300 = vld [vmem:[%s290 + $0x20] sm:$0xff]
                  %301 = vst [vmem:[%s291 + $0x20] sm:$0xff] %v300
                  %v302 = vld [vmem:[%s290 + $0x28] sm:$0xff]
                  %303 = vst [vmem:[%s291 + $0x28] sm:$0xff] %v302
                  %v304 = vld [vmem:[%s290 + $0x30] sm:$0xff]
                  %305 = vst [vmem:[%s291 + $0x30] sm:$0xff] %v304
                  %v306 = vld [vmem:[%s290 + $0x38] sm:$0xff]
                  %307 = vst [vmem:[%s291 + $0x38] sm:$0xff] %v306
                  %v308 = vld [vmem:[%s290 + $0x40] sm:$0xff]
                  %309 = vst [vmem:[%s291 + $0x40] sm:$0xff] %v308
                  %v310 = vld [vmem:[%s290 + $0x48] sm:$0xff]
                  %311 = vst [vmem:[%s291 + $0x48] sm:$0xff] %v310
                  %v312 = vld [vmem:[%s290 + $0x50] sm:$0xff]
                  %313 = vst [vmem:[%s291 + $0x50] sm:$0xff] %v312
                  %v314 = vld [vmem:[%s290 + $0x58] sm:$0xff]
                  %315 = vst [vmem:[%s291 + $0x58] sm:$0xff] %v314
                  %v316 = vld [vmem:[%s290 + $0x60] sm:$0xff]
                  %317 = vst [vmem:[%s291 + $0x60] sm:$0xff] %v316
                  %v318 = vld [vmem:[%s290 + $0x68] sm:$0xff]
                  %319 = vst [vmem:[%s291 + $0x68] sm:$0xff] %v318
                  %v320 = vld [vmem:[%s290 + $0x70] sm:$0xff]
                  %321 = vst [vmem:[%s291 + $0x70] sm:$0xff] %v320
                  %v322 = vld [vmem:[%s290 + $0x78] sm:$0xff]
                  %323 = vst [vmem:[%s291 + $0x78] sm:$0xff] %v322
                  %v324 = vld [vmem:[%s290 + $0x80] sm:$0xff]
                  %325 = vst [vmem:[%s291 + $0x80] sm:$0xff] %v324
                  %v326 = vld [vmem:[%s290 + $0x88] sm:$0xff]
                  %327 = vst [vmem:[%s291 + $0x88] sm:$0xff] %v326
                  %v328 = vld [vmem:[%s290 + $0x90] sm:$0xff]
                  %329 = vst [vmem:[%s291 + $0x90] sm:$0xff] %v328
                  %v330 = vld [vmem:[%s290 + $0x98] sm:$0xff]
                  %331 = vst [vmem:[%s291 + $0x98] sm:$0xff] %v330
                  %v332 = vld [vmem:[%s290 + $0xa0] sm:$0xff]
                  %333 = vst [vmem:[%s291 + $0xa0] sm:$0xff] %v332
                  %v334 = vld [vmem:[%s290 + $0xa8] sm:$0xff]
                  %335 = vst [vmem:[%s291 + $0xa8] sm:$0xff] %v334
                  %v336 = vld [vmem:[%s290 + $0xb0] sm:$0xff]
                  %337 = vst [vmem:[%s291 + $0xb0] sm:$0xff] %v336
                  %v338 = vld [vmem:[%s290 + $0xb8] sm:$0xff]
                  %339 = vst [vmem:[%s291 + $0xb8] sm:$0xff] %v338
                  %v340 = vld [vmem:[%s290 + $0xc0] sm:$0xff]
                  %341 = vst [vmem:[%s291 + $0xc0] sm:$0xff] %v340
                  %v342 = vld [vmem:[%s290 + $0xc8] sm:$0xff]
                  %343 = vst [vmem:[%s291 + $0xc8] sm:$0xff] %v342
                  %v344 = vld [vmem:[%s290 + $0xd0] sm:$0xff]
                  %345 = vst [vmem:[%s291 + $0xd0] sm:$0xff] %v344
                  %v346 = vld [vmem:[%s290 + $0xd8] sm:$0xff]
                  %347 = vst [vmem:[%s291 + $0xd8] sm:$0xff] %v346
                  %v348 = vld [vmem:[%s290 + $0xe0] sm:$0xff]
                  %349 = vst [vmem:[%s291 + $0xe0] sm:$0xff] %v348
                  %v350 = vld [vmem:[%s290 + $0xe8] sm:$0xff]
                  %351 = vst [vmem:[%s291 + $0xe8] sm:$0xff] %v350
                  %v352 = vld [vmem:[%s290 + $0xf0] sm:$0xff]
                  %353 = vst [vmem:[%s291 + $0xf0] sm:$0xff] %v352
                  %v354 = vld [vmem:[%s290 + $0xf8] sm:$0xff]
                  %355 = vst [vmem:[%s291 + $0xf8] sm:$0xff] %v354
                  %v356 = vld [vmem:[%s290 + $0x38] sm:$0xff]
                  %357 = vst [vmem:[%s291 + $0x20] sm:$0xff] %v356
                  %v358 = vld [vmem:[%s290 + $0x40] sm:$0xff]
                  %359 = vst [vmem:[%s291 + $0x28] sm:$0xff] %v358
                  %v360 = vld [vmem:[%s290 + $0x48] sm:$0xff]
                  %361 = vst [vmem:[%s291 + $0x30] sm:$0xff] %v360
                  %v362 = vld [vmem:[%s290 + $0x50] sm:$0xff]
                  %363 = vst [vmem:[%s291 + $0x38] sm:$0xff] %v362
                  %v364 = vld [vmem:[%s290 + $0x58] sm:$0xff]
                  %365 = vst [vmem:[%s291 + $0x40] sm:$0xff] %v364
                  %v366 = vld [vmem:[%s290 + $0x60] sm:$0xff]
                  %367 = vst [vmem:[%s291 + $0x48] sm:$0xff] %v366
                  %v368 = vld [vmem:[%s290 + $0x68] sm:$0xff]
                  %369 = vst [vmem:[%s291 + $0x50] sm:$0xff] %v368
                  %v370 = vld [vmem:[%s290 + $0x70] sm:$0xff]
                  %371 = vst [vmem:[%s291 + $0x58] sm:$0xff] %v370
                  %v372 = vld [vmem:[%s290 + $0x78] sm:$0xff]
                  %373 = vst [vmem:[%s291 + $0x60] sm:$0xff] %v372
                  %v374 = vld [vmem:[%s290 + $0x80] sm:$0xff]
                  %375 = vst [vmem:[%s291 + $0x68] sm:$0xff] %v374
                  %v376 = vld [vmem:[%s290 + $0x88] sm:$0xff]
                  %377 = vst [vmem:[%s291 + $0x70] sm:$0xff] %v376
                  %v378 = vld [vmem:[%s290 + $0x90] sm:$0xff]
                  %379 = vst [vmem:[%s291 + $0x78] sm:$0xff] %v378
                  %v380 = vld [vmem:[%s290 + $0x98] sm:$0xff]
                  %381 = vst [vmem:[%s291 + $0x80] sm:$0xff] %v380
                  %v382 = vld [vmem:[%s290 + $0xa0] sm:$0xff]
                  %383 = vst [vmem:[%s291 + $0x88] sm:$0xff] %v382
                  %v384 = vld [vmem:[%s290 + $0xa8] sm:$0xff]
                  %385 = vst [vmem:[%s291 + $0x90] sm:$0xff] %v384
                  %v386 = vld [vmem:[%s290 + $0xb0] sm:$0xff]
                  %387 = vst [vmem:[%s291 + $0x98] sm:$0xff] %v386
                  %v388 = vld [vmem:[%s290 + $0xb8] sm:$0xff]
                  %389 = vst [vmem:[%s291 + $0xa0] sm:$0xff] %v388
                  %v390 = vld [vmem:[%s290 + $0xc0] sm:$0xff]
                  %391 = vst [vmem:[%s291 + $0xa8] sm:$0xff] %v390
                  %v392 = vld [vmem:[%s290 + $0xc8] sm:$0xff]
                  %393 = vst [vmem:[%s291 + $0xb0] sm:$0xff] %v392
                  %v394 = vld [vmem:[%s290 + $0xd0] sm:$0xff]
                  %395 = vst [vmem:[%s291 + $0xb8] sm:$0xff] %v394
                  %v396 = vld [vmem:[%s290 + $0xd8] sm:$0xff]
                  %397 = vst [vmem:[%s291 + $0xc0] sm:$0xff] %v396
                  %v398 = vld [vmem:[%s290 + $0xe0] sm:$0xff]
                  %399 = vst [vmem:[%s291 + $0xc8] sm:$0xff] %v398
                  %v400 = vld [vmem:[%s290 + $0xe8] sm:$0xff]
                  %401 = vst [vmem:[%s291 + $0xd0] sm:$0xff] %v400
                  %v402 = vld [vmem:[%s290 + $0xf0] sm:$0xff]
                  %403 = vst [vmem:[%s291 + $0xd8] sm:$0xff] %v402
                  %v404 = vld [vmem:[%s290 + $0xf8] sm:$0xff]
                  %405 = vst [vmem:[%s291 + $0xe0] sm:$0xff] %v404
                  %v406 = vld [vmem:[%s290 + $0x100] sm:$0xff]
                  %407 = vst [vmem:[%s291 + $0xe8] sm:$0xff] %v406
                  %v408 = vld [vmem:[%s290 + $0x108] sm:$0xff]
                  %409 = vst [vmem:[%s291 + $0xf0] sm:$0xff] %v408
                  %v410 = vld [vmem:[%s290 + $0x110] sm:$0xff]
                  %411 = vst [vmem:[%s291 + $0xf8] sm:$0xff] %v410
                  %v412 = vld [vmem:[%s290 + $0x118] sm:$0xff]
                  %413 = vst [vmem:[%s291 + $0x100] sm:$0xff] %v412
                  %v414 = vld [vmem:[%s290 + $0x120] sm:$0xff]
                  %415 = vst [vmem:[%s291 + $0x108] sm:$0xff] %v414
                  %v416 = vld [vmem:[%s290 + $0x128] sm:$0xff]
                  %417 = vst [vmem:[%s291 + $0x110] sm:$0xff] %v416
                  %v418 = vld [vmem:[%s290 + $0x130] sm:$0xff]
                  %419 = vst [vmem:[%s291 + $0x118] sm:$0xff] %v418
                  %s420 = sadd.s32 1, %s289
                  %p421 = scmp.ge.s32.totalorder %s420, %s280
                  %s422 = scalar_select %p421, 0, %s420
                  %s423 = smul.u32 %s422, 256
                  %s424 = smul.u32 %s422, 256
                  %s425 = scalar_lea.vmem %s249, %s423
                  %s426 = scalar_lea.vmem %s241, %s424 [#allocation2]
                $region60: #{vq_forward.1} parent=54 // loop_footer
                  %s286 = sadd.s32 %s284, 1
                $region61: #{vq_forward.1} parent=54 // loop_footer_branch
                  %283 = sbr.rel target = $region57
                $region62: #{vq_forward.1} parent=54 // loop_exit
                  _
                %s427 = sshrl.u32 %s279, 5
                %s428 = sand.u32 %s279, 31
                %s429 = smul.u32 %s427, 32
                %s430 = smul.u32 128, %s429
                %s431 = sshra.s32 %s430, 4
                %s432 = scalar_lea.vmem %s249, %s431
                %s433 = smul.u32 128, %s429
                %s434 = sshra.s32 %s433, 4
                %s435 = scalar_lea.vmem %s241, %s434 [#allocation2]
                // While loop
                $region63: #{vq_forward.1} parent=54 // loop_pre_header
                  _
                $region64: #{vq_forward.1} parent=54 // loop_header
                  %s439 = sphi 0, %s441
                  %p440 = scmp.ge.s32.totalorder %s439, %s428
                  %s444 = sphi 0, %s453
                  %s445 = sphi %s432, %s456
                  %s446 = sphi %s435, %s457
                $region65: #{vq_forward.1} parent=54 // loop_header_branch
                  %443 = sbr.rel (%p440) target = $region69
                $region66: #{vq_forward.1} parent=54 // loop_body
                  %v447 = vld [vmem:[%s445] sm:$0xff]
                  %448 = vst [vmem:[%s446] sm:$0xff] %v447
                  %v449 = vld [vmem:[%s445 + $0x38] sm:$0xff]
                  %450 = vst [vmem:[%s446 + $0x20] sm:$0xff] %v449
                  %s451 = sadd.s32 1, %s444
                  %p452 = scmp.ge.s32.totalorder %s451, %s428
                  %s453 = scalar_select %p452, 0, %s451
                  %s454 = smul.u32 %s453, 8
                  %s455 = smul.u32 %s453, 8
                  %s456 = scalar_lea.vmem %s432, %s454
                  %s457 = scalar_lea.vmem %s435, %s455 [#allocation2]
                $region67: #{vq_forward.1} parent=54 // loop_footer
                  %s441 = sadd.s32 %s439, 1
                $region68: #{vq_forward.1} parent=54 // loop_footer_branch
                  %438 = sbr.rel target = $region64
                $region69: #{vq_forward.1} parent=54 // loop_exit
                  _
              $region55: #{vq_forward.1} parent=39 // pred_fallthru
                _
              %p458 = pneg %p275
              // Predicated region
              $region70: #{vq_forward.1} parent=39 // pred_check
                _
              $region71: #{vq_forward.1} parent=39 // pred_check_branch
                %460 = sbr.rel (%p275) target = $region73
              $region72: #{vq_forward.1} parent=39 // pred_region
                %s461 = sand.u32 %s250, 7
                %s462 = ssub.s32 %s250, %s461
                %s463 = scalar_lea.vmem %s249, %s462
                %s464 = ssub.s32 %s250, %s461
                %s465 = scalar_lea.vmem %s241, %s464 [#allocation2]
                %s466 = sshrl.u32 %s250, 3
                %s467 = sshrl.u32 %s466, 5
                // While loop
                $region74: #{vq_forward.1} parent=72 // loop_pre_header
                  _
                $region75: #{vq_forward.1} parent=72 // loop_header
                  %s471 = sphi 0, %s473
                  %p472 = scmp.ge.s32.totalorder %s471, %s467
                  %s476 = sphi 0, %s609
                  %s477 = sphi %s249, %s612
                  %s478 = sphi %s241, %s613
                $region76: #{vq_forward.1} parent=72 // loop_header_branch
                  %475 = sbr.rel (%p472) target = $region80
                $region77: #{vq_forward.1} parent=72 // loop_body
                  %v479 = vld [vmem:[%s477] sm:$0xff]
                  %480 = vst [vmem:[%s478] sm:$0xff] %v479
                  %v481 = vld [vmem:[%s477 + $0x8] sm:$0xff]
                  %482 = vst [vmem:[%s478 + $0x8] sm:$0xff] %v481
                  %v483 = vld [vmem:[%s477 + $0x10] sm:$0xff]
                  %484 = vst [vmem:[%s478 + $0x10] sm:$0xff] %v483
                  %v485 = vld [vmem:[%s477 + $0x18] sm:$0xff]
                  %486 = vst [vmem:[%s478 + $0x18] sm:$0xff] %v485
                  %v487 = vld [vmem:[%s477 + $0x20] sm:$0xff]
                  %488 = vst [vmem:[%s478 + $0x20] sm:$0xff] %v487
                  %v489 = vld [vmem:[%s477 + $0x28] sm:$0xff]
                  %490 = vst [vmem:[%s478 + $0x28] sm:$0xff] %v489
                  %v491 = vld [vmem:[%s477 + $0x30] sm:$0xff]
                  %492 = vst [vmem:[%s478 + $0x30] sm:$0xff] %v491
                  %v493 = vld [vmem:[%s477 + $0x38] sm:$0xff]
                  %494 = vst [vmem:[%s478 + $0x38] sm:$0xff] %v493
                  %v495 = vld [vmem:[%s477 + $0x40] sm:$0xff]
                  %496 = vst [vmem:[%s478 + $0x40] sm:$0xff] %v495
                  %v497 = vld [vmem:[%s477 + $0x48] sm:$0xff]
                  %498 = vst [vmem:[%s478 + $0x48] sm:$0xff] %v497
                  %v499 = vld [vmem:[%s477 + $0x50] sm:$0xff]
                  %500 = vst [vmem:[%s478 + $0x50] sm:$0xff] %v499
                  %v501 = vld [vmem:[%s477 + $0x58] sm:$0xff]
                  %502 = vst [vmem:[%s478 + $0x58] sm:$0xff] %v501
                  %v503 = vld [vmem:[%s477 + $0x60] sm:$0xff]
                  %504 = vst [vmem:[%s478 + $0x60] sm:$0xff] %v503
                  %v505 = vld [vmem:[%s477 + $0x68] sm:$0xff]
                  %506 = vst [vmem:[%s478 + $0x68] sm:$0xff] %v505
                  %v507 = vld [vmem:[%s477 + $0x70] sm:$0xff]
                  %508 = vst [vmem:[%s478 + $0x70] sm:$0xff] %v507
                  %v509 = vld [vmem:[%s477 + $0x78] sm:$0xff]
                  %510 = vst [vmem:[%s478 + $0x78] sm:$0xff] %v509
                  %v511 = vld [vmem:[%s477 + $0x80] sm:$0xff]
                  %512 = vst [vmem:[%s478 + $0x80] sm:$0xff] %v511
                  %v513 = vld [vmem:[%s477 + $0x88] sm:$0xff]
                  %514 = vst [vmem:[%s478 + $0x88] sm:$0xff] %v513
                  %v515 = vld [vmem:[%s477 + $0x90] sm:$0xff]
                  %516 = vst [vmem:[%s478 + $0x90] sm:$0xff] %v515
                  %v517 = vld [vmem:[%s477 + $0x98] sm:$0xff]
                  %518 = vst [vmem:[%s478 + $0x98] sm:$0xff] %v517
                  %v519 = vld [vmem:[%s477 + $0xa0] sm:$0xff]
                  %520 = vst [vmem:[%s478 + $0xa0] sm:$0xff] %v519
                  %v521 = vld [vmem:[%s477 + $0xa8] sm:$0xff]
                  %522 = vst [vmem:[%s478 + $0xa8] sm:$0xff] %v521
                  %v523 = vld [vmem:[%s477 + $0xb0] sm:$0xff]
                  %524 = vst [vmem:[%s478 + $0xb0] sm:$0xff] %v523
                  %v525 = vld [vmem:[%s477 + $0xb8] sm:$0xff]
                  %526 = vst [vmem:[%s478 + $0xb8] sm:$0xff] %v525
                  %v527 = vld [vmem:[%s477 + $0xc0] sm:$0xff]
                  %528 = vst [vmem:[%s478 + $0xc0] sm:$0xff] %v527
                  %v529 = vld [vmem:[%s477 + $0xc8] sm:$0xff]
                  %530 = vst [vmem:[%s478 + $0xc8] sm:$0xff] %v529
                  %v531 = vld [vmem:[%s477 + $0xd0] sm:$0xff]
                  %532 = vst [vmem:[%s478 + $0xd0] sm:$0xff] %v531
                  %v533 = vld [vmem:[%s477 + $0xd8] sm:$0xff]
                  %534 = vst [vmem:[%s478 + $0xd8] sm:$0xff] %v533
                  %v535 = vld [vmem:[%s477 + $0xe0] sm:$0xff]
                  %536 = vst [vmem:[%s478 + $0xe0] sm:$0xff] %v535
                  %v537 = vld [vmem:[%s477 + $0xe8] sm:$0xff]
                  %538 = vst [vmem:[%s478 + $0xe8] sm:$0xff] %v537
                  %v539 = vld [vmem:[%s477 + $0xf0] sm:$0xff]
                  %540 = vst [vmem:[%s478 + $0xf0] sm:$0xff] %v539
                  %v541 = vld [vmem:[%s477 + $0xf8] sm:$0xff]
                  %542 = vst [vmem:[%s478 + $0xf8] sm:$0xff] %v541
                  %v543 = vld [vmem:[%s477 + $0x38] sm:$0xff]
                  %544 = vst [vmem:[%s478 + $0x20] sm:$0xff] %v543
                  %v545 = vld [vmem:[%s477 + $0x40] sm:$0xff]
                  %546 = vst [vmem:[%s478 + $0x28] sm:$0xff] %v545
                  %v547 = vld [vmem:[%s477 + $0x48] sm:$0xff]
                  %548 = vst [vmem:[%s478 + $0x30] sm:$0xff] %v547
                  %v549 = vld [vmem:[%s477 + $0x50] sm:$0xff]
                  %550 = vst [vmem:[%s478 + $0x38] sm:$0xff] %v549
                  %v551 = vld [vmem:[%s477 + $0x58] sm:$0xff]
                  %552 = vst [vmem:[%s478 + $0x40] sm:$0xff] %v551
                  %v553 = vld [vmem:[%s477 + $0x60] sm:$0xff]
                  %554 = vst [vmem:[%s478 + $0x48] sm:$0xff] %v553
                  %v555 = vld [vmem:[%s477 + $0x68] sm:$0xff]
                  %556 = vst [vmem:[%s478 + $0x50] sm:$0xff] %v555
                  %v557 = vld [vmem:[%s477 + $0x70] sm:$0xff]
                  %558 = vst [vmem:[%s478 + $0x58] sm:$0xff] %v557
                  %v559 = vld [vmem:[%s477 + $0x78] sm:$0xff]
                  %560 = vst [vmem:[%s478 + $0x60] sm:$0xff] %v559
                  %v561 = vld [vmem:[%s477 + $0x80] sm:$0xff]
                  %562 = vst [vmem:[%s478 + $0x68] sm:$0xff] %v561
                  %v563 = vld [vmem:[%s477 + $0x88] sm:$0xff]
                  %564 = vst [vmem:[%s478 + $0x70] sm:$0xff] %v563
                  %v565 = vld [vmem:[%s477 + $0x90] sm:$0xff]
                  %566 = vst [vmem:[%s478 + $0x78] sm:$0xff] %v565
                  %v567 = vld [vmem:[%s477 + $0x98] sm:$0xff]
                  %568 = vst [vmem:[%s478 + $0x80] sm:$0xff] %v567
                  %v569 = vld [vmem:[%s477 + $0xa0] sm:$0xff]
                  %570 = vst [vmem:[%s478 + $0x88] sm:$0xff] %v569
                  %v571 = vld [vmem:[%s477 + $0xa8] sm:$0xff]
                  %572 = vst [vmem:[%s478 + $0x90] sm:$0xff] %v571
                  %v573 = vld [vmem:[%s477 + $0xb0] sm:$0xff]
                  %574 = vst [vmem:[%s478 + $0x98] sm:$0xff] %v573
                  %v575 = vld [vmem:[%s477 + $0xb8] sm:$0xff]
                  %576 = vst [vmem:[%s478 + $0xa0] sm:$0xff] %v575
                  %v577 = vld [vmem:[%s477 + $0xc0] sm:$0xff]
                  %578 = vst [vmem:[%s478 + $0xa8] sm:$0xff] %v577
                  %v579 = vld [vmem:[%s477 + $0xc8] sm:$0xff]
                  %580 = vst [vmem:[%s478 + $0xb0] sm:$0xff] %v579
                  %v581 = vld [vmem:[%s477 + $0xd0] sm:$0xff]
                  %582 = vst [vmem:[%s478 + $0xb8] sm:$0xff] %v581
                  %v583 = vld [vmem:[%s477 + $0xd8] sm:$0xff]
                  %584 = vst [vmem:[%s478 + $0xc0] sm:$0xff] %v583
                  %v585 = vld [vmem:[%s477 + $0xe0] sm:$0xff]
                  %586 = vst [vmem:[%s478 + $0xc8] sm:$0xff] %v585
                  %v587 = vld [vmem:[%s477 + $0xe8] sm:$0xff]
                  %588 = vst [vmem:[%s478 + $0xd0] sm:$0xff] %v587
                  %v589 = vld [vmem:[%s477 + $0xf0] sm:$0xff]
                  %590 = vst [vmem:[%s478 + $0xd8] sm:$0xff] %v589
                  %v591 = vld [vmem:[%s477 + $0xf8] sm:$0xff]
                  %592 = vst [vmem:[%s478 + $0xe0] sm:$0xff] %v591
                  %v593 = vld [vmem:[%s477 + $0x100] sm:$0xff]
                  %594 = vst [vmem:[%s478 + $0xe8] sm:$0xff] %v593
                  %v595 = vld [vmem:[%s477 + $0x108] sm:$0xff]
                  %596 = vst [vmem:[%s478 + $0xf0] sm:$0xff] %v595
                  %v597 = vld [vmem:[%s477 + $0x110] sm:$0xff]
                  %598 = vst [vmem:[%s478 + $0xf8] sm:$0xff] %v597
                  %v599 = vld [vmem:[%s477 + $0x118] sm:$0xff]
                  %600 = vst [vmem:[%s478 + $0x100] sm:$0xff] %v599
                  %v601 = vld [vmem:[%s477 + $0x120] sm:$0xff]
                  %602 = vst [vmem:[%s478 + $0x108] sm:$0xff] %v601
                  %v603 = vld [vmem:[%s477 + $0x128] sm:$0xff]
                  %604 = vst [vmem:[%s478 + $0x110] sm:$0xff] %v603
                  %v605 = vld [vmem:[%s477 + $0x130] sm:$0xff]
                  %606 = vst [vmem:[%s478 + $0x118] sm:$0xff] %v605
                  %s607 = sadd.s32 1, %s476
                  %p608 = scmp.ge.s32.totalorder %s607, %s467
                  %s609 = scalar_select %p608, 0, %s607
                  %s610 = smul.u32 %s609, 256
                  %s611 = smul.u32 %s609, 256
                  %s612 = scalar_lea.vmem %s249, %s610
                  %s613 = scalar_lea.vmem %s241, %s611 [#allocation2]
                $region78: #{vq_forward.1} parent=72 // loop_footer
                  %s473 = sadd.s32 %s471, 1
                $region79: #{vq_forward.1} parent=72 // loop_footer_branch
                  %470 = sbr.rel target = $region75
                $region80: #{vq_forward.1} parent=72 // loop_exit
                  _
                %s614 = sshrl.u32 %s466, 5
                %s615 = sand.u32 %s466, 31
                %s616 = smul.u32 %s614, 32
                %s617 = smul.u32 128, %s616
                %s618 = sshra.s32 %s617, 4
                %s619 = scalar_lea.vmem %s249, %s618
                %s620 = smul.u32 128, %s616
                %s621 = sshra.s32 %s620, 4
                %s622 = scalar_lea.vmem %s241, %s621 [#allocation2]
                // While loop
                $region81: #{vq_forward.1} parent=72 // loop_pre_header
                  _
                $region82: #{vq_forward.1} parent=72 // loop_header
                  %s626 = sphi 0, %s628
                  %p627 = scmp.ge.s32.totalorder %s626, %s615
                  %s631 = sphi 0, %s640
                  %s632 = sphi %s619, %s643
                  %s633 = sphi %s622, %s644
                $region83: #{vq_forward.1} parent=72 // loop_header_branch
                  %630 = sbr.rel (%p627) target = $region87
                $region84: #{vq_forward.1} parent=72 // loop_body
                  %v634 = vld [vmem:[%s632] sm:$0xff]
                  %635 = vst [vmem:[%s633] sm:$0xff] %v634
                  %v636 = vld [vmem:[%s632 + $0x38] sm:$0xff]
                  %637 = vst [vmem:[%s633 + $0x20] sm:$0xff] %v636
                  %s638 = sadd.s32 1, %s631
                  %p639 = scmp.ge.s32.totalorder %s638, %s615
                  %s640 = scalar_select %p639, 0, %s638
                  %s641 = smul.u32 %s640, 8
                  %s642 = smul.u32 %s640, 8
                  %s643 = scalar_lea.vmem %s619, %s641
                  %s644 = scalar_lea.vmem %s622, %s642 [#allocation2]
                $region85: #{vq_forward.1} parent=72 // loop_footer
                  %s628 = sadd.s32 %s626, 1
                $region86: #{vq_forward.1} parent=72 // loop_footer_branch
                  %625 = sbr.rel target = $region82
                $region87: #{vq_forward.1} parent=72 // loop_exit
                  _
                %s645 = sshllo.u32 0, %s461
                loop: start=0, step=1, limit=1
                $region88: #{vq_forward.1} parent=72 // loop_pre_header
                  _
                $region89: #{vq_forward.1} parent=72 // loop_header
                  %s647 = sphi 0, %s651
                  %p648 = scmp.ge.s32.totalorder %s647, 1
                  %s652 = sphi %s463, %s463
                  %s653 = sphi %s465, %s465
                $region90: #{vq_forward.1} parent=72 // loop_header_branch
                  %650 = sbr.rel (%p648) target = $region94
                $region91: #{vq_forward.1} parent=72 // loop_body
                  %v654 = vld [vmem:[%s652] sm:%s645]
                  %655 = vst [vmem:[%s653] sm:%s645] %v654
                  %v656 = vld [vmem:[%s652 + $0x38] sm:%s645]
                  %657 = vst [vmem:[%s653 + $0x20] sm:%s645] %v656
                $region92: #{vq_forward.1} parent=72 // loop_footer
                  %s651 = sadd.s32 1, %s647
                $region93: #{vq_forward.1} parent=72 // loop_footer_branch
                  %646 = sbr.rel target = $region89
                $region94: #{vq_forward.1} parent=72 // loop_exit
                  _
              $region73: #{vq_forward.1} parent=39 // pred_fallthru
                _
            $region40: #{vq_forward.1} parent=35 // pred_fallthru
              _
            // Predicated region
            $region41: #{vq_forward.1} parent=35 // pred_check
              %p258 = pneg %p254
            $region42: #{vq_forward.1} parent=35 // pred_check_branch
              %260 = sbr.rel (%p258) target = $region44
            $region43: #{vq_forward.1} parent=35 // pred_region
              %s261 = sshllo.u32 0, %s250
              loop: start=0, step=1, limit=1
              $region45: #{vq_forward.1} parent=43 // loop_pre_header
                _
              $region46: #{vq_forward.1} parent=43 // loop_header
                %s263 = sphi 0, %s267
                %p264 = scmp.ge.s32.totalorder %s263, 1
                %s268 = sphi %s249, %s249
                %s269 = sphi %s241, %s241
              $region47: #{vq_forward.1} parent=43 // loop_header_branch
                %266 = sbr.rel (%p264) target = $region51
              $region48: #{vq_forward.1} parent=43 // loop_body
                %v270 = vld [vmem:[%s268] sm:%s261]
                %271 = vst [vmem:[%s269] sm:%s261] %v270
                %v272 = vld [vmem:[%s268 + $0x38] sm:%s261]
                %273 = vst [vmem:[%s269 + $0x20] sm:%s261] %v272
              $region49: #{vq_forward.1} parent=43 // loop_footer
                %s267 = sadd.s32 1, %s263
              $region50: #{vq_forward.1} parent=43 // loop_footer_branch
                %262 = sbr.rel target = $region46
              $region51: #{vq_forward.1} parent=43 // loop_exit
                _
            $region44: #{vq_forward.1} parent=35 // pred_fallthru
              _
          $region36: #{vq_forward.1} parent=31 // pred_fallthru
            _
          %658 = vnop
        $region32: #{vq_forward.1} parent=27 // pred_fallthru
          _
      $region28: #{vq_forward.1} parent=5 // pred_fallthru
        _
      %p659 = scmp.le.s32.totalorder 1, %s14
      %p660 = scmp.lt.s32.totalorder %s14, 3
      %p661 = pnand %p659, %p660
      %p662 = pneg %p661
      // Predicated region
      $region95: #{vq_forward.1} parent=5 // pred_check
        _
      $region96: #{vq_forward.1} parent=5 // pred_check_branch
        %664 = sbr.rel (%p661) target = $region98
      $region97: #{vq_forward.1} parent=5 // pred_region
        %s665 = ssub.s32 %s14, 1
        %s666 = sand.u32 %s27, 1
        %s667 = sand.u32 %s27, 1
        %s668 = smul.addr %s667, 64
        %s669 = scalar_lea.vmem [#allocation2], %s668
        // Predicated region
        $region99: #{vq_forward.1} parent=97 // pred_check
          %p670 = pneg %p40
        $region100: #{vq_forward.1} parent=97 // pred_check_branch
          %672 = sbr.rel (%p670) target = $region102
        $region101: #{vq_forward.1} parent=97 // pred_region
          _
        $region102: #{vq_forward.1} parent=97 // pred_fallthru
          _
        %s673 = sand.u32 %s27, 1
        %s674 = sand.u32 %s27, 1
        %s675 = smul.addr %s674, 64
        %s676 = scalar_lea.vmem [#allocation2], %s675
        %p677 = pneg %p40
        %p678 = pneg %p37
        %p679 = pneg %p61
        %p680 = pneg %p58
        %p681 = pneg %p82
        %p682 = pneg %p79
        %p683 = pneg %p103
        %p684 = pneg %p100
        %p685 = pneg %p129
        %p686 = pneg %p126
        %s687 = sand.u32 %s116, 1
        %s688 = sand.u32 %s116, 1
        %s689 = smul.addr %s688, 64
        %s690 = scalar_lea.vmem [#allocation3], %s689
        %p691 = pneg %p155
        %p692 = pneg %p152
        %s693 = sand.u32 %s142, 1
        %s694 = sand.u32 %s142, 1
        %s695 = smul.addr %s694, 4
        %s696 = scalar_lea.vmem [#allocation4], %s695
        %p697 = pneg %p181
        %p698 = pneg %p178
        %p699 = scmp.lt.s32.totalorder %s19, 1
        %s700 = scalar_select %p699, %s19, 1
        %s701 = smul.addr %s700, 2
        %s702 = smul.addr %s701, 8
        %s703 = scalar_lea.vmem %s6, %s702
        %p704 = pneg %p207
        %p705 = pneg %p204
        %p706 = scmp.lt.s32.totalorder %s19, 1
        %s707 = scalar_select %p706, %s19, 1
        %s708 = smul.addr %s707, 16
        %s709 = smul.addr %s708, 8
        %s710 = scalar_lea.vmem %s7, %s709
        %s711 = smul.u32 4, %s19
        %s712 = ssub.s32 7, %s711
        %p713 = scmp.lt.s32.totalorder %s712, 4
        %s714 = scalar_select %p713, %s712, 4
        %s715 = smul.u32 256, %s714
        %s716 = smul.u32 4, %s19
        %s717 = ssub.s32 7, %s716
        %p718 = scmp.lt.s32.totalorder %s717, 4
        %s719 = scalar_select %p718, %s717, 4
        %s720 = smul.u32 256, %s719
        %s721 = smul.u32 4, %s19
        %s722 = ssub.s32 7, %s721
        %p723 = scmp.lt.s32.totalorder %s722, 4
        %s724 = scalar_select %p723, %s722, 4
        %s725 = smul.u32 16, %s724
        %p726 = scmp.lt.s32.totalorder %s19, 1
        %s727 = scalar_select %p726, %s19, 1
        %s728 = smul.addr %s727, 2
        %s729 = smul.addr %s728, 8
        %s730 = scalar_lea.vmem %s6, %s729
        %p731 = scmp.lt.s32.totalorder %s19, 1
        %s732 = scalar_select %p731, %s19, 1
        %s733 = smul.addr %s732, 16
        %s734 = smul.addr %s733, 8
        %s735 = scalar_lea.vmem %s7, %s734
        %v736 = vld [vmem:[%s669] sm:$0xff]
        %v737 = vld [vmem:[%s669 + $0x8] sm:$0xff]
        %v738 = vld [vmem:[%s669 + $0x10] sm:$0xff]
        %v739 = vld [vmem:[%s669 + $0x18] sm:$0xff]
        %v740 = vld [vmem:[%s669 + $0x20] sm:$0xff]
        %v741 = vld [vmem:[%s669 + $0x28] sm:$0xff]
        %v742 = vld [vmem:[%s669 + $0x30] sm:$0xff]
        %v743 = vld [vmem:[%s669 + $0x38] sm:$0xff]
        %v744 = vld [vmem:[%s1] sm:$0xff]
        %v745 = vld [vmem:[%s1 + $0x8] sm:$0xff]
        %v746 = vld [vmem:[%s1 + $0x10] sm:$0xff]
        %v747 = vld [vmem:[%s1 + $0x18] sm:$0xff]
        %v748 = vld [vmem:[%s1 + $0x20] sm:$0xff]
        %v749 = vld [vmem:[%s1 + $0x28] sm:$0xff]
        %v750 = vld [vmem:[%s1 + $0x30] sm:$0xff]
        %v751 = vld [vmem:[%s1 + $0x38] sm:$0xff]
        %v752 = vld [vmem:[%s1 + $0x40] sm:$0xff]
        %v753 = vld [vmem:[%s1 + $0x48] sm:$0xff]
        %v754 = vld [vmem:[%s1 + $0x50] sm:$0xff]
        %v755 = vld [vmem:[%s1 + $0x58] sm:$0xff]
        %v756 = vld [vmem:[%s1 + $0x60] sm:$0xff]
        %v757 = vld [vmem:[%s1 + $0x68] sm:$0xff]
        %v758 = vld [vmem:[%s1 + $0x70] sm:$0xff]
        %v759 = vld [vmem:[%s1 + $0x78] sm:$0xff]
        %v760 = vld [vmem:[%s2] sm:$0xff]
        %v761 = vld [vmem:[%s2 + $0x8] sm:$0xff]
        %v762 = vld [vmem:[%s3] sm:$0xff]
        %v763 = vld [vmem:[%s3 + $0x8] sm:$0xff]
        %v764 = vld [vmem:[%s3 + $0x10] sm:$0xff]
        %v765 = vld [vmem:[%s3 + $0x18] sm:$0xff]
        %v766 = vld [vmem:[%s3 + $0x20] sm:$0xff]
        %v767 = vld [vmem:[%s3 + $0x28] sm:$0xff]
        %v768 = vld [vmem:[%s3 + $0x30] sm:$0xff]
        %v769 = vld [vmem:[%s3 + $0x38] sm:$0xff]
        %v770 = vld [vmem:[%s3 + $0x40] sm:$0xff]
        %v771 = vld [vmem:[%s3 + $0x48] sm:$0xff]
        %v772 = vld [vmem:[%s3 + $0x50] sm:$0xff]
        %v773 = vld [vmem:[%s3 + $0x58] sm:$0xff]
        %v774 = vld [vmem:[%s3 + $0x60] sm:$0xff]
        %v775 = vld [vmem:[%s3 + $0x68] sm:$0xff]
        %v776 = vld [vmem:[%s3 + $0x70] sm:$0xff]
        %v777 = vld [vmem:[%s3 + $0x78] sm:$0xff]
        %v778 = vmul.f32 %v736, %v736
        %v779 = vmul.f32 %v737, %v737
        %v780 = vmul.f32 %v738, %v738
        %v781 = vmul.f32 %v739, %v739
        %v782 = vmul.f32 %v740, %v740
        %v783 = vmul.f32 %v741, %v741
        %v784 = vmul.f32 %v742, %v742
        %v785 = vmul.f32 %v743, %v743
        %v786 = vadd.f32 %v778, %v782
        %v787 = vrot.slane %v786, 4
        %v788 = vadd.f32 %v786, %v787
        %v789 = vrot.slane %v788, 2
        %v790 = vadd.f32 %v788, %v789
        %v791 = vrot.slane %v790, 1
        %v792 = vadd.f32 %v790, %v791
        %v793 = vadd.f32 %v779, %v783
        %v794 = vrot.slane %v793, 4
        %v795 = vadd.f32 %v793, %v794
        %v796 = vrot.slane %v795, 2
        %v797 = vadd.f32 %v795, %v796
        %v798 = vrot.slane %v797, 1
        %v799 = vadd.f32 %v797, %v798
        %v800 = vadd.f32 %v780, %v784
        %v801 = vrot.slane %v800, 4
        %v802 = vadd.f32 %v800, %v801
        %v803 = vrot.slane %v802, 2
        %v804 = vadd.f32 %v802, %v803
        %v805 = vrot.slane %v804, 1
        %v806 = vadd.f32 %v804, %v805
        %v807 = vadd.f32 %v781, %v785
        %v808 = vrot.slane %v807, 4
        %v809 = vadd.f32 %v807, %v808
        %v810 = vrot.slane %v809, 2
        %v811 = vadd.f32 %v809, %v810
        %v812 = vrot.slane %v811, 1
        %v813 = vadd.f32 %v811, %v812
        %vm814 = vcmask 130048
        %v816 = vsel %vm814, %v744, 0
        %v819 = vsel %vm814, %v745, 0
        %v822 = vsel %vm814, %v746, 0
        %v825 = vsel %vm814, %v747, 0
        %v828 = vsel %vm814, %v748, 0
        %v831 = vsel %vm814, %v749, 0
        %v834 = vsel %vm814, %v750, 0
        %v837 = vsel %vm814, %v751, 0
        %v840 = vsel %vm814, %v752, 0
        %v843 = vsel %vm814, %v753, 0
        %v846 = vsel %vm814, %v754, 0
        %v849 = vsel %vm814, %v755, 0
        %v852 = vsel %vm814, %v756, 0
        %v855 = vsel %vm814, %v757, 0
        %v858 = vsel %vm814, %v758, 0
        %v861 = vsel %vm814, %v759, 0
        %863 = vmatprep.subr.mxu0 %v737
        %864 = vmatpush1.msra.mxu0 %v736
        %865 = vmatprep.subr.mxu0 %v741
        %866 = vmatpush1.msra.mxu0 %v740
        %867 = vmatprep.subr.mxu0 0.0
        %868 = vmatpush1.msra.mxu0 0.0
        %869 = vmatprep.subr.mxu0 0.0
        %870 = vmatpush1.msra.mxu0 0.0
        %871 = vmatprep.subr.mxu0 0.0
        %872 = vmatpush1.msra.mxu0 0.0
        %873 = vmatprep.subr.mxu0 0.0
        %874 = vmatpush1.msra.mxu0 0.0
        %875 = vmatprep.subr.mxu0 0.0
        %876 = vmatpush1.msra.mxu0 0.0
        %877 = vmatprep.subr.mxu0 0.0
        %878 = vmatpush1.msra.mxu0 0.0
        %879 = vmatprep.subr.mxu0 0.0
        %880 = vmatpush1.msra.mxu0 0.0
        %881 = vmatprep.subr.mxu0 0.0
        %882 = vmatpush1.msra.mxu0 0.0
        %883 = vmatprep.subr.mxu0 0.0
        %884 = vmatpush1.msra.mxu0 0.0
        %885 = vmatprep.subr.mxu0 0.0
        %886 = vmatpush1.msra.mxu0 0.0
        %887 = vmatprep.subr.mxu0 0.0
        %888 = vmatpush1.msra.mxu0 0.0
        %889 = vmatprep.subr.mxu0 0.0
        %890 = vmatpush1.msra.mxu0 0.0
        %891 = vmatprep.subr.mxu0 0.0
        %892 = vmatpush1.msra.mxu0 0.0
        %893 = vmatprep.subr.mxu0 0.0
        %894 = vmatpush1.msra.mxu0 0.0
        %895 = vmatprep.subr.mxu0 0.0
        %896 = vmatpush1.msra.mxu0 0.0
        %897 = vmatprep.subr.mxu0 0.0
        %898 = vmatpush1.msra.mxu0 0.0
        %899 = vmatprep.subr.mxu0 0.0
        %900 = vmatpush1.msra.mxu0 0.0
        %901 = vmatprep.subr.mxu0 0.0
        %902 = vmatpush1.msra.mxu0 0.0
        %903 = vmatprep.subr.mxu0 0.0
        %904 = vmatpush1.msra.mxu0 0.0
        %905 = vmatprep.subr.mxu0 0.0
        %906 = vmatpush1.msra.mxu0 0.0
        %907 = vmatprep.subr.mxu0 0.0
        %908 = vmatpush1.msra.mxu0 0.0
        %909 = vmatprep.subr.mxu0 0.0
        %910 = vmatpush1.msra.mxu0 0.0
        %911 = vmatprep.subr.mxu0 0.0
        %912 = vmatpush1.msra.mxu0 0.0
        %913 = vmatprep.subr.mxu0 0.0
        %914 = vmatpush1.msra.mxu0 0.0
        %915 = vmatprep.subr.mxu0 0.0
        %916 = vmatpush1.msra.mxu0 0.0
        %917 = vmatprep.subr.mxu0 0.0
        %918 = vmatpush1.msra.mxu0 0.0
        %919 = vmatprep.subr.mxu0 0.0
        %920 = vmatpush1.msra.mxu0 0.0
        %921 = vmatprep.subr.mxu0 0.0
        %922 = vmatpush1.msra.mxu0 0.0
        %923 = vmatprep.subr.mxu0 0.0
        %924 = vmatpush1.msra.mxu0 0.0
        %925 = vmatprep.subr.mxu0 0.0
        %926 = vmatpush1.msra.mxu0 0.0
        %927 = vmatprep.mubr.f32.mxu0 0.0
        %928 = vmatmul.mubr.f32.gmra.mrb[0].mxu0 %v816
        %v929 = vpop.f32.mrb[0].mxu0
        %v930 = vadd.f32 0.0, %v929
        %v931 = vpop.f32.mrb[0].mxu0
        %v932 = vadd.f32 0.0, %v931
        %933 = vmatprep.mubr.f32.mxu0 0.0
        %934 = vmatmul.mubr.f32.gmra.mrb[0].mxu0 %v819
        %v935 = vpop.f32.mrb[0].mxu0
        %v936 = vadd.f32 0.0, %v935
        %v937 = vpop.f32.mrb[0].mxu0
        %v938 = vadd.f32 0.0, %v937
        %939 = vmatprep.mubr.f32.mxu0 0.0
        %940 = vmatmul.mubr.f32.gmra.mrb[0].mxu0 %v822
        %v941 = vpop.f32.mrb[0].mxu0
        %v942 = vadd.f32 0.0, %v941
        %v943 = vpop.f32.mrb[0].mxu0
        %v944 = vadd.f32 0.0, %v943
        %945 = vmatprep.mubr.f32.mxu0 0.0
        %946 = vmatmul.mubr.f32.gmra.mrb[0].mxu0 %v825
        %v947 = vpop.f32.mrb[0].mxu0
        %v948 = vadd.f32 0.0, %v947
        %v949 = vpop.f32.mrb[0].mxu0
        %v950 = vadd.f32 0.0, %v949
        %951 = vmatprep.mubr.f32.mxu0 0.0
        %952 = vmatmul.mubr.f32.gmra.mrb[0].mxu0 %v828
        %v953 = vpop.f32.mrb[0].mxu0
        %v954 = vadd.f32 0.0, %v953
        %v955 = vpop.f32.mrb[0].mxu0
        %v956 = vadd.f32 0.0, %v955
        %957 = vmatprep.mubr.f32.mxu0 0.0
        %958 = vmatmul.mubr.f32.gmra.mrb[0].mxu0 %v831
        %v959 = vpop.f32.mrb[0].mxu0
        %v960 = vadd.f32 0.0, %v959
        %v961 = vpop.f32.mrb[0].mxu0
        %v962 = vadd.f32 0.0, %v961
        %963 = vmatprep.mubr.f32.mxu0 0.0
        %964 = vmatmul.mubr.f32.gmra.mrb[0].mxu0 %v834
        %v965 = vpop.f32.mrb[0].mxu0
        %v966 = vadd.f32 0.0, %v965
        %v967 = vpop.f32.mrb[0].mxu0
        %v968 = vadd.f32 0.0, %v967
        %969 = vmatprep.mubr.f32.mxu0 0.0
        %970 = vmatmul.mubr.f32.gmra.mrb[0].mxu0 %v837
        %v971 = vpop.f32.mrb[0].mxu0
        %v972 = vadd.f32 0.0, %v971
        %v973 = vpop.f32.mrb[0].mxu0
        %v974 = vadd.f32 0.0, %v973
        %975 = vmatprep.mubr.f32.mxu0 0.0
        %976 = vmatmul.mubr.f32.gmra.mrb[0].mxu0 %v840
        %v977 = vpop.f32.mrb[0].mxu0
        %v978 = vadd.f32 0.0, %v977
        %v979 = vpop.f32.mrb[0].mxu0
        %v980 = vadd.f32 0.0, %v979
        %981 = vmatprep.mubr.f32.mxu0 0.0
        %982 = vmatmul.mubr.f32.gmra.mrb[0].mxu0 %v843
        %v983 = vpop.f32.mrb[0].mxu0
        %v984 = vadd.f32 0.0, %v983
        %v985 = vpop.f32.mrb[0].mxu0
        %v986 = vadd.f32 0.0, %v985
        %987 = vmatprep.mubr.f32.mxu0 0.0
        %988 = vmatmul.mubr.f32.gmra.mrb[0].mxu0 %v846
        %v989 = vpop.f32.mrb[0].mxu0
        %v990 = vadd.f32 0.0, %v989
        %v991 = vpop.f32.mrb[0].mxu0
        %v992 = vadd.f32 0.0, %v991
        %993 = vmatprep.mubr.f32.mxu0 0.0
        %994 = vmatmul.mubr.f32.gmra.mrb[0].mxu0 %v849
        %v995 = vpop.f32.mrb[0].mxu0
        %v996 = vadd.f32 0.0, %v995
        %v997 = vpop.f32.mrb[0].mxu0
        %v998 = vadd.f32 0.0, %v997
        %999 = vmatprep.mubr.f32.mxu0 0.0
        %1000 = vmatmul.mubr.f32.gmra.mrb[0].mxu0 %v852
        %v1001 = vpop.f32.mrb[0].mxu0
        %v1002 = vadd.f32 0.0, %v1001
        %v1003 = vpop.f32.mrb[0].mxu0
        %v1004 = vadd.f32 0.0, %v1003
        %1005 = vmatprep.mubr.f32.mxu0 0.0
        %1006 = vmatmul.mubr.f32.gmra.mrb[0].mxu0 %v855
        %v1007 = vpop.f32.mrb[0].mxu0
        %v1008 = vadd.f32 0.0, %v1007
        %v1009 = vpop.f32.mrb[0].mxu0
        %v1010 = vadd.f32 0.0, %v1009
        %1011 = vmatprep.mubr.f32.mxu0 0.0
        %1012 = vmatmul.mubr.f32.gmra.mrb[0].mxu0 %v858
        %v1013 = vpop.f32.mrb[0].mxu0
        %v1014 = vadd.f32 0.0, %v1013
        %v1015 = vpop.f32.mrb[0].mxu0
        %v1016 = vadd.f32 0.0, %v1015
        %1017 = vmatprep.mubr.f32.mxu0 0.0
        %1018 = vmatmul.mubr.f32.gmra.mrb[0].mxu0 %v861
        %v1019 = vpop.f32.mrb[0].mxu0
        %v1020 = vadd.f32 0.0, %v1019
        %v1021 = vpop.f32.mrb[0].mxu0
        %v1022 = vadd.f32 0.0, %v1021
        %1023 = vdwg.mxu0
        %1024 = vmatprep.subr.mxu0 %v739
        %1025 = vmatpush1.msra.mxu0 %v738
        %1026 = vmatprep.subr.mxu0 %v743
        %1027 = vmatpush1.msra.mxu0 %v742
        %1028 = vmatprep.subr.mxu0 0.0
        %1029 = vmatpush1.msra.mxu0 0.0
        %1030 = vmatprep.subr.mxu0 0.0
        %1031 = vmatpush1.msra.mxu0 0.0
        %1032 = vmatprep.subr.mxu0 0.0
        %1033 = vmatpush1.msra.mxu0 0.0
        %1034 = vmatprep.subr.mxu0 0.0
        %1035 = vmatpush1.msra.mxu0 0.0
        %1036 = vmatprep.subr.mxu0 0.0
        %1037 = vmatpush1.msra.mxu0 0.0
        %1038 = vmatprep.subr.mxu0 0.0
        %1039 = vmatpush1.msra.mxu0 0.0
        %1040 = vmatprep.subr.mxu0 0.0
        %1041 = vmatpush1.msra.mxu0 0.0
        %1042 = vmatprep.subr.mxu0 0.0
        %1043 = vmatpush1.msra.mxu0 0.0
        %1044 = vmatprep.subr.mxu0 0.0
        %1045 = vmatpush1.msra.mxu0 0.0
        %1046 = vmatprep.subr.mxu0 0.0
        %1047 = vmatpush1.msra.mxu0 0.0
        %1048 = vmatprep.subr.mxu0 0.0
        %1049 = vmatpush1.msra.mxu0 0.0
        %1050 = vmatprep.subr.mxu0 0.0
        %1051 = vmatpush1.msra.mxu0 0.0
        %1052 = vmatprep.subr.mxu0 0.0
        %1053 = vmatpush1.msra.mxu0 0.0
        %1054 = vmatprep.subr.mxu0 0.0
        %1055 = vmatpush1.msra.mxu0 0.0
        %1056 = vmatprep.subr.mxu0 0.0
        %1057 = vmatpush1.msra.mxu0 0.0
        %1058 = vmatprep.subr.mxu0 0.0
        %1059 = vmatpush1.msra.mxu0 0.0
        %1060 = vmatprep.subr.mxu0 0.0
        %1061 = vmatpush1.msra.mxu0 0.0
        %1062 = vmatprep.subr.mxu0 0.0
        %1063 = vmatpush1.msra.mxu0 0.0
        %1064 = vmatprep.subr.mxu0 0.0
        %1065 = vmatpush1.msra.mxu0 0.0
        %1066 = vmatprep.subr.mxu0 0.0
        %1067 = vmatpush1.msra.mxu0 0.0
        %1068 = vmatprep.subr.mxu0 0.0
        %1069 = vmatpush1.msra.mxu0 0.0
        %1070 = vmatprep.subr.mxu0 0.0
        %1071 = vmatpush1.msra.mxu0 0.0
        %1072 = vmatprep.subr.mxu0 0.0
        %1073 = vmatpush1.msra.mxu0 0.0
        %1074 = vmatprep.subr.mxu0 0.0
        %1075 = vmatpush1.msra.mxu0 0.0
        %1076 = vmatprep.subr.mxu0 0.0
        %1077 = vmatpush1.msra.mxu0 0.0
        %1078 = vmatprep.subr.mxu0 0.0
        %1079 = vmatpush1.msra.mxu0 0.0
        %1080 = vmatprep.subr.mxu0 0.0
        %1081 = vmatpush1.msra.mxu0 0.0
        %1082 = vmatprep.subr.mxu0 0.0
        %1083 = vmatpush1.msra.mxu0 0.0
        %1084 = vmatprep.subr.mxu0 0.0
        %1085 = vmatpush1.msra.mxu0 0.0
        %1086 = vmatprep.subr.mxu0 0.0
        %1087 = vmatpush1.msra.mxu0 0.0
        %1088 = vmatprep.mubr.f32.mxu0 0.0
        %1089 = vmatmul.mubr.f32.gmra.mrb[0].mxu0 %v816
        %v1090 = vpop.f32.mrb[0].mxu0
        %v1091 = vadd.f32 0.0, %v1090
        %v1092 = vpop.f32.mrb[0].mxu0
        %v1093 = vadd.f32 0.0, %v1092
        %1094 = vmatprep.mubr.f32.mxu0 0.0
        %1095 = vmatmul.mubr.f32.gmra.mrb[0].mxu0 %v819
        %v1096 = vpop.f32.mrb[0].mxu0
        %v1097 = vadd.f32 0.0, %v1096
        %v1098 = vpop.f32.mrb[0].mxu0
        %v1099 = vadd.f32 0.0, %v1098
        %1100 = vmatprep.mubr.f32.mxu0 0.0
        %1101 = vmatmul.mubr.f32.gmra.mrb[0].mxu0 %v822
        %v1102 = vpop.f32.mrb[0].mxu0
        %v1103 = vadd.f32 0.0, %v1102
        %v1104 = vpop.f32.mrb[0].mxu0
        %v1105 = vadd.f32 0.0, %v1104
        %1106 = vmatprep.mubr.f32.mxu0 0.0
        %1107 = vmatmul.mubr.f32.gmra.mrb[0].mxu0 %v825
        %v1108 = vpop.f32.mrb[0].mxu0
        %v1109 = vadd.f32 0.0, %v1108
        %v1110 = vpop.f32.mrb[0].mxu0
        %v1111 = vadd.f32 0.0, %v1110
        %1112 = vmatprep.mubr.f32.mxu0 0.0
        %1113 = vmatmul.mubr.f32.gmra.mrb[0].mxu0 %v828
        %v1114 = vpop.f32.mrb[0].mxu0
        %v1115 = vadd.f32 0.0, %v1114
        %v1116 = vpop.f32.mrb[0].mxu0
        %v1117 = vadd.f32 0.0, %v1116
        %1118 = vmatprep.mubr.f32.mxu0 0.0
        %1119 = vmatmul.mubr.f32.gmra.mrb[0].mxu0 %v831
        %v1120 = vpop.f32.mrb[0].mxu0
        %v1121 = vadd.f32 0.0, %v1120
        %v1122 = vpop.f32.mrb[0].mxu0
        %v1123 = vadd.f32 0.0, %v1122
        %1124 = vmatprep.mubr.f32.mxu0 0.0
        %1125 = vmatmul.mubr.f32.gmra.mrb[0].mxu0 %v834
        %v1126 = vpop.f32.mrb[0].mxu0
        %v1127 = vadd.f32 0.0, %v1126
        %v1128 = vpop.f32.mrb[0].mxu0
        %v1129 = vadd.f32 0.0, %v1128
        %1130 = vmatprep.mubr.f32.mxu0 0.0
        %1131 = vmatmul.mubr.f32.gmra.mrb[0].mxu0 %v837
        %v1132 = vpop.f32.mrb[0].mxu0
        %v1133 = vadd.f32 0.0, %v1132
        %v1134 = vpop.f32.mrb[0].mxu0
        %v1135 = vadd.f32 0.0, %v1134
        %1136 = vmatprep.mubr.f32.mxu0 0.0
        %1137 = vmatmul.mubr.f32.gmra.mrb[0].mxu0 %v840
        %v1138 = vpop.f32.mrb[0].mxu0
        %v1139 = vadd.f32 0.0, %v1138
        %v1140 = vpop.f32.mrb[0].mxu0
        %v1141 = vadd.f32 0.0, %v1140
        %1142 = vmatprep.mubr.f32.mxu0 0.0
        %1143 = vmatmul.mubr.f32.gmra.mrb[0].mxu0 %v843
        %v1144 = vpop.f32.mrb[0].mxu0
        %v1145 = vadd.f32 0.0, %v1144
        %v1146 = vpop.f32.mrb[0].mxu0
        %v1147 = vadd.f32 0.0, %v1146
        %1148 = vmatprep.mubr.f32.mxu0 0.0
        %1149 = vmatmul.mubr.f32.gmra.mrb[0].mxu0 %v846
        %v1150 = vpop.f32.mrb[0].mxu0
        %v1151 = vadd.f32 0.0, %v1150
        %v1152 = vpop.f32.mrb[0].mxu0
        %v1153 = vadd.f32 0.0, %v1152
        %1154 = vmatprep.mubr.f32.mxu0 0.0
        %1155 = vmatmul.mubr.f32.gmra.mrb[0].mxu0 %v849
        %v1156 = vpop.f32.mrb[0].mxu0
        %v1157 = vadd.f32 0.0, %v1156
        %v1158 = vpop.f32.mrb[0].mxu0
        %v1159 = vadd.f32 0.0, %v1158
        %1160 = vmatprep.mubr.f32.mxu0 0.0
        %1161 = vmatmul.mubr.f32.gmra.mrb[0].mxu0 %v852
        %v1162 = vpop.f32.mrb[0].mxu0
        %v1163 = vadd.f32 0.0, %v1162
        %v1164 = vpop.f32.mrb[0].mxu0
        %v1165 = vadd.f32 0.0, %v1164
        %1166 = vmatprep.mubr.f32.mxu0 0.0
        %1167 = vmatmul.mubr.f32.gmra.mrb[0].mxu0 %v855
        %v1168 = vpop.f32.mrb[0].mxu0
        %v1169 = vadd.f32 0.0, %v1168
        %v1170 = vpop.f32.mrb[0].mxu0
        %v1171 = vadd.f32 0.0, %v1170
        %1172 = vmatprep.mubr.f32.mxu0 0.0
        %1173 = vmatmul.mubr.f32.gmra.mrb[0].mxu0 %v858
        %v1174 = vpop.f32.mrb[0].mxu0
        %v1175 = vadd.f32 0.0, %v1174
        %v1176 = vpop.f32.mrb[0].mxu0
        %v1177 = vadd.f32 0.0, %v1176
        %1178 = vmatprep.mubr.f32.mxu0 0.0
        %1179 = vmatmul.mubr.f32.gmra.mrb[0].mxu0 %v861
        %v1180 = vpop.f32.mrb[0].mxu0
        %v1181 = vadd.f32 0.0, %v1180
        %v1182 = vpop.f32.mrb[0].mxu0
        %v1183 = vadd.f32 0.0, %v1182
        %1184 = vdwg.mxu0
        %1186 = vset.pattern.permute.xlu0 0
        %1187 = vperm.xlu0 %1186, %v762
        %v1188 = vpop.permute.xlu0 %1187
        %1191 = vset.pattern.permute.xlu0 0
        %1192 = vperm.xlu0 %1191, %v763
        %v1193 = vpop.permute.xlu0 %1192
        %1196 = vset.pattern.permute.xlu0 0
        %1197 = vperm.xlu0 %1196, %v764
        %v1198 = vpop.permute.xlu0 %1197
        %1201 = vset.pattern.permute.xlu0 0
        %1202 = vperm.xlu0 %1201, %v765
        %v1203 = vpop.permute.xlu0 %1202
        %1206 = vset.pattern.permute.xlu0 0
        %1207 = vperm.xlu0 %1206, %v766
        %v1208 = vpop.permute.xlu0 %1207
        %1211 = vset.pattern.permute.xlu0 0
        %1212 = vperm.xlu0 %1211, %v767
        %v1213 = vpop.permute.xlu0 %1212
        %1216 = vset.pattern.permute.xlu0 0
        %1217 = vperm.xlu0 %1216, %v768
        %v1218 = vpop.permute.xlu0 %1217
        %1221 = vset.pattern.permute.xlu0 0
        %1222 = vperm.xlu0 %1221, %v769
        %v1223 = vpop.permute.xlu0 %1222
        %1226 = vset.pattern.permute.xlu0 0
        %1227 = vperm.xlu0 %1226, %v770
        %v1228 = vpop.permute.xlu0 %1227
        %1231 = vset.pattern.permute.xlu0 0
        %1232 = vperm.xlu0 %1231, %v771
        %v1233 = vpop.permute.xlu0 %1232
        %1236 = vset.pattern.permute.xlu0 0
        %1237 = vperm.xlu0 %1236, %v772
        %v1238 = vpop.permute.xlu0 %1237
        %1241 = vset.pattern.permute.xlu0 0
        %1242 = vperm.xlu0 %1241, %v773
        %v1243 = vpop.permute.xlu0 %1242
        %1246 = vset.pattern.permute.xlu0 0
        %1247 = vperm.xlu0 %1246, %v774
        %v1248 = vpop.permute.xlu0 %1247
        %1251 = vset.pattern.permute.xlu0 0
        %1252 = vperm.xlu0 %1251, %v775
        %v1253 = vpop.permute.xlu0 %1252
        %1256 = vset.pattern.permute.xlu0 0
        %1257 = vperm.xlu0 %1256, %v776
        %v1258 = vpop.permute.xlu0 %1257
        %1261 = vset.pattern.permute.xlu0 0
        %1262 = vperm.xlu0 %1261, %v777
        %v1263 = vpop.permute.xlu0 %1262
        %v1265 = vadd.f32 %v792, %v1188
        %v1266 = vadd.f32 %v799, %v1188
        %v1267 = vadd.f32 %v806, %v1188
        %v1268 = vadd.f32 %v813, %v1188
        %v1269 = vadd.f32 %v792, %v1193
        %v1270 = vadd.f32 %v799, %v1193
        %v1271 = vadd.f32 %v806, %v1193
        %v1272 = vadd.f32 %v813, %v1193
        %v1273 = vadd.f32 %v792, %v1198
        %v1274 = vadd.f32 %v799, %v1198
        %v1275 = vadd.f32 %v806, %v1198
        %v1276 = vadd.f32 %v813, %v1198
        %v1277 = vadd.f32 %v792, %v1203
        %v1278 = vadd.f32 %v799, %v1203
        %v1279 = vadd.f32 %v806, %v1203
        %v1280 = vadd.f32 %v813, %v1203
        %v1281 = vadd.f32 %v792, %v1208
        %v1282 = vadd.f32 %v799, %v1208
        %v1283 = vadd.f32 %v806, %v1208
        %v1284 = vadd.f32 %v813, %v1208
        %v1285 = vadd.f32 %v792, %v1213
        %v1286 = vadd.f32 %v799, %v1213
        %v1287 = vadd.f32 %v806, %v1213
        %v1288 = vadd.f32 %v813, %v1213
        %v1289 = vadd.f32 %v792, %v1218
        %v1290 = vadd.f32 %v799, %v1218
        %v1291 = vadd.f32 %v806, %v1218
        %v1292 = vadd.f32 %v813, %v1218
        %v1293 = vadd.f32 %v792, %v1223
        %v1294 = vadd.f32 %v799, %v1223
        %v1295 = vadd.f32 %v806, %v1223
        %v1296 = vadd.f32 %v813, %v1223
        %v1297 = vadd.f32 %v792, %v1228
        %v1298 = vadd.f32 %v799, %v1228
        %v1299 = vadd.f32 %v806, %v1228
        %v1300 = vadd.f32 %v813, %v1228
        %v1301 = vadd.f32 %v792, %v1233
        %v1302 = vadd.f32 %v799, %v1233
        %v1303 = vadd.f32 %v806, %v1233
        %v1304 = vadd.f32 %v813, %v1233
        %v1305 = vadd.f32 %v792, %v1238
        %v1306 = vadd.f32 %v799, %v1238
        %v1307 = vadd.f32 %v806, %v1238
        %v1308 = vadd.f32 %v813, %v1238
        %v1309 = vadd.f32 %v792, %v1243
        %v1310 = vadd.f32 %v799, %v1243
        %v1311 = vadd.f32 %v806, %v1243
        %v1312 = vadd.f32 %v813, %v1243
        %v1313 = vadd.f32 %v792, %v1248
        %v1314 = vadd.f32 %v799, %v1248
        %v1315 = vadd.f32 %v806, %v1248
        %v1316 = vadd.f32 %v813, %v1248
        %v1317 = vadd.f32 %v792, %v1253
        %v1318 = vadd.f32 %v799, %v1253
        %v1319 = vadd.f32 %v806, %v1253
        %v1320 = vadd.f32 %v813, %v1253
        %v1321 = vadd.f32 %v792, %v1258
        %v1322 = vadd.f32 %v799, %v1258
        %v1323 = vadd.f32 %v806, %v1258
        %v1324 = vadd.f32 %v813, %v1258
        %v1325 = vadd.f32 %v792, %v1263
        %v1326 = vadd.f32 %v799, %v1263
        %v1327 = vadd.f32 %v806, %v1263
        %v1328 = vadd.f32 %v813, %v1263
        %v1329 = vmul.f32 %v930, 2.0
        %v1330 = vmul.f32 %v932, 2.0
        %v1331 = vmul.f32 %v1091, 2.0
        %v1332 = vmul.f32 %v1093, 2.0
        %v1333 = vmul.f32 %v936, 2.0
        %v1334 = vmul.f32 %v938, 2.0
        %v1335 = vmul.f32 %v1097, 2.0
        %v1336 = vmul.f32 %v1099, 2.0
        %v1337 = vmul.f32 %v942, 2.0
        %v1338 = vmul.f32 %v944, 2.0
        %v1339 = vmul.f32 %v1103, 2.0
        %v1340 = vmul.f32 %v1105, 2.0
        %v1341 = vmul.f32 %v948, 2.0
        %v1342 = vmul.f32 %v950, 2.0
        %v1343 = vmul.f32 %v1109, 2.0
        %v1344 = vmul.f32 %v1111, 2.0
        %v1345 = vmul.f32 %v954, 2.0
        %v1346 = vmul.f32 %v956, 2.0
        %v1347 = vmul.f32 %v1115, 2.0
        %v1348 = vmul.f32 %v1117, 2.0
        %v1349 = vmul.f32 %v960, 2.0
        %v1350 = vmul.f32 %v962, 2.0
        %v1351 = vmul.f32 %v1121, 2.0
        %v1352 = vmul.f32 %v1123, 2.0
        %v1353 = vmul.f32 %v966, 2.0
        %v1354 = vmul.f32 %v968, 2.0
        %v1355 = vmul.f32 %v1127, 2.0
        %v1356 = vmul.f32 %v1129, 2.0
        %v1357 = vmul.f32 %v972, 2.0
        %v1358 = vmul.f32 %v974, 2.0
        %v1359 = vmul.f32 %v1133, 2.0
        %v1360 = vmul.f32 %v1135, 2.0
        %v1361 = vmul.f32 %v978, 2.0
        %v1362 = vmul.f32 %v980, 2.0
        %v1363 = vmul.f32 %v1139, 2.0
        %v1364 = vmul.f32 %v1141, 2.0
        %v1365 = vmul.f32 %v984, 2.0
        %v1366 = vmul.f32 %v986, 2.0
        %v1367 = vmul.f32 %v1145, 2.0
        %v1368 = vmul.f32 %v1147, 2.0
        %v1369 = vmul.f32 %v990, 2.0
        %v1370 = vmul.f32 %v992, 2.0
        %v1371 = vmul.f32 %v1151, 2.0
        %v1372 = vmul.f32 %v1153, 2.0
        %v1373 = vmul.f32 %v996, 2.0
        %v1374 = vmul.f32 %v998, 2.0
        %v1375 = vmul.f32 %v1157, 2.0
        %v1376 = vmul.f32 %v1159, 2.0
        %v1377 = vmul.f32 %v1002, 2.0
        %v1378 = vmul.f32 %v1004, 2.0
        %v1379 = vmul.f32 %v1163, 2.0
        %v1380 = vmul.f32 %v1165, 2.0
        %v1381 = vmul.f32 %v1008, 2.0
        %v1382 = vmul.f32 %v1010, 2.0
        %v1383 = vmul.f32 %v1169, 2.0
        %v1384 = vmul.f32 %v1171, 2.0
        %v1385 = vmul.f32 %v1014, 2.0
        %v1386 = vmul.f32 %v1016, 2.0
        %v1387 = vmul.f32 %v1175, 2.0
        %v1388 = vmul.f32 %v1177, 2.0
        %v1389 = vmul.f32 %v1020, 2.0
        %v1390 = vmul.f32 %v1022, 2.0
        %v1391 = vmul.f32 %v1181, 2.0
        %v1392 = vmul.f32 %v1183, 2.0
        %v1393 = vsub.f32 %v1265, %v1329
        %v1394 = vsub.f32 %v1266, %v1330
        %v1395 = vsub.f32 %v1267, %v1331
        %v1396 = vsub.f32 %v1268, %v1332
        %v1397 = vsub.f32 %v1269, %v1333
        %v1398 = vsub.f32 %v1270, %v1334
        %v1399 = vsub.f32 %v1271, %v1335
        %v1400 = vsub.f32 %v1272, %v1336
        %v1401 = vsub.f32 %v1273, %v1337
        %v1402 = vsub.f32 %v1274, %v1338
        %v1403 = vsub.f32 %v1275, %v1339
        %v1404 = vsub.f32 %v1276, %v1340
        %v1405 = vsub.f32 %v1277, %v1341
        %v1406 = vsub.f32 %v1278, %v1342
        %v1407 = vsub.f32 %v1279, %v1343
        %v1408 = vsub.f32 %v1280, %v1344
        %v1409 = vsub.f32 %v1281, %v1345
        %v1410 = vsub.f32 %v1282, %v1346
        %v1411 = vsub.f32 %v1283, %v1347
        %v1412 = vsub.f32 %v1284, %v1348
        %v1413 = vsub.f32 %v1285, %v1349
        %v1414 = vsub.f32 %v1286, %v1350
        %v1415 = vsub.f32 %v1287, %v1351
        %v1416 = vsub.f32 %v1288, %v1352
        %v1417 = vsub.f32 %v1289, %v1353
        %v1418 = vsub.f32 %v1290, %v1354
        %v1419 = vsub.f32 %v1291, %v1355
        %v1420 = vsub.f32 %v1292, %v1356
        %v1421 = vsub.f32 %v1293, %v1357
        %v1422 = vsub.f32 %v1294, %v1358
        %v1423 = vsub.f32 %v1295, %v1359
        %v1424 = vsub.f32 %v1296, %v1360
        %v1425 = vsub.f32 %v1297, %v1361
        %v1426 = vsub.f32 %v1298, %v1362
        %v1427 = vsub.f32 %v1299, %v1363
        %v1428 = vsub.f32 %v1300, %v1364
        %v1429 = vsub.f32 %v1301, %v1365
        %v1430 = vsub.f32 %v1302, %v1366
        %v1431 = vsub.f32 %v1303, %v1367
        %v1432 = vsub.f32 %v1304, %v1368
        %v1433 = vsub.f32 %v1305, %v1369
        %v1434 = vsub.f32 %v1306, %v1370
        %v1435 = vsub.f32 %v1307, %v1371
        %v1436 = vsub.f32 %v1308, %v1372
        %v1437 = vsub.f32 %v1309, %v1373
        %v1438 = vsub.f32 %v1310, %v1374
        %v1439 = vsub.f32 %v1311, %v1375
        %v1440 = vsub.f32 %v1312, %v1376
        %v1441 = vsub.f32 %v1313, %v1377
        %v1442 = vsub.f32 %v1314, %v1378
        %v1443 = vsub.f32 %v1315, %v1379
        %v1444 = vsub.f32 %v1316, %v1380
        %v1445 = vsub.f32 %v1317, %v1381
        %v1446 = vsub.f32 %v1318, %v1382
        %v1447 = vsub.f32 %v1319, %v1383
        %v1448 = vsub.f32 %v1320, %v1384
        %v1449 = vsub.f32 %v1321, %v1385
        %v1450 = vsub.f32 %v1322, %v1386
        %v1451 = vsub.f32 %v1323, %v1387
        %v1452 = vsub.f32 %v1324, %v1388
        %v1453 = vsub.f32 %v1325, %v1389
        %v1454 = vsub.f32 %v1326, %v1390
        %v1455 = vsub.f32 %v1327, %v1391
        %v1456 = vsub.f32 %v1328, %v1392
        %v1457 = vmin.f32 %v1393, %v1397
        %v1458 = vmin.f32 %v1457, %v1401
        %v1459 = vmin.f32 %v1458, %v1405
        %v1460 = vmin.f32 %v1459, %v1409
        %v1461 = vmin.f32 %v1460, %v1413
        %v1462 = vmin.f32 %v1461, %v1417
        %v1463 = vmin.f32 %v1462, %v1421
        %v1464 = vmin.f32 %v1463, %v1425
        %v1465 = vmin.f32 %v1464, %v1429
        %v1466 = vmin.f32 %v1465, %v1433
        %v1467 = vmin.f32 %v1466, %v1437
        %v1468 = vmin.f32 %v1467, %v1441
        %v1469 = vmin.f32 %v1468, %v1445
        %v1470 = vmin.f32 %v1469, %v1449
        %v1471 = vmin.f32 %v1470, %v1453
        %v1472 = vrot.slane %v1471, 4
        %v1473 = vmin.f32 %v1471, %v1472
        %v1474 = vrot.slane %v1473, 2
        %v1475 = vmin.f32 %v1473, %v1474
        %v1476 = vrot.slane %v1475, 1
        %v1477 = vmin.f32 %v1475, %v1476
        %v1478 = vmin.f32 %v1394, %v1398
        %v1479 = vmin.f32 %v1478, %v1402
        %v1480 = vmin.f32 %v1479, %v1406
        %v1481 = vmin.f32 %v1480, %v1410
        %v1482 = vmin.f32 %v1481, %v1414
        %v1483 = vmin.f32 %v1482, %v1418
        %v1484 = vmin.f32 %v1483, %v1422
        %v1485 = vmin.f32 %v1484, %v1426
        %v1486 = vmin.f32 %v1485, %v1430
        %v1487 = vmin.f32 %v1486, %v1434
        %v1488 = vmin.f32 %v1487, %v1438
        %v1489 = vmin.f32 %v1488, %v1442
        %v1490 = vmin.f32 %v1489, %v1446
        %v1491 = vmin.f32 %v1490, %v1450
        %v1492 = vmin.f32 %v1491, %v1454
        %v1493 = vrot.slane %v1492, 4
        %v1494 = vmin.f32 %v1492, %v1493
        %v1495 = vrot.slane %v1494, 2
        %v1496 = vmin.f32 %v1494, %v1495
        %v1497 = vrot.slane %v1496, 1
        %v1498 = vmin.f32 %v1496, %v1497
        %v1499 = vmin.f32 %v1395, %v1399
        %v1500 = vmin.f32 %v1499, %v1403
        %v1501 = vmin.f32 %v1500, %v1407
        %v1502 = vmin.f32 %v1501, %v1411
        %v1503 = vmin.f32 %v1502, %v1415
        %v1504 = vmin.f32 %v1503, %v1419
        %v1505 = vmin.f32 %v1504, %v1423
        %v1506 = vmin.f32 %v1505, %v1427
        %v1507 = vmin.f32 %v1506, %v1431
        %v1508 = vmin.f32 %v1507, %v1435
        %v1509 = vmin.f32 %v1508, %v1439
        %v1510 = vmin.f32 %v1509, %v1443
        %v1511 = vmin.f32 %v1510, %v1447
        %v1512 = vmin.f32 %v1511, %v1451
        %v1513 = vmin.f32 %v1512, %v1455
        %v1514 = vrot.slane %v1513, 4
        %v1515 = vmin.f32 %v1513, %v1514
        %v1516 = vrot.slane %v1515, 2
        %v1517 = vmin.f32 %v1515, %v1516
        %v1518 = vrot.slane %v1517, 1
        %v1519 = vmin.f32 %v1517, %v1518
        %v1520 = vmin.f32 %v1396, %v1400
        %v1521 = vmin.f32 %v1520, %v1404
        %v1522 = vmin.f32 %v1521, %v1408
        %v1523 = vmin.f32 %v1522, %v1412
        %v1524 = vmin.f32 %v1523, %v1416
        %v1525 = vmin.f32 %v1524, %v1420
        %v1526 = vmin.f32 %v1525, %v1424
        %v1527 = vmin.f32 %v1526, %v1428
        %v1528 = vmin.f32 %v1527, %v1432
        %v1529 = vmin.f32 %v1528, %v1436
        %v1530 = vmin.f32 %v1529, %v1440
        %v1531 = vmin.f32 %v1530, %v1444
        %v1532 = vmin.f32 %v1531, %v1448
        %v1533 = vmin.f32 %v1532, %v1452
        %v1534 = vmin.f32 %v1533, %v1456
        %v1535 = vrot.slane %v1534, 4
        %v1536 = vmin.f32 %v1534, %v1535
        %v1537 = vrot.slane %v1536, 2
        %v1538 = vmin.f32 %v1536, %v1537
        %v1539 = vrot.slane %v1538, 1
        %v1540 = vmin.f32 %v1538, %v1539
        %v1541 = vlaneseq
        %v1542 = vshrl.u32 %v1541, 7
        %v1543 = vadd.s32 %v1542, 8
        %v1544 = vadd.s32 %v1542, 16
        %v1545 = vadd.s32 %v1542, 24
        %v1546 = vadd.s32 %v1542, 32
        %v1547 = vadd.s32 %v1542, 40
        %v1548 = vadd.s32 %v1542, 48
        %v1549 = vadd.s32 %v1542, 56
        %v1550 = vadd.s32 %v1542, 64
        %v1551 = vadd.s32 %v1542, 72
        %v1552 = vadd.s32 %v1542, 80
        %v1553 = vadd.s32 %v1542, 88
        %v1554 = vadd.s32 %v1542, 96
        %v1555 = vadd.s32 %v1542, 104
        %v1556 = vadd.s32 %v1542, 112
        %v1557 = vadd.s32 %v1542, 120
        %vm1558 = vcmp.eq.f32.partialorder %v1393, %v1477
        %vm1559 = vcmp.eq.f32.partialorder %v1394, %v1498
        %vm1560 = vcmp.eq.f32.partialorder %v1395, %v1519
        %vm1561 = vcmp.eq.f32.partialorder %v1396, %v1540
        %vm1562 = vcmp.eq.f32.partialorder %v1397, %v1477
        %vm1563 = vcmp.eq.f32.partialorder %v1398, %v1498
        %vm1564 = vcmp.eq.f32.partialorder %v1399, %v1519
        %vm1565 = vcmp.eq.f32.partialorder %v1400, %v1540
        %vm1566 = vcmp.eq.f32.partialorder %v1401, %v1477
        %vm1567 = vcmp.eq.f32.partialorder %v1402, %v1498
        %vm1568 = vcmp.eq.f32.partialorder %v1403, %v1519
        %vm1569 = vcmp.eq.f32.partialorder %v1404, %v1540
        %vm1570 = vcmp.eq.f32.partialorder %v1405, %v1477
        %vm1571 = vcmp.eq.f32.partialorder %v1406, %v1498
        %vm1572 = vcmp.eq.f32.partialorder %v1407, %v1519
        %vm1573 = vcmp.eq.f32.partialorder %v1408, %v1540
        %vm1574 = vcmp.eq.f32.partialorder %v1409, %v1477
        %vm1575 = vcmp.eq.f32.partialorder %v1410, %v1498
        %vm1576 = vcmp.eq.f32.partialorder %v1411, %v1519
        %vm1577 = vcmp.eq.f32.partialorder %v1412, %v1540
        %vm1578 = vcmp.eq.f32.partialorder %v1413, %v1477
        %vm1579 = vcmp.eq.f32.partialorder %v1414, %v1498
        %vm1580 = vcmp.eq.f32.partialorder %v1415, %v1519
        %vm1581 = vcmp.eq.f32.partialorder %v1416, %v1540
        %vm1582 = vcmp.eq.f32.partialorder %v1417, %v1477
        %vm1583 = vcmp.eq.f32.partialorder %v1418, %v1498
        %vm1584 = vcmp.eq.f32.partialorder %v1419, %v1519
        %vm1585 = vcmp.eq.f32.partialorder %v1420, %v1540
        %vm1586 = vcmp.eq.f32.partialorder %v1421, %v1477
        %vm1587 = vcmp.eq.f32.partialorder %v1422, %v1498
        %vm1588 = vcmp.eq.f32.partialorder %v1423, %v1519
        %vm1589 = vcmp.eq.f32.partialorder %v1424, %v1540
        %vm1590 = vcmp.eq.f32.partialorder %v1425, %v1477
        %vm1591 = vcmp.eq.f32.partialorder %v1426, %v1498
        %vm1592 = vcmp.eq.f32.partialorder %v1427, %v1519
        %vm1593 = vcmp.eq.f32.partialorder %v1428, %v1540
        %vm1594 = vcmp.eq.f32.partialorder %v1429, %v1477
        %vm1595 = vcmp.eq.f32.partialorder %v1430, %v1498
        %vm1596 = vcmp.eq.f32.partialorder %v1431, %v1519
        %vm1597 = vcmp.eq.f32.partialorder %v1432, %v1540
        %vm1598 = vcmp.eq.f32.partialorder %v1433, %v1477
        %vm1599 = vcmp.eq.f32.partialorder %v1434, %v1498
        %vm1600 = vcmp.eq.f32.partialorder %v1435, %v1519
        %vm1601 = vcmp.eq.f32.partialorder %v1436, %v1540
        %vm1602 = vcmp.eq.f32.partialorder %v1437, %v1477
        %vm1603 = vcmp.eq.f32.partialorder %v1438, %v1498
        %vm1604 = vcmp.eq.f32.partialorder %v1439, %v1519
        %vm1605 = vcmp.eq.f32.partialorder %v1440, %v1540
        %vm1606 = vcmp.eq.f32.partialorder %v1441, %v1477
        %vm1607 = vcmp.eq.f32.partialorder %v1442, %v1498
        %vm1608 = vcmp.eq.f32.partialorder %v1443, %v1519
        %vm1609 = vcmp.eq.f32.partialorder %v1444, %v1540
        %vm1610 = vcmp.eq.f32.partialorder %v1445, %v1477
        %vm1611 = vcmp.eq.f32.partialorder %v1446, %v1498
        %vm1612 = vcmp.eq.f32.partialorder %v1447, %v1519
        %vm1613 = vcmp.eq.f32.partialorder %v1448, %v1540
        %vm1614 = vcmp.eq.f32.partialorder %v1449, %v1477
        %vm1615 = vcmp.eq.f32.partialorder %v1450, %v1498
        %vm1616 = vcmp.eq.f32.partialorder %v1451, %v1519
        %vm1617 = vcmp.eq.f32.partialorder %v1452, %v1540
        %vm1618 = vcmp.eq.f32.partialorder %v1453, %v1477
        %vm1619 = vcmp.eq.f32.partialorder %v1454, %v1498
        %vm1620 = vcmp.eq.f32.partialorder %v1455, %v1519
        %vm1621 = vcmp.eq.f32.partialorder %v1456, %v1540
        %v1622 = vsel %vm1558, %v1542, 128
        %v1623 = vsel %vm1559, %v1542, 128
        %v1624 = vsel %vm1560, %v1542, 128
        %v1625 = vsel %vm1561, %v1542, 128
        %v1626 = vsel %vm1562, %v1543, 128
        %v1627 = vsel %vm1563, %v1543, 128
        %v1628 = vsel %vm1564, %v1543, 128
        %v1629 = vsel %vm1565, %v1543, 128
        %v1630 = vsel %vm1566, %v1544, 128
        %v1631 = vsel %vm1567, %v1544, 128
        %v1632 = vsel %vm1568, %v1544, 128
        %v1633 = vsel %vm1569, %v1544, 128
        %v1634 = vsel %vm1570, %v1545, 128
        %v1635 = vsel %vm1571, %v1545, 128
        %v1636 = vsel %vm1572, %v1545, 128
        %v1637 = vsel %vm1573, %v1545, 128
        %v1638 = vsel %vm1574, %v1546, 128
        %v1639 = vsel %vm1575, %v1546, 128
        %v1640 = vsel %vm1576, %v1546, 128
        %v1641 = vsel %vm1577, %v1546, 128
        %v1642 = vsel %vm1578, %v1547, 128
        %v1643 = vsel %vm1579, %v1547, 128
        %v1644 = vsel %vm1580, %v1547, 128
        %v1645 = vsel %vm1581, %v1547, 128
        %v1646 = vsel %vm1582, %v1548, 128
        %v1647 = vsel %vm1583, %v1548, 128
        %v1648 = vsel %vm1584, %v1548, 128
        %v1649 = vsel %vm1585, %v1548, 128
        %v1650 = vsel %vm1586, %v1549, 128
        %v1651 = vsel %vm1587, %v1549, 128
        %v1652 = vsel %vm1588, %v1549, 128
        %v1653 = vsel %vm1589, %v1549, 128
        %v1654 = vsel %vm1590, %v1550, 128
        %v1655 = vsel %vm1591, %v1550, 128
        %v1656 = vsel %vm1592, %v1550, 128
        %v1657 = vsel %vm1593, %v1550, 128
        %v1658 = vsel %vm1594, %v1551, 128
        %v1659 = vsel %vm1595, %v1551, 128
        %v1660 = vsel %vm1596, %v1551, 128
        %v1661 = vsel %vm1597, %v1551, 128
        %v1662 = vsel %vm1598, %v1552, 128
        %v1663 = vsel %vm1599, %v1552, 128
        %v1664 = vsel %vm1600, %v1552, 128
        %v1665 = vsel %vm1601, %v1552, 128
        %v1666 = vsel %vm1602, %v1553, 128
        %v1667 = vsel %vm1603, %v1553, 128
        %v1668 = vsel %vm1604, %v1553, 128
        %v1669 = vsel %vm1605, %v1553, 128
        %v1670 = vsel %vm1606, %v1554, 128
        %v1671 = vsel %vm1607, %v1554, 128
        %v1672 = vsel %vm1608, %v1554, 128
        %v1673 = vsel %vm1609, %v1554, 128
        %v1674 = vsel %vm1610, %v1555, 128
        %v1675 = vsel %vm1611, %v1555, 128
        %v1676 = vsel %vm1612, %v1555, 128
        %v1677 = vsel %vm1613, %v1555, 128
        %v1678 = vsel %vm1614, %v1556, 128
        %v1679 = vsel %vm1615, %v1556, 128
        %v1680 = vsel %vm1616, %v1556, 128
        %v1681 = vsel %vm1617, %v1556, 128
        %v1682 = vsel %vm1618, %v1557, 128
        %v1683 = vsel %vm1619, %v1557, 128
        %v1684 = vsel %vm1620, %v1557, 128
        %v1685 = vsel %vm1621, %v1557, 128
        %vm1686 = vcmp.lt.s32.totalorder %v1622, %v1626
        %v1687 = vsel %vm1686, %v1622, %v1626
        %vm1688 = vcmp.lt.s32.totalorder %v1687, %v1630
        %v1689 = vsel %vm1688, %v1687, %v1630
        %vm1690 = vcmp.lt.s32.totalorder %v1689, %v1634
        %v1691 = vsel %vm1690, %v1689, %v1634
        %vm1692 = vcmp.lt.s32.totalorder %v1691, %v1638
        %v1693 = vsel %vm1692, %v1691, %v1638
        %vm1694 = vcmp.lt.s32.totalorder %v1693, %v1642
        %v1695 = vsel %vm1694, %v1693, %v1642
        %vm1696 = vcmp.lt.s32.totalorder %v1695, %v1646
        %v1697 = vsel %vm1696, %v1695, %v1646
        %vm1698 = vcmp.lt.s32.totalorder %v1697, %v1650
        %v1699 = vsel %vm1698, %v1697, %v1650
        %vm1700 = vcmp.lt.s32.totalorder %v1699, %v1654
        %v1701 = vsel %vm1700, %v1699, %v1654
        %vm1702 = vcmp.lt.s32.totalorder %v1701, %v1658
        %v1703 = vsel %vm1702, %v1701, %v1658
        %vm1704 = vcmp.lt.s32.totalorder %v1703, %v1662
        %v1705 = vsel %vm1704, %v1703, %v1662
        %vm1706 = vcmp.lt.s32.totalorder %v1705, %v1666
        %v1707 = vsel %vm1706, %v1705, %v1666
        %vm1708 = vcmp.lt.s32.totalorder %v1707, %v1670
        %v1709 = vsel %vm1708, %v1707, %v1670
        %vm1710 = vcmp.lt.s32.totalorder %v1709, %v1674
        %v1711 = vsel %vm1710, %v1709, %v1674
        %vm1712 = vcmp.lt.s32.totalorder %v1711, %v1678
        %v1713 = vsel %vm1712, %v1711, %v1678
        %vm1714 = vcmp.lt.s32.totalorder %v1713, %v1682
        %v1715 = vsel %vm1714, %v1713, %v1682
        %v1716 = vrot.slane %v1715, 4
        %vm1717 = vcmp.lt.s32.totalorder %v1715, %v1716
        %v1718 = vsel %vm1717, %v1715, %v1716
        %v1719 = vrot.slane %v1718, 2
        %vm1720 = vcmp.lt.s32.totalorder %v1718, %v1719
        %v1721 = vsel %vm1720, %v1718, %v1719
        %v1722 = vrot.slane %v1721, 1
        %vm1723 = vcmp.lt.s32.totalorder %v1721, %v1722
        %v1724 = vsel %vm1723, %v1721, %v1722
        %vm1725 = vcmp.lt.s32.totalorder %v1623, %v1627
        %v1726 = vsel %vm1725, %v1623, %v1627
        %vm1727 = vcmp.lt.s32.totalorder %v1726, %v1631
        %v1728 = vsel %vm1727, %v1726, %v1631
        %vm1729 = vcmp.lt.s32.totalorder %v1728, %v1635
        %v1730 = vsel %vm1729, %v1728, %v1635
        %vm1731 = vcmp.lt.s32.totalorder %v1730, %v1639
        %v1732 = vsel %vm1731, %v1730, %v1639
        %vm1733 = vcmp.lt.s32.totalorder %v1732, %v1643
        %v1734 = vsel %vm1733, %v1732, %v1643
        %vm1735 = vcmp.lt.s32.totalorder %v1734, %v1647
        %v1736 = vsel %vm1735, %v1734, %v1647
        %vm1737 = vcmp.lt.s32.totalorder %v1736, %v1651
        %v1738 = vsel %vm1737, %v1736, %v1651
        %vm1739 = vcmp.lt.s32.totalorder %v1738, %v1655
        %v1740 = vsel %vm1739, %v1738, %v1655
        %vm1741 = vcmp.lt.s32.totalorder %v1740, %v1659
        %v1742 = vsel %vm1741, %v1740, %v1659
        %vm1743 = vcmp.lt.s32.totalorder %v1742, %v1663
        %v1744 = vsel %vm1743, %v1742, %v1663
        %vm1745 = vcmp.lt.s32.totalorder %v1744, %v1667
        %v1746 = vsel %vm1745, %v1744, %v1667
        %vm1747 = vcmp.lt.s32.totalorder %v1746, %v1671
        %v1748 = vsel %vm1747, %v1746, %v1671
        %vm1749 = vcmp.lt.s32.totalorder %v1748, %v1675
        %v1750 = vsel %vm1749, %v1748, %v1675
        %vm1751 = vcmp.lt.s32.totalorder %v1750, %v1679
        %v1752 = vsel %vm1751, %v1750, %v1679
        %vm1753 = vcmp.lt.s32.totalorder %v1752, %v1683
        %v1754 = vsel %vm1753, %v1752, %v1683
        %v1755 = vrot.slane %v1754, 4
        %vm1756 = vcmp.lt.s32.totalorder %v1754, %v1755
        %v1757 = vsel %vm1756, %v1754, %v1755
        %v1758 = vrot.slane %v1757, 2
        %vm1759 = vcmp.lt.s32.totalorder %v1757, %v1758
        %v1760 = vsel %vm1759, %v1757, %v1758
        %v1761 = vrot.slane %v1760, 1
        %vm1762 = vcmp.lt.s32.totalorder %v1760, %v1761
        %v1763 = vsel %vm1762, %v1760, %v1761
        %vm1764 = vcmp.lt.s32.totalorder %v1624, %v1628
        %v1765 = vsel %vm1764, %v1624, %v1628
        %vm1766 = vcmp.lt.s32.totalorder %v1765, %v1632
        %v1767 = vsel %vm1766, %v1765, %v1632
        %vm1768 = vcmp.lt.s32.totalorder %v1767, %v1636
        %v1769 = vsel %vm1768, %v1767, %v1636
        %vm1770 = vcmp.lt.s32.totalorder %v1769, %v1640
        %v1771 = vsel %vm1770, %v1769, %v1640
        %vm1772 = vcmp.lt.s32.totalorder %v1771, %v1644
        %v1773 = vsel %vm1772, %v1771, %v1644
        %vm1774 = vcmp.lt.s32.totalorder %v1773, %v1648
        %v1775 = vsel %vm1774, %v1773, %v1648
        %vm1776 = vcmp.lt.s32.totalorder %v1775, %v1652
        %v1777 = vsel %vm1776, %v1775, %v1652
        %vm1778 = vcmp.lt.s32.totalorder %v1777, %v1656
        %v1779 = vsel %vm1778, %v1777, %v1656
        %vm1780 = vcmp.lt.s32.totalorder %v1779, %v1660
        %v1781 = vsel %vm1780, %v1779, %v1660
        %vm1782 = vcmp.lt.s32.totalorder %v1781, %v1664
        %v1783 = vsel %vm1782, %v1781, %v1664
        %vm1784 = vcmp.lt.s32.totalorder %v1783, %v1668
        %v1785 = vsel %vm1784, %v1783, %v1668
        %vm1786 = vcmp.lt.s32.totalorder %v1785, %v1672
        %v1787 = vsel %vm1786, %v1785, %v1672
        %vm1788 = vcmp.lt.s32.totalorder %v1787, %v1676
        %v1789 = vsel %vm1788, %v1787, %v1676
        %vm1790 = vcmp.lt.s32.totalorder %v1789, %v1680
        %v1791 = vsel %vm1790, %v1789, %v1680
        %vm1792 = vcmp.lt.s32.totalorder %v1791, %v1684
        %v1793 = vsel %vm1792, %v1791, %v1684
        %v1794 = vrot.slane %v1793, 4
        %vm1795 = vcmp.lt.s32.totalorder %v1793, %v1794
        %v1796 = vsel %vm1795, %v1793, %v1794
        %v1797 = vrot.slane %v1796, 2
        %vm1798 = vcmp.lt.s32.totalorder %v1796, %v1797
        %v1799 = vsel %vm1798, %v1796, %v1797
        %v1800 = vrot.slane %v1799, 1
        %vm1801 = vcmp.lt.s32.totalorder %v1799, %v1800
        %v1802 = vsel %vm1801, %v1799, %v1800
        %vm1803 = vcmp.lt.s32.totalorder %v1625, %v1629
        %v1804 = vsel %vm1803, %v1625, %v1629
        %vm1805 = vcmp.lt.s32.totalorder %v1804, %v1633
        %v1806 = vsel %vm1805, %v1804, %v1633
        %vm1807 = vcmp.lt.s32.totalorder %v1806, %v1637
        %v1808 = vsel %vm1807, %v1806, %v1637
        %vm1809 = vcmp.lt.s32.totalorder %v1808, %v1641
        %v1810 = vsel %vm1809, %v1808, %v1641
        %vm1811 = vcmp.lt.s32.totalorder %v1810, %v1645
        %v1812 = vsel %vm1811, %v1810, %v1645
        %vm1813 = vcmp.lt.s32.totalorder %v1812, %v1649
        %v1814 = vsel %vm1813, %v1812, %v1649
        %vm1815 = vcmp.lt.s32.totalorder %v1814, %v1653
        %v1816 = vsel %vm1815, %v1814, %v1653
        %vm1817 = vcmp.lt.s32.totalorder %v1816, %v1657
        %v1818 = vsel %vm1817, %v1816, %v1657
        %vm1819 = vcmp.lt.s32.totalorder %v1818, %v1661
        %v1820 = vsel %vm1819, %v1818, %v1661
        %vm1821 = vcmp.lt.s32.totalorder %v1820, %v1665
        %v1822 = vsel %vm1821, %v1820, %v1665
        %vm1823 = vcmp.lt.s32.totalorder %v1822, %v1669
        %v1824 = vsel %vm1823, %v1822, %v1669
        %vm1825 = vcmp.lt.s32.totalorder %v1824, %v1673
        %v1826 = vsel %vm1825, %v1824, %v1673
        %vm1827 = vcmp.lt.s32.totalorder %v1826, %v1677
        %v1828 = vsel %vm1827, %v1826, %v1677
        %vm1829 = vcmp.lt.s32.totalorder %v1828, %v1681
        %v1830 = vsel %vm1829, %v1828, %v1681
        %vm1831 = vcmp.lt.s32.totalorder %v1830, %v1685
        %v1832 = vsel %vm1831, %v1830, %v1685
        %v1833 = vrot.slane %v1832, 4
        %vm1834 = vcmp.lt.s32.totalorder %v1832, %v1833
        %v1835 = vsel %vm1834, %v1832, %v1833
        %v1836 = vrot.slane %v1835, 2
        %vm1837 = vcmp.lt.s32.totalorder %v1835, %v1836
        %v1838 = vsel %vm1837, %v1835, %v1836
        %v1839 = vrot.slane %v1838, 1
        %vm1840 = vcmp.lt.s32.totalorder %v1838, %v1839
        %v1841 = vsel %vm1840, %v1838, %v1839
        %vm1842 = vcmp.eq.s32.totalorder %v1542, %v1724
        %vm1843 = vcmp.eq.s32.totalorder %v1542, %v1763
        %vm1844 = vcmp.eq.s32.totalorder %v1542, %v1802
        %vm1845 = vcmp.eq.s32.totalorder %v1542, %v1841
        %vm1846 = vcmp.eq.s32.totalorder %v1543, %v1724
        %vm1847 = vcmp.eq.s32.totalorder %v1543, %v1763
        %vm1848 = vcmp.eq.s32.totalorder %v1543, %v1802
        %vm1849 = vcmp.eq.s32.totalorder %v1543, %v1841
        %vm1850 = vcmp.eq.s32.totalorder %v1544, %v1724
        %vm1851 = vcmp.eq.s32.totalorder %v1544, %v1763
        %vm1852 = vcmp.eq.s32.totalorder %v1544, %v1802
        %vm1853 = vcmp.eq.s32.totalorder %v1544, %v1841
        %vm1854 = vcmp.eq.s32.totalorder %v1545, %v1724
        %vm1855 = vcmp.eq.s32.totalorder %v1545, %v1763
        %vm1856 = vcmp.eq.s32.totalorder %v1545, %v1802
        %vm1857 = vcmp.eq.s32.totalorder %v1545, %v1841
        %vm1858 = vcmp.eq.s32.totalorder %v1546, %v1724
        %vm1859 = vcmp.eq.s32.totalorder %v1546, %v1763
        %vm1860 = vcmp.eq.s32.totalorder %v1546, %v1802
        %vm1861 = vcmp.eq.s32.totalorder %v1546, %v1841
        %vm1862 = vcmp.eq.s32.totalorder %v1547, %v1724
        %vm1863 = vcmp.eq.s32.totalorder %v1547, %v1763
        %vm1864 = vcmp.eq.s32.totalorder %v1547, %v1802
        %vm1865 = vcmp.eq.s32.totalorder %v1547, %v1841
        %vm1866 = vcmp.eq.s32.totalorder %v1548, %v1724
        %vm1867 = vcmp.eq.s32.totalorder %v1548, %v1763
        %vm1868 = vcmp.eq.s32.totalorder %v1548, %v1802
        %vm1869 = vcmp.eq.s32.totalorder %v1548, %v1841
        %vm1870 = vcmp.eq.s32.totalorder %v1549, %v1724
        %vm1871 = vcmp.eq.s32.totalorder %v1549, %v1763
        %vm1872 = vcmp.eq.s32.totalorder %v1549, %v1802
        %vm1873 = vcmp.eq.s32.totalorder %v1549, %v1841
        %vm1874 = vcmp.eq.s32.totalorder %v1550, %v1724
        %vm1875 = vcmp.eq.s32.totalorder %v1550, %v1763
        %vm1876 = vcmp.eq.s32.totalorder %v1550, %v1802
        %vm1877 = vcmp.eq.s32.totalorder %v1550, %v1841
        %vm1878 = vcmp.eq.s32.totalorder %v1551, %v1724
        %vm1879 = vcmp.eq.s32.totalorder %v1551, %v1763
        %vm1880 = vcmp.eq.s32.totalorder %v1551, %v1802
        %vm1881 = vcmp.eq.s32.totalorder %v1551, %v1841
        %vm1882 = vcmp.eq.s32.totalorder %v1552, %v1724
        %vm1883 = vcmp.eq.s32.totalorder %v1552, %v1763
        %vm1884 = vcmp.eq.s32.totalorder %v1552, %v1802
        %vm1885 = vcmp.eq.s32.totalorder %v1552, %v1841
        %vm1886 = vcmp.eq.s32.totalorder %v1553, %v1724
        %vm1887 = vcmp.eq.s32.totalorder %v1553, %v1763
        %vm1888 = vcmp.eq.s32.totalorder %v1553, %v1802
        %vm1889 = vcmp.eq.s32.totalorder %v1553, %v1841
        %vm1890 = vcmp.eq.s32.totalorder %v1554, %v1724
        %vm1891 = vcmp.eq.s32.totalorder %v1554, %v1763
        %vm1892 = vcmp.eq.s32.totalorder %v1554, %v1802
        %vm1893 = vcmp.eq.s32.totalorder %v1554, %v1841
        %vm1894 = vcmp.eq.s32.totalorder %v1555, %v1724
        %vm1895 = vcmp.eq.s32.totalorder %v1555, %v1763
        %vm1896 = vcmp.eq.s32.totalorder %v1555, %v1802
        %vm1897 = vcmp.eq.s32.totalorder %v1555, %v1841
        %vm1898 = vcmp.eq.s32.totalorder %v1556, %v1724
        %vm1899 = vcmp.eq.s32.totalorder %v1556, %v1763
        %vm1900 = vcmp.eq.s32.totalorder %v1556, %v1802
        %vm1901 = vcmp.eq.s32.totalorder %v1556, %v1841
        %vm1902 = vcmp.eq.s32.totalorder %v1557, %v1724
        %vm1903 = vcmp.eq.s32.totalorder %v1557, %v1763
        %vm1904 = vcmp.eq.s32.totalorder %v1557, %v1802
        %vm1905 = vcmp.eq.s32.totalorder %v1557, %v1841
        %v1906 = vsel %vm1842, 1, 0
        %v1907 = vsel %vm1843, 1, 0
        %v1908 = vsel %vm1844, 1, 0
        %v1909 = vsel %vm1845, 1, 0
        %v1910 = vsel %vm1846, 1, 0
        %v1911 = vsel %vm1847, 1, 0
        %v1912 = vsel %vm1848, 1, 0
        %v1913 = vsel %vm1849, 1, 0
        %v1914 = vsel %vm1850, 1, 0
        %v1915 = vsel %vm1851, 1, 0
        %v1916 = vsel %vm1852, 1, 0
        %v1917 = vsel %vm1853, 1, 0
        %v1918 = vsel %vm1854, 1, 0
        %v1919 = vsel %vm1855, 1, 0
        %v1920 = vsel %vm1856, 1, 0
        %v1921 = vsel %vm1857, 1, 0
        %v1922 = vsel %vm1858, 1, 0
        %v1923 = vsel %vm1859, 1, 0
        %v1924 = vsel %vm1860, 1, 0
        %v1925 = vsel %vm1861, 1, 0
        %v1926 = vsel %vm1862, 1, 0
        %v1927 = vsel %vm1863, 1, 0
        %v1928 = vsel %vm1864, 1, 0
        %v1929 = vsel %vm1865, 1, 0
        %v1930 = vsel %vm1866, 1, 0
        %v1931 = vsel %vm1867, 1, 0
        %v1932 = vsel %vm1868, 1, 0
        %v1933 = vsel %vm1869, 1, 0
        %v1934 = vsel %vm1870, 1, 0
        %v1935 = vsel %vm1871, 1, 0
        %v1936 = vsel %vm1872, 1, 0
        %v1937 = vsel %vm1873, 1, 0
        %v1938 = vsel %vm1874, 1, 0
        %v1939 = vsel %vm1875, 1, 0
        %v1940 = vsel %vm1876, 1, 0
        %v1941 = vsel %vm1877, 1, 0
        %v1942 = vsel %vm1878, 1, 0
        %v1943 = vsel %vm1879, 1, 0
        %v1944 = vsel %vm1880, 1, 0
        %v1945 = vsel %vm1881, 1, 0
        %v1946 = vsel %vm1882, 1, 0
        %v1947 = vsel %vm1883, 1, 0
        %v1948 = vsel %vm1884, 1, 0
        %v1949 = vsel %vm1885, 1, 0
        %v1950 = vsel %vm1886, 1, 0
        %v1951 = vsel %vm1887, 1, 0
        %v1952 = vsel %vm1888, 1, 0
        %v1953 = vsel %vm1889, 1, 0
        %v1954 = vsel %vm1890, 1, 0
        %v1955 = vsel %vm1891, 1, 0
        %v1956 = vsel %vm1892, 1, 0
        %v1957 = vsel %vm1893, 1, 0
        %v1958 = vsel %vm1894, 1, 0
        %v1959 = vsel %vm1895, 1, 0
        %v1960 = vsel %vm1896, 1, 0
        %v1961 = vsel %vm1897, 1, 0
        %v1962 = vsel %vm1898, 1, 0
        %v1963 = vsel %vm1899, 1, 0
        %v1964 = vsel %vm1900, 1, 0
        %v1965 = vsel %vm1901, 1, 0
        %v1966 = vsel %vm1902, 1, 0
        %v1967 = vsel %vm1903, 1, 0
        %v1968 = vsel %vm1904, 1, 0
        %v1969 = vsel %vm1905, 1, 0
        %v1970 = vcvt.s32.f32 %v1906
        %v1971 = vcvt.s32.f32 %v1907
        %v1972 = vcvt.s32.f32 %v1908
        %v1973 = vcvt.s32.f32 %v1909
        %v1974 = vcvt.s32.f32 %v1910
        %v1975 = vcvt.s32.f32 %v1911
        %v1976 = vcvt.s32.f32 %v1912
        %v1977 = vcvt.s32.f32 %v1913
        %v1978 = vcvt.s32.f32 %v1914
        %v1979 = vcvt.s32.f32 %v1915
        %v1980 = vcvt.s32.f32 %v1916
        %v1981 = vcvt.s32.f32 %v1917
        %v1982 = vcvt.s32.f32 %v1918
        %v1983 = vcvt.s32.f32 %v1919
        %v1984 = vcvt.s32.f32 %v1920
        %v1985 = vcvt.s32.f32 %v1921
        %v1986 = vcvt.s32.f32 %v1922
        %v1987 = vcvt.s32.f32 %v1923
        %v1988 = vcvt.s32.f32 %v1924
        %v1989 = vcvt.s32.f32 %v1925
        %v1990 = vcvt.s32.f32 %v1926
        %v1991 = vcvt.s32.f32 %v1927
        %v1992 = vcvt.s32.f32 %v1928
        %v1993 = vcvt.s32.f32 %v1929
        %v1994 = vcvt.s32.f32 %v1930
        %v1995 = vcvt.s32.f32 %v1931
        %v1996 = vcvt.s32.f32 %v1932
        %v1997 = vcvt.s32.f32 %v1933
        %v1998 = vcvt.s32.f32 %v1934
        %v1999 = vcvt.s32.f32 %v1935
        %v2000 = vcvt.s32.f32 %v1936
        %v2001 = vcvt.s32.f32 %v1937
        %v2002 = vcvt.s32.f32 %v1938
        %v2003 = vcvt.s32.f32 %v1939
        %v2004 = vcvt.s32.f32 %v1940
        %v2005 = vcvt.s32.f32 %v1941
        %v2006 = vcvt.s32.f32 %v1942
        %v2007 = vcvt.s32.f32 %v1943
        %v2008 = vcvt.s32.f32 %v1944
        %v2009 = vcvt.s32.f32 %v1945
        %v2010 = vcvt.s32.f32 %v1946
        %v2011 = vcvt.s32.f32 %v1947
        %v2012 = vcvt.s32.f32 %v1948
        %v2013 = vcvt.s32.f32 %v1949
        %v2014 = vcvt.s32.f32 %v1950
        %v2015 = vcvt.s32.f32 %v1951
        %v2016 = vcvt.s32.f32 %v1952
        %v2017 = vcvt.s32.f32 %v1953
        %v2018 = vcvt.s32.f32 %v1954
        %v2019 = vcvt.s32.f32 %v1955
        %v2020 = vcvt.s32.f32 %v1956
        %v2021 = vcvt.s32.f32 %v1957
        %v2022 = vcvt.s32.f32 %v1958
        %v2023 = vcvt.s32.f32 %v1959
        %v2024 = vcvt.s32.f32 %v1960
        %v2025 = vcvt.s32.f32 %v1961
        %v2026 = vcvt.s32.f32 %v1962
        %v2027 = vcvt.s32.f32 %v1963
        %v2028 = vcvt.s32.f32 %v1964
        %v2029 = vcvt.s32.f32 %v1965
        %v2030 = vcvt.s32.f32 %v1966
        %v2031 = vcvt.s32.f32 %v1967
        %v2032 = vcvt.s32.f32 %v1968
        %v2033 = vcvt.s32.f32 %v1969
        %2034 = vmatprep.subr.mxu0 %v1971
        %2035 = vmatpush1.msra.mxu0 %v1970
        %2036 = vmatprep.subr.mxu0 %v1975
        %2037 = vmatpush1.msra.mxu0 %v1974
        %2038 = vmatprep.subr.mxu0 %v1979
        %2039 = vmatpush1.msra.mxu0 %v1978
        %2040 = vmatprep.subr.mxu0 %v1983
        %2041 = vmatpush1.msra.mxu0 %v1982
        %2042 = vmatprep.subr.mxu0 %v1987
        %2043 = vmatpush1.msra.mxu0 %v1986
        %2044 = vmatprep.subr.mxu0 %v1991
        %2045 = vmatpush1.msra.mxu0 %v1990
        %2046 = vmatprep.subr.mxu0 %v1995
        %2047 = vmatpush1.msra.mxu0 %v1994
        %2048 = vmatprep.subr.mxu0 %v1999
        %2049 = vmatpush1.msra.mxu0 %v1998
        %2050 = vmatprep.subr.mxu0 %v2003
        %2051 = vmatpush1.msra.mxu0 %v2002
        %2052 = vmatprep.subr.mxu0 %v2007
        %2053 = vmatpush1.msra.mxu0 %v2006
        %2054 = vmatprep.subr.mxu0 %v2011
        %2055 = vmatpush1.msra.mxu0 %v2010
        %2056 = vmatprep.subr.mxu0 %v2015
        %2057 = vmatpush1.msra.mxu0 %v2014
        %2058 = vmatprep.subr.mxu0 %v2019
        %2059 = vmatpush1.msra.mxu0 %v2018
        %2060 = vmatprep.subr.mxu0 %v2023
        %2061 = vmatpush1.msra.mxu0 %v2022
        %2062 = vmatprep.subr.mxu0 %v2027
        %2063 = vmatpush1.msra.mxu0 %v2026
        %2064 = vmatprep.subr.mxu0 %v2031
        %2065 = vmatpush1.msra.mxu0 %v2030
        %2066 = vmatprep.subr.mxu0 0.0
        %2067 = vmatpush1.msra.mxu0 0.0
        %2068 = vmatprep.subr.mxu0 0.0
        %2069 = vmatpush1.msra.mxu0 0.0
        %2070 = vmatprep.subr.mxu0 0.0
        %2071 = vmatpush1.msra.mxu0 0.0
        %2072 = vmatprep.subr.mxu0 0.0
        %2073 = vmatpush1.msra.mxu0 0.0
        %2074 = vmatprep.subr.mxu0 0.0
        %2075 = vmatpush1.msra.mxu0 0.0
        %2076 = vmatprep.subr.mxu0 0.0
        %2077 = vmatpush1.msra.mxu0 0.0
        %2078 = vmatprep.subr.mxu0 0.0
        %2079 = vmatpush1.msra.mxu0 0.0
        %2080 = vmatprep.subr.mxu0 0.0
        %2081 = vmatpush1.msra.mxu0 0.0
        %2082 = vmatprep.subr.mxu0 0.0
        %2083 = vmatpush1.msra.mxu0 0.0
        %2084 = vmatprep.subr.mxu0 0.0
        %2085 = vmatpush1.msra.mxu0 0.0
        %2086 = vmatprep.subr.mxu0 0.0
        %2087 = vmatpush1.msra.mxu0 0.0
        %2088 = vmatprep.subr.mxu0 0.0
        %2089 = vmatpush1.msra.mxu0 0.0
        %2090 = vmatprep.subr.mxu0 0.0
        %2091 = vmatpush1.msra.mxu0 0.0
        %2092 = vmatprep.subr.mxu0 0.0
        %2093 = vmatpush1.msra.mxu0 0.0
        %2094 = vmatprep.subr.mxu0 0.0
        %2095 = vmatpush1.msra.mxu0 0.0
        %2096 = vmatprep.subr.mxu0 0.0
        %2097 = vmatpush1.msra.mxu0 0.0
        %2098 = vmatprep.mubr.f32.mxu0 0.0
        %2099 = vmatmul.mubr.f32.gmra.mrb[0].mxu0 %v760
        %v2100 = vpop.f32.mrb[0].mxu0
        %v2101 = vadd.f32 0.0, %v2100
        %v2102 = vpop.f32.mrb[0].mxu0
        %v2103 = vadd.f32 0.0, %v2102
        %2104 = vmatprep.mubr.f32.mxu0 0.0
        %2105 = vmatmul.mubr.f32.gmra.mrb[0].mxu0 %v761
        %v2106 = vpop.f32.mrb[0].mxu0
        %v2107 = vadd.f32 0.0, %v2106
        %v2108 = vpop.f32.mrb[0].mxu0
        %v2109 = vadd.f32 0.0, %v2108
        %2110 = vdwg.mxu0
        %2111 = vmatprep.subr.mxu0 %v1973
        %2112 = vmatpush1.msra.mxu0 %v1972
        %2113 = vmatprep.subr.mxu0 %v1977
        %2114 = vmatpush1.msra.mxu0 %v1976
        %2115 = vmatprep.subr.mxu0 %v1981
        %2116 = vmatpush1.msra.mxu0 %v1980
        %2117 = vmatprep.subr.mxu0 %v1985
        %2118 = vmatpush1.msra.mxu0 %v1984
        %2119 = vmatprep.subr.mxu0 %v1989
        %2120 = vmatpush1.msra.mxu0 %v1988
        %2121 = vmatprep.subr.mxu0 %v1993
        %2122 = vmatpush1.msra.mxu0 %v1992
        %2123 = vmatprep.subr.mxu0 %v1997
        %2124 = vmatpush1.msra.mxu0 %v1996
        %2125 = vmatprep.subr.mxu0 %v2001
        %2126 = vmatpush1.msra.mxu0 %v2000
        %2127 = vmatprep.subr.mxu0 %v2005
        %2128 = vmatpush1.msra.mxu0 %v2004
        %2129 = vmatprep.subr.mxu0 %v2009
        %2130 = vmatpush1.msra.mxu0 %v2008
        %2131 = vmatprep.subr.mxu0 %v2013
        %2132 = vmatpush1.msra.mxu0 %v2012
        %2133 = vmatprep.subr.mxu0 %v2017
        %2134 = vmatpush1.msra.mxu0 %v2016
        %2135 = vmatprep.subr.mxu0 %v2021
        %2136 = vmatpush1.msra.mxu0 %v2020
        %2137 = vmatprep.subr.mxu0 %v2025
        %2138 = vmatpush1.msra.mxu0 %v2024
        %2139 = vmatprep.subr.mxu0 %v2029
        %2140 = vmatpush1.msra.mxu0 %v2028
        %2141 = vmatprep.subr.mxu0 %v2033
        %2142 = vmatpush1.msra.mxu0 %v2032
        %2143 = vmatprep.subr.mxu0 0.0
        %2144 = vmatpush1.msra.mxu0 0.0
        %2145 = vmatprep.subr.mxu0 0.0
        %2146 = vmatpush1.msra.mxu0 0.0
        %2147 = vmatprep.subr.mxu0 0.0
        %2148 = vmatpush1.msra.mxu0 0.0
        %2149 = vmatprep.subr.mxu0 0.0
        %2150 = vmatpush1.msra.mxu0 0.0
        %2151 = vmatprep.subr.mxu0 0.0
        %2152 = vmatpush1.msra.mxu0 0.0
        %2153 = vmatprep.subr.mxu0 0.0
        %2154 = vmatpush1.msra.mxu0 0.0
        %2155 = vmatprep.subr.mxu0 0.0
        %2156 = vmatpush1.msra.mxu0 0.0
        %2157 = vmatprep.subr.mxu0 0.0
        %2158 = vmatpush1.msra.mxu0 0.0
        %2159 = vmatprep.subr.mxu0 0.0
        %2160 = vmatpush1.msra.mxu0 0.0
        %2161 = vmatprep.subr.mxu0 0.0
        %2162 = vmatpush1.msra.mxu0 0.0
        %2163 = vmatprep.subr.mxu0 0.0
        %2164 = vmatpush1.msra.mxu0 0.0
        %2165 = vmatprep.subr.mxu0 0.0
        %2166 = vmatpush1.msra.mxu0 0.0
        %2167 = vmatprep.subr.mxu0 0.0
        %2168 = vmatpush1.msra.mxu0 0.0
        %2169 = vmatprep.subr.mxu0 0.0
        %2170 = vmatpush1.msra.mxu0 0.0
        %2171 = vmatprep.subr.mxu0 0.0
        %2172 = vmatpush1.msra.mxu0 0.0
        %2173 = vmatprep.subr.mxu0 0.0
        %2174 = vmatpush1.msra.mxu0 0.0
        %2175 = vmatprep.mubr.f32.mxu0 0.0
        %2176 = vmatmul.mubr.f32.gmra.mrb[0].mxu0 %v760
        %v2177 = vpop.f32.mrb[0].mxu0
        %v2178 = vadd.f32 0.0, %v2177
        %v2179 = vpop.f32.mrb[0].mxu0
        %v2180 = vadd.f32 0.0, %v2179
        %2181 = vmatprep.mubr.f32.mxu0 0.0
        %2182 = vmatmul.mubr.f32.gmra.mrb[0].mxu0 %v761
        %v2183 = vpop.f32.mrb[0].mxu0
        %v2184 = vadd.f32 0.0, %v2183
        %v2185 = vpop.f32.mrb[0].mxu0
        %v2186 = vadd.f32 0.0, %v2185
        %2187 = vdwg.mxu0
        %2188 = vst [vmem:[%s690] sm:$0xff] %v2101
        %2189 = vst [vmem:[%s690 + $0x8] sm:$0xff] %v2103
        %2190 = vst [vmem:[%s690 + $0x10] sm:$0xff] %v2178
        %2191 = vst [vmem:[%s690 + $0x18] sm:$0xff] %v2180
        %2192 = vst [vmem:[%s690 + $0x20] sm:$0xff] %v2107
        %2193 = vst [vmem:[%s690 + $0x28] sm:$0xff] %v2109
        %2194 = vst [vmem:[%s690 + $0x30] sm:$0xff] %v2184
        %2195 = vst [vmem:[%s690 + $0x38] sm:$0xff] %v2186
        %v2196 = vcombine.low %v1724, %v1763
        %v2197 = vcombine.low %v1802, %v1841
        %v2199 = vunpack.c.l.s4 1966171168
        %v2200 = vunpack.c.0.s8 %v2199
        %v2201 = vlaneseq
        %v2202 = vshrl.u32 %v2201, 7
        %v2203 = vsub.s32 %v2200, %v2202
        %v2204 = vrot.slane %v2196, %v2203
        %v2206 = vunpack.c.l.s4 1966171168
        %v2207 = vunpack.c.0.s8 %v2206
        %v2208 = vlaneseq
        %v2209 = vshrl.u32 %v2208, 7
        %v2210 = vsub.s32 %v2207, %v2209
        %v2211 = vrot.slane %v2197, %v2210
        %v2212 = vcombine.low %v2204, %v2211
        %v2214 = vunpack.c.l.s4 1966171168
        %v2215 = vunpack.c.0.s8 %v2214
        %v2216 = vlaneseq
        %v2217 = vshrl.u32 %v2216, 7
        %v2218 = vsub.s32 %v2215, %v2217
        %v2219 = vrot.slane %v2212, %v2218
        %v2220 = vlaneseq
        %vm2221 = vcmp.ge.s32.totalorder %v2220, 0
        %vm2222 = vcmp.lt.s32.totalorder %v2220, 512
        %vm2223 = vmand %vm2221, %vm2222
        %2224 = vst.msk [vmem:[%s696] sm:$0xf] %vm2223, %v2219
        %s2225 = smul.u32 %s19, 512
        %v2226 = vlaneseq
        %v2227 = vand.u32 %v2226, 127
        %v2228 = vadd.s32 %v2227, 128
        %v2229 = vadd.s32 %v2227, 256
        %v2230 = vadd.s32 %v2227, 384
        %v2231 = vstv %s2225
        %v2232 = vadd.s32 %v2231, %v2227
        %v2233 = vadd.s32 %v2231, %v2228
        %v2234 = vadd.s32 %v2231, %v2229
        %v2235 = vadd.s32 %v2231, %v2230
        %vm2236 = vcmp.lt.s32.totalorder %v2232, 800
        %vm2237 = vcmp.lt.s32.totalorder %v2233, 800
        %vm2238 = vcmp.lt.s32.totalorder %v2234, 800
        %vm2239 = vcmp.lt.s32.totalorder %v2235, 800
        %v2240 = vsub.f32 %v2101, %v736
        %v2241 = vsub.f32 %v2103, %v737
        %v2242 = vsub.f32 %v2178, %v738
        %v2243 = vsub.f32 %v2180, %v739
        %v2244 = vsub.f32 %v2107, %v740
        %v2245 = vsub.f32 %v2109, %v741
        %v2246 = vsub.f32 %v2184, %v742
        %v2247 = vsub.f32 %v2186, %v743
        %v2248 = vsel %vm2236, 1, 0
        %v2249 = vsel %vm2237, 1, 0
        %v2250 = vsel %vm2238, 1, 0
        %v2251 = vsel %vm2239, 1, 0
        %vm2252 = vcmp.eq.s32.totalorder %v2248, 1
        %vm2253 = vcmp.eq.s32.totalorder %v2249, 1
        %vm2254 = vcmp.eq.s32.totalorder %v2250, 1
        %vm2255 = vcmp.eq.s32.totalorder %v2251, 1
        %v2256 = vsel %vm2252, %v2240, 0.0
        %v2257 = vsel %vm2253, %v2241, 0.0
        %v2258 = vsel %vm2254, %v2242, 0.0
        %v2259 = vsel %vm2255, %v2243, 0.0
        %v2260 = vsel %vm2252, %v2244, 0.0
        %v2261 = vsel %vm2253, %v2245, 0.0
        %v2262 = vsel %vm2254, %v2246, 0.0
        %v2263 = vsel %vm2255, %v2247, 0.0
        %v2264 = vmul.f32 %v2256, %v2256
        %v2265 = vmul.f32 %v2257, %v2257
        %v2266 = vmul.f32 %v2258, %v2258
        %v2267 = vmul.f32 %v2259, %v2259
        %v2268 = vmul.f32 %v2260, %v2260
        %v2269 = vmul.f32 %v2261, %v2261
        %v2270 = vmul.f32 %v2262, %v2262
        %v2271 = vmul.f32 %v2263, %v2263
        %v2272 = vadd.f32 %v2264, %v2265
        %v2273 = vadd.f32 %v2272, %v2266
        %v2274 = vadd.f32 %v2273, %v2267
        %2275 = vadd.xlane.f32.xlu0 %v2274
        %v2276 = vpop.xlane.xlu0 %2275
        %v2277 = vadd.f32 %v2268, %v2269
        %v2278 = vadd.f32 %v2277, %v2270
        %v2279 = vadd.f32 %v2278, %v2271
        %2280 = vadd.xlane.f32.xlu0 %v2279
        %v2281 = vpop.xlane.xlu0 %2280
        %vm2282 = vcmask 7168
        %2283 = vst.msk [vmem:[%s730] sm:$0xff] %vm2282, %v2276
        %2284 = vst.msk [vmem:[%s730 + $0x8] sm:$0xff] %vm2282, %v2281
        %v2285 = vsel %vm2252, %v1970, 0.0
        %v2286 = vsel %vm2253, %v1971, 0.0
        %v2287 = vsel %vm2254, %v1972, 0.0
        %v2288 = vsel %vm2255, %v1973, 0.0
        %v2289 = vsel %vm2252, %v1974, 0.0
        %v2290 = vsel %vm2253, %v1975, 0.0
        %v2291 = vsel %vm2254, %v1976, 0.0
        %v2292 = vsel %vm2255, %v1977, 0.0
        %v2293 = vsel %vm2252, %v1978, 0.0
        %v2294 = vsel %vm2253, %v1979, 0.0
        %v2295 = vsel %vm2254, %v1980, 0.0
        %v2296 = vsel %vm2255, %v1981, 0.0
        %v2297 = vsel %vm2252, %v1982, 0.0
        %v2298 = vsel %vm2253, %v1983, 0.0
        %v2299 = vsel %vm2254, %v1984, 0.0
        %v2300 = vsel %vm2255, %v1985, 0.0
        %v2301 = vsel %vm2252, %v1986, 0.0
        %v2302 = vsel %vm2253, %v1987, 0.0
        %v2303 = vsel %vm2254, %v1988, 0.0
        %v2304 = vsel %vm2255, %v1989, 0.0
        %v2305 = vsel %vm2252, %v1990, 0.0
        %v2306 = vsel %vm2253, %v1991, 0.0
        %v2307 = vsel %vm2254, %v1992, 0.0
        %v2308 = vsel %vm2255, %v1993, 0.0
        %v2309 = vsel %vm2252, %v1994, 0.0
        %v2310 = vsel %vm2253, %v1995, 0.0
        %v2311 = vsel %vm2254, %v1996, 0.0
        %v2312 = vsel %vm2255, %v1997, 0.0
        %v2313 = vsel %vm2252, %v1998, 0.0
        %v2314 = vsel %vm2253, %v1999, 0.0
        %v2315 = vsel %vm2254, %v2000, 0.0
        %v2316 = vsel %vm2255, %v2001, 0.0
        %v2317 = vsel %vm2252, %v2002, 0.0
        %v2318 = vsel %vm2253, %v2003, 0.0
        %v2319 = vsel %vm2254, %v2004, 0.0
        %v2320 = vsel %vm2255, %v2005, 0.0
        %v2321 = vsel %vm2252, %v2006, 0.0
        %v2322 = vsel %vm2253, %v2007, 0.0
        %v2323 = vsel %vm2254, %v2008, 0.0
        %v2324 = vsel %vm2255, %v2009, 0.0
        %v2325 = vsel %vm2252, %v2010, 0.0
        %v2326 = vsel %vm2253, %v2011, 0.0
        %v2327 = vsel %vm2254, %v2012, 0.0
        %v2328 = vsel %vm2255, %v2013, 0.0
        %v2329 = vsel %vm2252, %v2014, 0.0
        %v2330 = vsel %vm2253, %v2015, 0.0
        %v2331 = vsel %vm2254, %v2016, 0.0
        %v2332 = vsel %vm2255, %v2017, 0.0
        %v2333 = vsel %vm2252, %v2018, 0.0
        %v2334 = vsel %vm2253, %v2019, 0.0
        %v2335 = vsel %vm2254, %v2020, 0.0
        %v2336 = vsel %vm2255, %v2021, 0.0
        %v2337 = vsel %vm2252, %v2022, 0.0
        %v2338 = vsel %vm2253, %v2023, 0.0
        %v2339 = vsel %vm2254, %v2024, 0.0
        %v2340 = vsel %vm2255, %v2025, 0.0
        %v2341 = vsel %vm2252, %v2026, 0.0
        %v2342 = vsel %vm2253, %v2027, 0.0
        %v2343 = vsel %vm2254, %v2028, 0.0
        %v2344 = vsel %vm2255, %v2029, 0.0
        %v2345 = vsel %vm2252, %v2030, 0.0
        %v2346 = vsel %vm2253, %v2031, 0.0
        %v2347 = vsel %vm2254, %v2032, 0.0
        %v2348 = vsel %vm2255, %v2033, 0.0
        %v2349 = vadd.f32 %v2285, %v2286
        %v2350 = vadd.f32 %v2349, %v2287
        %v2351 = vadd.f32 %v2350, %v2288
        %2352 = vadd.xlane.f32.xlu0 %v2351
        %v2353 = vpop.xlane.xlu0 %2352
        %v2354 = vadd.f32 %v2289, %v2290
        %v2355 = vadd.f32 %v2354, %v2291
        %v2356 = vadd.f32 %v2355, %v2292
        %2357 = vadd.xlane.f32.xlu0 %v2356
        %v2358 = vpop.xlane.xlu0 %2357
        %v2359 = vadd.f32 %v2293, %v2294
        %v2360 = vadd.f32 %v2359, %v2295
        %v2361 = vadd.f32 %v2360, %v2296
        %2362 = vadd.xlane.f32.xlu0 %v2361
        %v2363 = vpop.xlane.xlu0 %2362
        %v2364 = vadd.f32 %v2297, %v2298
        %v2365 = vadd.f32 %v2364, %v2299
        %v2366 = vadd.f32 %v2365, %v2300
        %2367 = vadd.xlane.f32.xlu0 %v2366
        %v2368 = vpop.xlane.xlu0 %2367
        %v2369 = vadd.f32 %v2301, %v2302
        %v2370 = vadd.f32 %v2369, %v2303
        %v2371 = vadd.f32 %v2370, %v2304
        %2372 = vadd.xlane.f32.xlu0 %v2371
        %v2373 = vpop.xlane.xlu0 %2372
        %v2374 = vadd.f32 %v2305, %v2306
        %v2375 = vadd.f32 %v2374, %v2307
        %v2376 = vadd.f32 %v2375, %v2308
        %2377 = vadd.xlane.f32.xlu0 %v2376
        %v2378 = vpop.xlane.xlu0 %2377
        %v2379 = vadd.f32 %v2309, %v2310
        %v2380 = vadd.f32 %v2379, %v2311
        %v2381 = vadd.f32 %v2380, %v2312
        %2382 = vadd.xlane.f32.xlu0 %v2381
        %v2383 = vpop.xlane.xlu0 %2382
        %v2384 = vadd.f32 %v2313, %v2314
        %v2385 = vadd.f32 %v2384, %v2315
        %v2386 = vadd.f32 %v2385, %v2316
        %2387 = vadd.xlane.f32.xlu0 %v2386
        %v2388 = vpop.xlane.xlu0 %2387
        %v2389 = vadd.f32 %v2317, %v2318
        %v2390 = vadd.f32 %v2389, %v2319
        %v2391 = vadd.f32 %v2390, %v2320
        %2392 = vadd.xlane.f32.xlu0 %v2391
        %v2393 = vpop.xlane.xlu0 %2392
        %v2394 = vadd.f32 %v2321, %v2322
        %v2395 = vadd.f32 %v2394, %v2323
        %v2396 = vadd.f32 %v2395, %v2324
        %2397 = vadd.xlane.f32.xlu0 %v2396
        %v2398 = vpop.xlane.xlu0 %2397
        %v2399 = vadd.f32 %v2325, %v2326
        %v2400 = vadd.f32 %v2399, %v2327
        %v2401 = vadd.f32 %v2400, %v2328
        %2402 = vadd.xlane.f32.xlu0 %v2401
        %v2403 = vpop.xlane.xlu0 %2402
        %v2404 = vadd.f32 %v2329, %v2330
        %v2405 = vadd.f32 %v2404, %v2331
        %v2406 = vadd.f32 %v2405, %v2332
        %2407 = vadd.xlane.f32.xlu0 %v2406
        %v2408 = vpop.xlane.xlu0 %2407
        %v2409 = vadd.f32 %v2333, %v2334
        %v2410 = vadd.f32 %v2409, %v2335
        %v2411 = vadd.f32 %v2410, %v2336
        %2412 = vadd.xlane.f32.xlu0 %v2411
        %v2413 = vpop.xlane.xlu0 %2412
        %v2414 = vadd.f32 %v2337, %v2338
        %v2415 = vadd.f32 %v2414, %v2339
        %v2416 = vadd.f32 %v2415, %v2340
        %2417 = vadd.xlane.f32.xlu0 %v2416
        %v2418 = vpop.xlane.xlu0 %2417
        %v2419 = vadd.f32 %v2341, %v2342
        %v2420 = vadd.f32 %v2419, %v2343
        %v2421 = vadd.f32 %v2420, %v2344
        %2422 = vadd.xlane.f32.xlu0 %v2421
        %v2423 = vpop.xlane.xlu0 %2422
        %v2424 = vadd.f32 %v2345, %v2346
        %v2425 = vadd.f32 %v2424, %v2347
        %v2426 = vadd.f32 %v2425, %v2348
        %2427 = vadd.xlane.f32.xlu0 %v2426
        %v2428 = vpop.xlane.xlu0 %2427
        %2429 = vst.msk [vmem:[%s735] sm:$0xff] %vm2282, %v2353
        %2430 = vst.msk [vmem:[%s735 + $0x8] sm:$0xff] %vm2282, %v2358
        %2431 = vst.msk [vmem:[%s735 + $0x10] sm:$0xff] %vm2282, %v2363
        %2432 = vst.msk [vmem:[%s735 + $0x18] sm:$0xff] %vm2282, %v2368
        %2433 = vst.msk [vmem:[%s735 + $0x20] sm:$0xff] %vm2282, %v2373
        %2434 = vst.msk [vmem:[%s735 + $0x28] sm:$0xff] %vm2282, %v2378
        %2435 = vst.msk [vmem:[%s735 + $0x30] sm:$0xff] %vm2282, %v2383
        %2436 = vst.msk [vmem:[%s735 + $0x38] sm:$0xff] %vm2282, %v2388
        %2437 = vst.msk [vmem:[%s735 + $0x40] sm:$0xff] %vm2282, %v2393
        %2438 = vst.msk [vmem:[%s735 + $0x48] sm:$0xff] %vm2282, %v2398
        %2439 = vst.msk [vmem:[%s735 + $0x50] sm:$0xff] %vm2282, %v2403
        %2440 = vst.msk [vmem:[%s735 + $0x58] sm:$0xff] %vm2282, %v2408
        %2441 = vst.msk [vmem:[%s735 + $0x60] sm:$0xff] %vm2282, %v2413
        %2442 = vst.msk [vmem:[%s735 + $0x68] sm:$0xff] %vm2282, %v2418
        %2443 = vst.msk [vmem:[%s735 + $0x70] sm:$0xff] %vm2282, %v2423
        %2444 = vst.msk [vmem:[%s735 + $0x78] sm:$0xff] %vm2282, %v2428
        %s2445 = sand.u32 %s116, 1
        %s2446 = sand.u32 %s116, 1
        %s2447 = smul.addr %s2446, 64
        %s2448 = scalar_lea.vmem [#allocation3], %s2447
        %s2449 = sand.u32 %s142, 1
        %s2450 = sand.u32 %s142, 1
        %s2451 = smul.addr %s2450, 4
        %s2452 = scalar_lea.vmem [#allocation4], %s2451
        %p2453 = scmp.lt.s32.totalorder %s19, 1
        %s2454 = scalar_select %p2453, %s19, 1
        %s2455 = smul.addr %s2454, 2
        %s2456 = smul.addr %s2455, 8
        %s2457 = scalar_lea.vmem %s6, %s2456
        %p2458 = scmp.lt.s32.totalorder %s19, 1
        %s2459 = scalar_select %p2458, %s19, 1
        %s2460 = smul.addr %s2459, 16
        %s2461 = smul.addr %s2460, 8
        %s2462 = scalar_lea.vmem %s7, %s2461
        // Predicated region
        $region103: #{vq_forward.1} parent=97 // pred_check
          %p2463 = pneg %p126
        $region104: #{vq_forward.1} parent=97 // pred_check_branch
          %2465 = sbr.rel (%p2463) target = $region106
        $region105: #{vq_forward.1} parent=97 // pred_region
          %s2466 = smul.u32 4, %s19
          %s2467 = ssub.s32 7, %s2466
          %p2468 = scmp.lt.s32.totalorder %s2467, 4
          %s2469 = scalar_select %p2468, %s2467, 4
          %s2470 = smul.u32 256, %s2469
          %p2471 = scmp.ne.s32.totalorder 0, %s2470
          %s2472 = smul.addr %s2466, 8
          %s2473 = scalar_lea.vmem %s4, %s2472
          %s2474 = smul.u32 %s2469, 8
          // Predicated region
          $region107: #{vq_forward.1} parent=105 // pred_check
            %p2475 = pneg %p2471
          $region108: #{vq_forward.1} parent=105 // pred_check_branch
            %2477 = sbr.rel (%p2475) target = $region110
          $region109: #{vq_forward.1} parent=105 // pred_region
            %p2478 = scmp.lt.u32.totalorder %s2474, 8
            %p2479 = pneg %p2478
            // Predicated region
            $region111: #{vq_forward.1} parent=109 // pred_check
              _
            $region112: #{vq_forward.1} parent=109 // pred_check_branch
              %2481 = sbr.rel (%p2478) target = $region114
            $region113: #{vq_forward.1} parent=109 // pred_region
              %s2498 = sand.u32 %s2474, 7
              %p2499 = scmp.eq.s32.totalorder %s2498, 0
              // Predicated region
              $region126: #{vq_forward.1} parent=113 // pred_check
                %p2500 = pneg %p2499
              $region127: #{vq_forward.1} parent=113 // pred_check_branch
                %2502 = sbr.rel (%p2500) target = $region129
              $region128: #{vq_forward.1} parent=113 // pred_region
                %s2503 = sshrl.u32 %s2474, 3
                %s2504 = sshrl.u32 %s2503, 5
                // While loop
                $region130: #{vq_forward.1} parent=128 // loop_pre_header
                  _
                $region131: #{vq_forward.1} parent=128 // loop_header
                  %s2508 = sphi 0, %s2510
                  %p2509 = scmp.ge.s32.totalorder %s2508, %s2504
                  %s2513 = sphi 0, %s2646
                  %s2514 = sphi %s2448, %s2649
                  %s2515 = sphi %s2473, %s2650
                $region132: #{vq_forward.1} parent=128 // loop_header_branch
                  %2512 = sbr.rel (%p2509) target = $region136
                $region133: #{vq_forward.1} parent=128 // loop_body
                  %v2516 = vld [vmem:[%s2514] sm:$0xff]
                  %2517 = vst [vmem:[%s2515] sm:$0xff] %v2516
                  %v2518 = vld [vmem:[%s2514 + $0x8] sm:$0xff]
                  %2519 = vst [vmem:[%s2515 + $0x8] sm:$0xff] %v2518
                  %v2520 = vld [vmem:[%s2514 + $0x10] sm:$0xff]
                  %2521 = vst [vmem:[%s2515 + $0x10] sm:$0xff] %v2520
                  %v2522 = vld [vmem:[%s2514 + $0x18] sm:$0xff]
                  %2523 = vst [vmem:[%s2515 + $0x18] sm:$0xff] %v2522
                  %v2524 = vld [vmem:[%s2514 + $0x20] sm:$0xff]
                  %2525 = vst [vmem:[%s2515 + $0x20] sm:$0xff] %v2524
                  %v2526 = vld [vmem:[%s2514 + $0x28] sm:$0xff]
                  %2527 = vst [vmem:[%s2515 + $0x28] sm:$0xff] %v2526
                  %v2528 = vld [vmem:[%s2514 + $0x30] sm:$0xff]
                  %2529 = vst [vmem:[%s2515 + $0x30] sm:$0xff] %v2528
                  %v2530 = vld [vmem:[%s2514 + $0x38] sm:$0xff]
                  %2531 = vst [vmem:[%s2515 + $0x38] sm:$0xff] %v2530
                  %v2532 = vld [vmem:[%s2514 + $0x40] sm:$0xff]
                  %2533 = vst [vmem:[%s2515 + $0x40] sm:$0xff] %v2532
                  %v2534 = vld [vmem:[%s2514 + $0x48] sm:$0xff]
                  %2535 = vst [vmem:[%s2515 + $0x48] sm:$0xff] %v2534
                  %v2536 = vld [vmem:[%s2514 + $0x50] sm:$0xff]
                  %2537 = vst [vmem:[%s2515 + $0x50] sm:$0xff] %v2536
                  %v2538 = vld [vmem:[%s2514 + $0x58] sm:$0xff]
                  %2539 = vst [vmem:[%s2515 + $0x58] sm:$0xff] %v2538
                  %v2540 = vld [vmem:[%s2514 + $0x60] sm:$0xff]
                  %2541 = vst [vmem:[%s2515 + $0x60] sm:$0xff] %v2540
                  %v2542 = vld [vmem:[%s2514 + $0x68] sm:$0xff]
                  %2543 = vst [vmem:[%s2515 + $0x68] sm:$0xff] %v2542
                  %v2544 = vld [vmem:[%s2514 + $0x70] sm:$0xff]
                  %2545 = vst [vmem:[%s2515 + $0x70] sm:$0xff] %v2544
                  %v2546 = vld [vmem:[%s2514 + $0x78] sm:$0xff]
                  %2547 = vst [vmem:[%s2515 + $0x78] sm:$0xff] %v2546
                  %v2548 = vld [vmem:[%s2514 + $0x80] sm:$0xff]
                  %2549 = vst [vmem:[%s2515 + $0x80] sm:$0xff] %v2548
                  %v2550 = vld [vmem:[%s2514 + $0x88] sm:$0xff]
                  %2551 = vst [vmem:[%s2515 + $0x88] sm:$0xff] %v2550
                  %v2552 = vld [vmem:[%s2514 + $0x90] sm:$0xff]
                  %2553 = vst [vmem:[%s2515 + $0x90] sm:$0xff] %v2552
                  %v2554 = vld [vmem:[%s2514 + $0x98] sm:$0xff]
                  %2555 = vst [vmem:[%s2515 + $0x98] sm:$0xff] %v2554
                  %v2556 = vld [vmem:[%s2514 + $0xa0] sm:$0xff]
                  %2557 = vst [vmem:[%s2515 + $0xa0] sm:$0xff] %v2556
                  %v2558 = vld [vmem:[%s2514 + $0xa8] sm:$0xff]
                  %2559 = vst [vmem:[%s2515 + $0xa8] sm:$0xff] %v2558
                  %v2560 = vld [vmem:[%s2514 + $0xb0] sm:$0xff]
                  %2561 = vst [vmem:[%s2515 + $0xb0] sm:$0xff] %v2560
                  %v2562 = vld [vmem:[%s2514 + $0xb8] sm:$0xff]
                  %2563 = vst [vmem:[%s2515 + $0xb8] sm:$0xff] %v2562
                  %v2564 = vld [vmem:[%s2514 + $0xc0] sm:$0xff]
                  %2565 = vst [vmem:[%s2515 + $0xc0] sm:$0xff] %v2564
                  %v2566 = vld [vmem:[%s2514 + $0xc8] sm:$0xff]
                  %2567 = vst [vmem:[%s2515 + $0xc8] sm:$0xff] %v2566
                  %v2568 = vld [vmem:[%s2514 + $0xd0] sm:$0xff]
                  %2569 = vst [vmem:[%s2515 + $0xd0] sm:$0xff] %v2568
                  %v2570 = vld [vmem:[%s2514 + $0xd8] sm:$0xff]
                  %2571 = vst [vmem:[%s2515 + $0xd8] sm:$0xff] %v2570
                  %v2572 = vld [vmem:[%s2514 + $0xe0] sm:$0xff]
                  %2573 = vst [vmem:[%s2515 + $0xe0] sm:$0xff] %v2572
                  %v2574 = vld [vmem:[%s2514 + $0xe8] sm:$0xff]
                  %2575 = vst [vmem:[%s2515 + $0xe8] sm:$0xff] %v2574
                  %v2576 = vld [vmem:[%s2514 + $0xf0] sm:$0xff]
                  %2577 = vst [vmem:[%s2515 + $0xf0] sm:$0xff] %v2576
                  %v2578 = vld [vmem:[%s2514 + $0xf8] sm:$0xff]
                  %2579 = vst [vmem:[%s2515 + $0xf8] sm:$0xff] %v2578
                  %v2580 = vld [vmem:[%s2514 + $0x20] sm:$0xff]
                  %2581 = vst [vmem:[%s2515 + $0x38] sm:$0xff] %v2580
                  %v2582 = vld [vmem:[%s2514 + $0x28] sm:$0xff]
                  %2583 = vst [vmem:[%s2515 + $0x40] sm:$0xff] %v2582
                  %v2584 = vld [vmem:[%s2514 + $0x30] sm:$0xff]
                  %2585 = vst [vmem:[%s2515 + $0x48] sm:$0xff] %v2584
                  %v2586 = vld [vmem:[%s2514 + $0x38] sm:$0xff]
                  %2587 = vst [vmem:[%s2515 + $0x50] sm:$0xff] %v2586
                  %v2588 = vld [vmem:[%s2514 + $0x40] sm:$0xff]
                  %2589 = vst [vmem:[%s2515 + $0x58] sm:$0xff] %v2588
                  %v2590 = vld [vmem:[%s2514 + $0x48] sm:$0xff]
                  %2591 = vst [vmem:[%s2515 + $0x60] sm:$0xff] %v2590
                  %v2592 = vld [vmem:[%s2514 + $0x50] sm:$0xff]
                  %2593 = vst [vmem:[%s2515 + $0x68] sm:$0xff] %v2592
                  %v2594 = vld [vmem:[%s2514 + $0x58] sm:$0xff]
                  %2595 = vst [vmem:[%s2515 + $0x70] sm:$0xff] %v2594
                  %v2596 = vld [vmem:[%s2514 + $0x60] sm:$0xff]
                  %2597 = vst [vmem:[%s2515 + $0x78] sm:$0xff] %v2596
                  %v2598 = vld [vmem:[%s2514 + $0x68] sm:$0xff]
                  %2599 = vst [vmem:[%s2515 + $0x80] sm:$0xff] %v2598
                  %v2600 = vld [vmem:[%s2514 + $0x70] sm:$0xff]
                  %2601 = vst [vmem:[%s2515 + $0x88] sm:$0xff] %v2600
                  %v2602 = vld [vmem:[%s2514 + $0x78] sm:$0xff]
                  %2603 = vst [vmem:[%s2515 + $0x90] sm:$0xff] %v2602
                  %v2604 = vld [vmem:[%s2514 + $0x80] sm:$0xff]
                  %2605 = vst [vmem:[%s2515 + $0x98] sm:$0xff] %v2604
                  %v2606 = vld [vmem:[%s2514 + $0x88] sm:$0xff]
                  %2607 = vst [vmem:[%s2515 + $0xa0] sm:$0xff] %v2606
                  %v2608 = vld [vmem:[%s2514 + $0x90] sm:$0xff]
                  %2609 = vst [vmem:[%s2515 + $0xa8] sm:$0xff] %v2608
                  %v2610 = vld [vmem:[%s2514 + $0x98] sm:$0xff]
                  %2611 = vst [vmem:[%s2515 + $0xb0] sm:$0xff] %v2610
                  %v2612 = vld [vmem:[%s2514 + $0xa0] sm:$0xff]
                  %2613 = vst [vmem:[%s2515 + $0xb8] sm:$0xff] %v2612
                  %v2614 = vld [vmem:[%s2514 + $0xa8] sm:$0xff]
                  %2615 = vst [vmem:[%s2515 + $0xc0] sm:$0xff] %v2614
                  %v2616 = vld [vmem:[%s2514 + $0xb0] sm:$0xff]
                  %2617 = vst [vmem:[%s2515 + $0xc8] sm:$0xff] %v2616
                  %v2618 = vld [vmem:[%s2514 + $0xb8] sm:$0xff]
                  %2619 = vst [vmem:[%s2515 + $0xd0] sm:$0xff] %v2618
                  %v2620 = vld [vmem:[%s2514 + $0xc0] sm:$0xff]
                  %2621 = vst [vmem:[%s2515 + $0xd8] sm:$0xff] %v2620
                  %v2622 = vld [vmem:[%s2514 + $0xc8] sm:$0xff]
                  %2623 = vst [vmem:[%s2515 + $0xe0] sm:$0xff] %v2622
                  %v2624 = vld [vmem:[%s2514 + $0xd0] sm:$0xff]
                  %2625 = vst [vmem:[%s2515 + $0xe8] sm:$0xff] %v2624
                  %v2626 = vld [vmem:[%s2514 + $0xd8] sm:$0xff]
                  %2627 = vst [vmem:[%s2515 + $0xf0] sm:$0xff] %v2626
                  %v2628 = vld [vmem:[%s2514 + $0xe0] sm:$0xff]
                  %2629 = vst [vmem:[%s2515 + $0xf8] sm:$0xff] %v2628
                  %v2630 = vld [vmem:[%s2514 + $0xe8] sm:$0xff]
                  %2631 = vst [vmem:[%s2515 + $0x100] sm:$0xff] %v2630
                  %v2632 = vld [vmem:[%s2514 + $0xf0] sm:$0xff]
                  %2633 = vst [vmem:[%s2515 + $0x108] sm:$0xff] %v2632
                  %v2634 = vld [vmem:[%s2514 + $0xf8] sm:$0xff]
                  %2635 = vst [vmem:[%s2515 + $0x110] sm:$0xff] %v2634
                  %v2636 = vld [vmem:[%s2514 + $0x100] sm:$0xff]
                  %2637 = vst [vmem:[%s2515 + $0x118] sm:$0xff] %v2636
                  %v2638 = vld [vmem:[%s2514 + $0x108] sm:$0xff]
                  %2639 = vst [vmem:[%s2515 + $0x120] sm:$0xff] %v2638
                  %v2640 = vld [vmem:[%s2514 + $0x110] sm:$0xff]
                  %2641 = vst [vmem:[%s2515 + $0x128] sm:$0xff] %v2640
                  %v2642 = vld [vmem:[%s2514 + $0x118] sm:$0xff]
                  %2643 = vst [vmem:[%s2515 + $0x130] sm:$0xff] %v2642
                  %s2644 = sadd.s32 1, %s2513
                  %p2645 = scmp.ge.s32.totalorder %s2644, %s2504
                  %s2646 = scalar_select %p2645, 0, %s2644
                  %s2647 = smul.u32 %s2646, 256
                  %s2648 = smul.u32 %s2646, 256
                  %s2649 = scalar_lea.vmem %s2448, %s2647 [#allocation3]
                  %s2650 = scalar_lea.vmem %s2473, %s2648
                $region134: #{vq_forward.1} parent=128 // loop_footer
                  %s2510 = sadd.s32 %s2508, 1
                $region135: #{vq_forward.1} parent=128 // loop_footer_branch
                  %2507 = sbr.rel target = $region131
                $region136: #{vq_forward.1} parent=128 // loop_exit
                  _
                %s2651 = sshrl.u32 %s2503, 5
                %s2652 = sand.u32 %s2503, 31
                %s2653 = smul.u32 %s2651, 32
                %s2654 = smul.u32 128, %s2653
                %s2655 = sshra.s32 %s2654, 4
                %s2656 = scalar_lea.vmem %s2448, %s2655 [#allocation3]
                %s2657 = smul.u32 128, %s2653
                %s2658 = sshra.s32 %s2657, 4
                %s2659 = scalar_lea.vmem %s2473, %s2658
                // While loop
                $region137: #{vq_forward.1} parent=128 // loop_pre_header
                  _
                $region138: #{vq_forward.1} parent=128 // loop_header
                  %s2663 = sphi 0, %s2665
                  %p2664 = scmp.ge.s32.totalorder %s2663, %s2652
                  %s2668 = sphi 0, %s2677
                  %s2669 = sphi %s2656, %s2680
                  %s2670 = sphi %s2659, %s2681
                $region139: #{vq_forward.1} parent=128 // loop_header_branch
                  %2667 = sbr.rel (%p2664) target = $region143
                $region140: #{vq_forward.1} parent=128 // loop_body
                  %v2671 = vld [vmem:[%s2669] sm:$0xff]
                  %2672 = vst [vmem:[%s2670] sm:$0xff] %v2671
                  %v2673 = vld [vmem:[%s2669 + $0x20] sm:$0xff]
                  %2674 = vst [vmem:[%s2670 + $0x38] sm:$0xff] %v2673
                  %s2675 = sadd.s32 1, %s2668
                  %p2676 = scmp.ge.s32.totalorder %s2675, %s2652
                  %s2677 = scalar_select %p2676, 0, %s2675
                  %s2678 = smul.u32 %s2677, 8
                  %s2679 = smul.u32 %s2677, 8
                  %s2680 = scalar_lea.vmem %s2656, %s2678 [#allocation3]
                  %s2681 = scalar_lea.vmem %s2659, %s2679
                $region141: #{vq_forward.1} parent=128 // loop_footer
                  %s2665 = sadd.s32 %s2663, 1
                $region142: #{vq_forward.1} parent=128 // loop_footer_branch
                  %2662 = sbr.rel target = $region138
                $region143: #{vq_forward.1} parent=128 // loop_exit
                  _
              $region129: #{vq_forward.1} parent=113 // pred_fallthru
                _
              %p2682 = pneg %p2499
              // Predicated region
              $region144: #{vq_forward.1} parent=113 // pred_check
                _
              $region145: #{vq_forward.1} parent=113 // pred_check_branch
                %2684 = sbr.rel (%p2499) target = $region147
              $region146: #{vq_forward.1} parent=113 // pred_region
                %s2685 = sand.u32 %s2474, 7
                %s2686 = ssub.s32 %s2474, %s2685
                %s2687 = scalar_lea.vmem %s2448, %s2686 [#allocation3]
                %s2688 = ssub.s32 %s2474, %s2685
                %s2689 = scalar_lea.vmem %s2473, %s2688
                %s2690 = sshrl.u32 %s2474, 3
                %s2691 = sshrl.u32 %s2690, 5
                // While loop
                $region148: #{vq_forward.1} parent=146 // loop_pre_header
                  _
                $region149: #{vq_forward.1} parent=146 // loop_header
                  %s2695 = sphi 0, %s2697
                  %p2696 = scmp.ge.s32.totalorder %s2695, %s2691
                  %s2700 = sphi 0, %s2833
                  %s2701 = sphi %s2448, %s2836
                  %s2702 = sphi %s2473, %s2837
                $region150: #{vq_forward.1} parent=146 // loop_header_branch
                  %2699 = sbr.rel (%p2696) target = $region154
                $region151: #{vq_forward.1} parent=146 // loop_body
                  %v2703 = vld [vmem:[%s2701] sm:$0xff]
                  %2704 = vst [vmem:[%s2702] sm:$0xff] %v2703
                  %v2705 = vld [vmem:[%s2701 + $0x8] sm:$0xff]
                  %2706 = vst [vmem:[%s2702 + $0x8] sm:$0xff] %v2705
                  %v2707 = vld [vmem:[%s2701 + $0x10] sm:$0xff]
                  %2708 = vst [vmem:[%s2702 + $0x10] sm:$0xff] %v2707
                  %v2709 = vld [vmem:[%s2701 + $0x18] sm:$0xff]
                  %2710 = vst [vmem:[%s2702 + $0x18] sm:$0xff] %v2709
                  %v2711 = vld [vmem:[%s2701 + $0x20] sm:$0xff]
                  %2712 = vst [vmem:[%s2702 + $0x20] sm:$0xff] %v2711
                  %v2713 = vld [vmem:[%s2701 + $0x28] sm:$0xff]
                  %2714 = vst [vmem:[%s2702 + $0x28] sm:$0xff] %v2713
                  %v2715 = vld [vmem:[%s2701 + $0x30] sm:$0xff]
                  %2716 = vst [vmem:[%s2702 + $0x30] sm:$0xff] %v2715
                  %v2717 = vld [vmem:[%s2701 + $0x38] sm:$0xff]
                  %2718 = vst [vmem:[%s2702 + $0x38] sm:$0xff] %v2717
                  %v2719 = vld [vmem:[%s2701 + $0x40] sm:$0xff]
                  %2720 = vst [vmem:[%s2702 + $0x40] sm:$0xff] %v2719
                  %v2721 = vld [vmem:[%s2701 + $0x48] sm:$0xff]
                  %2722 = vst [vmem:[%s2702 + $0x48] sm:$0xff] %v2721
                  %v2723 = vld [vmem:[%s2701 + $0x50] sm:$0xff]
                  %2724 = vst [vmem:[%s2702 + $0x50] sm:$0xff] %v2723
                  %v2725 = vld [vmem:[%s2701 + $0x58] sm:$0xff]
                  %2726 = vst [vmem:[%s2702 + $0x58] sm:$0xff] %v2725
                  %v2727 = vld [vmem:[%s2701 + $0x60] sm:$0xff]
                  %2728 = vst [vmem:[%s2702 + $0x60] sm:$0xff] %v2727
                  %v2729 = vld [vmem:[%s2701 + $0x68] sm:$0xff]
                  %2730 = vst [vmem:[%s2702 + $0x68] sm:$0xff] %v2729
                  %v2731 = vld [vmem:[%s2701 + $0x70] sm:$0xff]
                  %2732 = vst [vmem:[%s2702 + $0x70] sm:$0xff] %v2731
                  %v2733 = vld [vmem:[%s2701 + $0x78] sm:$0xff]
                  %2734 = vst [vmem:[%s2702 + $0x78] sm:$0xff] %v2733
                  %v2735 = vld [vmem:[%s2701 + $0x80] sm:$0xff]
                  %2736 = vst [vmem:[%s2702 + $0x80] sm:$0xff] %v2735
                  %v2737 = vld [vmem:[%s2701 + $0x88] sm:$0xff]
                  %2738 = vst [vmem:[%s2702 + $0x88] sm:$0xff] %v2737
                  %v2739 = vld [vmem:[%s2701 + $0x90] sm:$0xff]
                  %2740 = vst [vmem:[%s2702 + $0x90] sm:$0xff] %v2739
                  %v2741 = vld [vmem:[%s2701 + $0x98] sm:$0xff]
                  %2742 = vst [vmem:[%s2702 + $0x98] sm:$0xff] %v2741
                  %v2743 = vld [vmem:[%s2701 + $0xa0] sm:$0xff]
                  %2744 = vst [vmem:[%s2702 + $0xa0] sm:$0xff] %v2743
                  %v2745 = vld [vmem:[%s2701 + $0xa8] sm:$0xff]
                  %2746 = vst [vmem:[%s2702 + $0xa8] sm:$0xff] %v2745
                  %v2747 = vld [vmem:[%s2701 + $0xb0] sm:$0xff]
                  %2748 = vst [vmem:[%s2702 + $0xb0] sm:$0xff] %v2747
                  %v2749 = vld [vmem:[%s2701 + $0xb8] sm:$0xff]
                  %2750 = vst [vmem:[%s2702 + $0xb8] sm:$0xff] %v2749
                  %v2751 = vld [vmem:[%s2701 + $0xc0] sm:$0xff]
                  %2752 = vst [vmem:[%s2702 + $0xc0] sm:$0xff] %v2751
                  %v2753 = vld [vmem:[%s2701 + $0xc8] sm:$0xff]
                  %2754 = vst [vmem:[%s2702 + $0xc8] sm:$0xff] %v2753
                  %v2755 = vld [vmem:[%s2701 + $0xd0] sm:$0xff]
                  %2756 = vst [vmem:[%s2702 + $0xd0] sm:$0xff] %v2755
                  %v2757 = vld [vmem:[%s2701 + $0xd8] sm:$0xff]
                  %2758 = vst [vmem:[%s2702 + $0xd8] sm:$0xff] %v2757
                  %v2759 = vld [vmem:[%s2701 + $0xe0] sm:$0xff]
                  %2760 = vst [vmem:[%s2702 + $0xe0] sm:$0xff] %v2759
                  %v2761 = vld [vmem:[%s2701 + $0xe8] sm:$0xff]
                  %2762 = vst [vmem:[%s2702 + $0xe8] sm:$0xff] %v2761
                  %v2763 = vld [vmem:[%s2701 + $0xf0] sm:$0xff]
                  %2764 = vst [vmem:[%s2702 + $0xf0] sm:$0xff] %v2763
                  %v2765 = vld [vmem:[%s2701 + $0xf8] sm:$0xff]
                  %2766 = vst [vmem:[%s2702 + $0xf8] sm:$0xff] %v2765
                  %v2767 = vld [vmem:[%s2701 + $0x20] sm:$0xff]
                  %2768 = vst [vmem:[%s2702 + $0x38] sm:$0xff] %v2767
                  %v2769 = vld [vmem:[%s2701 + $0x28] sm:$0xff]
                  %2770 = vst [vmem:[%s2702 + $0x40] sm:$0xff] %v2769
                  %v2771 = vld [vmem:[%s2701 + $0x30] sm:$0xff]
                  %2772 = vst [vmem:[%s2702 + $0x48] sm:$0xff] %v2771
                  %v2773 = vld [vmem:[%s2701 + $0x38] sm:$0xff]
                  %2774 = vst [vmem:[%s2702 + $0x50] sm:$0xff] %v2773
                  %v2775 = vld [vmem:[%s2701 + $0x40] sm:$0xff]
                  %2776 = vst [vmem:[%s2702 + $0x58] sm:$0xff] %v2775
                  %v2777 = vld [vmem:[%s2701 + $0x48] sm:$0xff]
                  %2778 = vst [vmem:[%s2702 + $0x60] sm:$0xff] %v2777
                  %v2779 = vld [vmem:[%s2701 + $0x50] sm:$0xff]
                  %2780 = vst [vmem:[%s2702 + $0x68] sm:$0xff] %v2779
                  %v2781 = vld [vmem:[%s2701 + $0x58] sm:$0xff]
                  %2782 = vst [vmem:[%s2702 + $0x70] sm:$0xff] %v2781
                  %v2783 = vld [vmem:[%s2701 + $0x60] sm:$0xff]
                  %2784 = vst [vmem:[%s2702 + $0x78] sm:$0xff] %v2783
                  %v2785 = vld [vmem:[%s2701 + $0x68] sm:$0xff]
                  %2786 = vst [vmem:[%s2702 + $0x80] sm:$0xff] %v2785
                  %v2787 = vld [vmem:[%s2701 + $0x70] sm:$0xff]
                  %2788 = vst [vmem:[%s2702 + $0x88] sm:$0xff] %v2787
                  %v2789 = vld [vmem:[%s2701 + $0x78] sm:$0xff]
                  %2790 = vst [vmem:[%s2702 + $0x90] sm:$0xff] %v2789
                  %v2791 = vld [vmem:[%s2701 + $0x80] sm:$0xff]
                  %2792 = vst [vmem:[%s2702 + $0x98] sm:$0xff] %v2791
                  %v2793 = vld [vmem:[%s2701 + $0x88] sm:$0xff]
                  %2794 = vst [vmem:[%s2702 + $0xa0] sm:$0xff] %v2793
                  %v2795 = vld [vmem:[%s2701 + $0x90] sm:$0xff]
                  %2796 = vst [vmem:[%s2702 + $0xa8] sm:$0xff] %v2795
                  %v2797 = vld [vmem:[%s2701 + $0x98] sm:$0xff]
                  %2798 = vst [vmem:[%s2702 + $0xb0] sm:$0xff] %v2797
                  %v2799 = vld [vmem:[%s2701 + $0xa0] sm:$0xff]
                  %2800 = vst [vmem:[%s2702 + $0xb8] sm:$0xff] %v2799
                  %v2801 = vld [vmem:[%s2701 + $0xa8] sm:$0xff]
                  %2802 = vst [vmem:[%s2702 + $0xc0] sm:$0xff] %v2801
                  %v2803 = vld [vmem:[%s2701 + $0xb0] sm:$0xff]
                  %2804 = vst [vmem:[%s2702 + $0xc8] sm:$0xff] %v2803
                  %v2805 = vld [vmem:[%s2701 + $0xb8] sm:$0xff]
                  %2806 = vst [vmem:[%s2702 + $0xd0] sm:$0xff] %v2805
                  %v2807 = vld [vmem:[%s2701 + $0xc0] sm:$0xff]
                  %2808 = vst [vmem:[%s2702 + $0xd8] sm:$0xff] %v2807
                  %v2809 = vld [vmem:[%s2701 + $0xc8] sm:$0xff]
                  %2810 = vst [vmem:[%s2702 + $0xe0] sm:$0xff] %v2809
                  %v2811 = vld [vmem:[%s2701 + $0xd0] sm:$0xff]
                  %2812 = vst [vmem:[%s2702 + $0xe8] sm:$0xff] %v2811
                  %v2813 = vld [vmem:[%s2701 + $0xd8] sm:$0xff]
                  %2814 = vst [vmem:[%s2702 + $0xf0] sm:$0xff] %v2813
                  %v2815 = vld [vmem:[%s2701 + $0xe0] sm:$0xff]
                  %2816 = vst [vmem:[%s2702 + $0xf8] sm:$0xff] %v2815
                  %v2817 = vld [vmem:[%s2701 + $0xe8] sm:$0xff]
                  %2818 = vst [vmem:[%s2702 + $0x100] sm:$0xff] %v2817
                  %v2819 = vld [vmem:[%s2701 + $0xf0] sm:$0xff]
                  %2820 = vst [vmem:[%s2702 + $0x108] sm:$0xff] %v2819
                  %v2821 = vld [vmem:[%s2701 + $0xf8] sm:$0xff]
                  %2822 = vst [vmem:[%s2702 + $0x110] sm:$0xff] %v2821
                  %v2823 = vld [vmem:[%s2701 + $0x100] sm:$0xff]
                  %2824 = vst [vmem:[%s2702 + $0x118] sm:$0xff] %v2823
                  %v2825 = vld [vmem:[%s2701 + $0x108] sm:$0xff]
                  %2826 = vst [vmem:[%s2702 + $0x120] sm:$0xff] %v2825
                  %v2827 = vld [vmem:[%s2701 + $0x110] sm:$0xff]
                  %2828 = vst [vmem:[%s2702 + $0x128] sm:$0xff] %v2827
                  %v2829 = vld [vmem:[%s2701 + $0x118] sm:$0xff]
                  %2830 = vst [vmem:[%s2702 + $0x130] sm:$0xff] %v2829
                  %s2831 = sadd.s32 1, %s2700
                  %p2832 = scmp.ge.s32.totalorder %s2831, %s2691
                  %s2833 = scalar_select %p2832, 0, %s2831
                  %s2834 = smul.u32 %s2833, 256
                  %s2835 = smul.u32 %s2833, 256
                  %s2836 = scalar_lea.vmem %s2448, %s2834 [#allocation3]
                  %s2837 = scalar_lea.vmem %s2473, %s2835
                $region152: #{vq_forward.1} parent=146 // loop_footer
                  %s2697 = sadd.s32 %s2695, 1
                $region153: #{vq_forward.1} parent=146 // loop_footer_branch
                  %2694 = sbr.rel target = $region149
                $region154: #{vq_forward.1} parent=146 // loop_exit
                  _
                %s2838 = sshrl.u32 %s2690, 5
                %s2839 = sand.u32 %s2690, 31
                %s2840 = smul.u32 %s2838, 32
                %s2841 = smul.u32 128, %s2840
                %s2842 = sshra.s32 %s2841, 4
                %s2843 = scalar_lea.vmem %s2448, %s2842 [#allocation3]
                %s2844 = smul.u32 128, %s2840
                %s2845 = sshra.s32 %s2844, 4
                %s2846 = scalar_lea.vmem %s2473, %s2845
                // While loop
                $region155: #{vq_forward.1} parent=146 // loop_pre_header
                  _
                $region156: #{vq_forward.1} parent=146 // loop_header
                  %s2850 = sphi 0, %s2852
                  %p2851 = scmp.ge.s32.totalorder %s2850, %s2839
                  %s2855 = sphi 0, %s2864
                  %s2856 = sphi %s2843, %s2867
                  %s2857 = sphi %s2846, %s2868
                $region157: #{vq_forward.1} parent=146 // loop_header_branch
                  %2854 = sbr.rel (%p2851) target = $region161
                $region158: #{vq_forward.1} parent=146 // loop_body
                  %v2858 = vld [vmem:[%s2856] sm:$0xff]
                  %2859 = vst [vmem:[%s2857] sm:$0xff] %v2858
                  %v2860 = vld [vmem:[%s2856 + $0x20] sm:$0xff]
                  %2861 = vst [vmem:[%s2857 + $0x38] sm:$0xff] %v2860
                  %s2862 = sadd.s32 1, %s2855
                  %p2863 = scmp.ge.s32.totalorder %s2862, %s2839
                  %s2864 = scalar_select %p2863, 0, %s2862
                  %s2865 = smul.u32 %s2864, 8
                  %s2866 = smul.u32 %s2864, 8
                  %s2867 = scalar_lea.vmem %s2843, %s2865 [#allocation3]
                  %s2868 = scalar_lea.vmem %s2846, %s2866
                $region159: #{vq_forward.1} parent=146 // loop_footer
                  %s2852 = sadd.s32 %s2850, 1
                $region160: #{vq_forward.1} parent=146 // loop_footer_branch
                  %2849 = sbr.rel target = $region156
                $region161: #{vq_forward.1} parent=146 // loop_exit
                  _
                %s2869 = sshllo.u32 0, %s2685
                loop: start=0, step=1, limit=1
                $region162: #{vq_forward.1} parent=146 // loop_pre_header
                  _
                $region163: #{vq_forward.1} parent=146 // loop_header
                  %s2871 = sphi 0, %s2875
                  %p2872 = scmp.ge.s32.totalorder %s2871, 1
                  %s2876 = sphi %s2687, %s2687
                  %s2877 = sphi %s2689, %s2689
                $region164: #{vq_forward.1} parent=146 // loop_header_branch
                  %2874 = sbr.rel (%p2872) target = $region168
                $region165: #{vq_forward.1} parent=146 // loop_body
                  %v2878 = vld [vmem:[%s2876] sm:%s2869]
                  %2879 = vst [vmem:[%s2877] sm:%s2869] %v2878
                  %v2880 = vld [vmem:[%s2876 + $0x20] sm:%s2869]
                  %2881 = vst [vmem:[%s2877 + $0x38] sm:%s2869] %v2880
                $region166: #{vq_forward.1} parent=146 // loop_footer
                  %s2875 = sadd.s32 1, %s2871
                $region167: #{vq_forward.1} parent=146 // loop_footer_branch
                  %2870 = sbr.rel target = $region163
                $region168: #{vq_forward.1} parent=146 // loop_exit
                  _
              $region147: #{vq_forward.1} parent=113 // pred_fallthru
                _
            $region114: #{vq_forward.1} parent=109 // pred_fallthru
              _
            // Predicated region
            $region115: #{vq_forward.1} parent=109 // pred_check
              %p2482 = pneg %p2478
            $region116: #{vq_forward.1} parent=109 // pred_check_branch
              %2484 = sbr.rel (%p2482) target = $region118
            $region117: #{vq_forward.1} parent=109 // pred_region
              %s2485 = sshllo.u32 0, %s2474
              loop: start=0, step=1, limit=1
              $region119: #{vq_forward.1} parent=117 // loop_pre_header
                _
              $region120: #{vq_forward.1} parent=117 // loop_header
                %s2487 = sphi 0, %s2491
                %p2488 = scmp.ge.s32.totalorder %s2487, 1
                %s2492 = sphi %s2448, %s2448
                %s2493 = sphi %s2473, %s2473
              $region121: #{vq_forward.1} parent=117 // loop_header_branch
                %2490 = sbr.rel (%p2488) target = $region125
              $region122: #{vq_forward.1} parent=117 // loop_body
                %v2494 = vld [vmem:[%s2492] sm:%s2485]
                %2495 = vst [vmem:[%s2493] sm:%s2485] %v2494
                %v2496 = vld [vmem:[%s2492 + $0x20] sm:%s2485]
                %2497 = vst [vmem:[%s2493 + $0x38] sm:%s2485] %v2496
              $region123: #{vq_forward.1} parent=117 // loop_footer
                %s2491 = sadd.s32 1, %s2487
              $region124: #{vq_forward.1} parent=117 // loop_footer_branch
                %2486 = sbr.rel target = $region120
              $region125: #{vq_forward.1} parent=117 // loop_exit
                _
            $region118: #{vq_forward.1} parent=109 // pred_fallthru
              _
          $region110: #{vq_forward.1} parent=105 // pred_fallthru
            _
          %2882 = vnop
        $region106: #{vq_forward.1} parent=97 // pred_fallthru
          _
        // Predicated region
        $region169: #{vq_forward.1} parent=97 // pred_check
          %p2883 = pneg %p152
        $region170: #{vq_forward.1} parent=97 // pred_check_branch
          %2885 = sbr.rel (%p2883) target = $region172
        $region171: #{vq_forward.1} parent=97 // pred_region
          %s2886 = smul.u32 4, %s19
          %s2887 = ssub.s32 7, %s2886
          %p2888 = scmp.lt.s32.totalorder %s2887, 4
          %s2889 = scalar_select %p2888, %s2887, 4
          %s2890 = smul.u32 16, %s2889
          %p2891 = scmp.ne.s32.totalorder 0, %s2890
          %s2892 = scalar_lea.vmem %s5, %s2886
          // Predicated region
          $region173: #{vq_forward.1} parent=171 // pred_check
            %p2893 = pneg %p2891
          $region174: #{vq_forward.1} parent=171 // pred_check_branch
            %2895 = sbr.rel (%p2893) target = $region176
          $region175: #{vq_forward.1} parent=171 // pred_region
            %p2896 = scmp.lt.u32.totalorder %s2889, 8
            %p2897 = pneg %p2896
            // Predicated region
            $region177: #{vq_forward.1} parent=175 // pred_check
              _
            $region178: #{vq_forward.1} parent=175 // pred_check_branch
              %2899 = sbr.rel (%p2896) target = $region180
            $region179: #{vq_forward.1} parent=175 // pred_region
              %s2914 = sand.u32 %s2889, 7
              %p2915 = scmp.eq.s32.totalorder %s2914, 0
              // Predicated region
              $region192: #{vq_forward.1} parent=179 // pred_check
                %p2916 = pneg %p2915
              $region193: #{vq_forward.1} parent=179 // pred_check_branch
                %2918 = sbr.rel (%p2916) target = $region195
              $region194: #{vq_forward.1} parent=179 // pred_region
                %s2919 = sshrl.u32 %s2889, 3
                %s2920 = sshrl.u32 %s2919, 6
                // While loop
                $region196: #{vq_forward.1} parent=194 // loop_pre_header
                  _
                $region197: #{vq_forward.1} parent=194 // loop_header
                  %s2924 = sphi 0, %s2926
                  %p2925 = scmp.ge.s32.totalorder %s2924, %s2920
                  %s2929 = sphi 0, %s3062
                  %s2930 = sphi %s2452, %s3065
                  %s2931 = sphi %s2892, %s3066
                $region198: #{vq_forward.1} parent=194 // loop_header_branch
                  %2928 = sbr.rel (%p2925) target = $region202
                $region199: #{vq_forward.1} parent=194 // loop_body
                  %v2932 = vld [vmem:[%s2930] sm:$0xff]
                  %2933 = vst [vmem:[%s2931] sm:$0xff] %v2932
                  %v2934 = vld [vmem:[%s2930 + $0x8] sm:$0xff]
                  %2935 = vst [vmem:[%s2931 + $0x8] sm:$0xff] %v2934
                  %v2936 = vld [vmem:[%s2930 + $0x10] sm:$0xff]
                  %2937 = vst [vmem:[%s2931 + $0x10] sm:$0xff] %v2936
                  %v2938 = vld [vmem:[%s2930 + $0x18] sm:$0xff]
                  %2939 = vst [vmem:[%s2931 + $0x18] sm:$0xff] %v2938
                  %v2940 = vld [vmem:[%s2930 + $0x20] sm:$0xff]
                  %2941 = vst [vmem:[%s2931 + $0x20] sm:$0xff] %v2940
                  %v2942 = vld [vmem:[%s2930 + $0x28] sm:$0xff]
                  %2943 = vst [vmem:[%s2931 + $0x28] sm:$0xff] %v2942
                  %v2944 = vld [vmem:[%s2930 + $0x30] sm:$0xff]
                  %2945 = vst [vmem:[%s2931 + $0x30] sm:$0xff] %v2944
                  %v2946 = vld [vmem:[%s2930 + $0x38] sm:$0xff]
                  %2947 = vst [vmem:[%s2931 + $0x38] sm:$0xff] %v2946
                  %v2948 = vld [vmem:[%s2930 + $0x40] sm:$0xff]
                  %2949 = vst [vmem:[%s2931 + $0x40] sm:$0xff] %v2948
                  %v2950 = vld [vmem:[%s2930 + $0x48] sm:$0xff]
                  %2951 = vst [vmem:[%s2931 + $0x48] sm:$0xff] %v2950
                  %v2952 = vld [vmem:[%s2930 + $0x50] sm:$0xff]
                  %2953 = vst [vmem:[%s2931 + $0x50] sm:$0xff] %v2952
                  %v2954 = vld [vmem:[%s2930 + $0x58] sm:$0xff]
                  %2955 = vst [vmem:[%s2931 + $0x58] sm:$0xff] %v2954
                  %v2956 = vld [vmem:[%s2930 + $0x60] sm:$0xff]
                  %2957 = vst [vmem:[%s2931 + $0x60] sm:$0xff] %v2956
                  %v2958 = vld [vmem:[%s2930 + $0x68] sm:$0xff]
                  %2959 = vst [vmem:[%s2931 + $0x68] sm:$0xff] %v2958
                  %v2960 = vld [vmem:[%s2930 + $0x70] sm:$0xff]
                  %2961 = vst [vmem:[%s2931 + $0x70] sm:$0xff] %v2960
                  %v2962 = vld [vmem:[%s2930 + $0x78] sm:$0xff]
                  %2963 = vst [vmem:[%s2931 + $0x78] sm:$0xff] %v2962
                  %v2964 = vld [vmem:[%s2930 + $0x80] sm:$0xff]
                  %2965 = vst [vmem:[%s2931 + $0x80] sm:$0xff] %v2964
                  %v2966 = vld [vmem:[%s2930 + $0x88] sm:$0xff]
                  %2967 = vst [vmem:[%s2931 + $0x88] sm:$0xff] %v2966
                  %v2968 = vld [vmem:[%s2930 + $0x90] sm:$0xff]
                  %2969 = vst [vmem:[%s2931 + $0x90] sm:$0xff] %v2968
                  %v2970 = vld [vmem:[%s2930 + $0x98] sm:$0xff]
                  %2971 = vst [vmem:[%s2931 + $0x98] sm:$0xff] %v2970
                  %v2972 = vld [vmem:[%s2930 + $0xa0] sm:$0xff]
                  %2973 = vst [vmem:[%s2931 + $0xa0] sm:$0xff] %v2972
                  %v2974 = vld [vmem:[%s2930 + $0xa8] sm:$0xff]
                  %2975 = vst [vmem:[%s2931 + $0xa8] sm:$0xff] %v2974
                  %v2976 = vld [vmem:[%s2930 + $0xb0] sm:$0xff]
                  %2977 = vst [vmem:[%s2931 + $0xb0] sm:$0xff] %v2976
                  %v2978 = vld [vmem:[%s2930 + $0xb8] sm:$0xff]
                  %2979 = vst [vmem:[%s2931 + $0xb8] sm:$0xff] %v2978
                  %v2980 = vld [vmem:[%s2930 + $0xc0] sm:$0xff]
                  %2981 = vst [vmem:[%s2931 + $0xc0] sm:$0xff] %v2980
                  %v2982 = vld [vmem:[%s2930 + $0xc8] sm:$0xff]
                  %2983 = vst [vmem:[%s2931 + $0xc8] sm:$0xff] %v2982
                  %v2984 = vld [vmem:[%s2930 + $0xd0] sm:$0xff]
                  %2985 = vst [vmem:[%s2931 + $0xd0] sm:$0xff] %v2984
                  %v2986 = vld [vmem:[%s2930 + $0xd8] sm:$0xff]
                  %2987 = vst [vmem:[%s2931 + $0xd8] sm:$0xff] %v2986
                  %v2988 = vld [vmem:[%s2930 + $0xe0] sm:$0xff]
                  %2989 = vst [vmem:[%s2931 + $0xe0] sm:$0xff] %v2988
                  %v2990 = vld [vmem:[%s2930 + $0xe8] sm:$0xff]
                  %2991 = vst [vmem:[%s2931 + $0xe8] sm:$0xff] %v2990
                  %v2992 = vld [vmem:[%s2930 + $0xf0] sm:$0xff]
                  %2993 = vst [vmem:[%s2931 + $0xf0] sm:$0xff] %v2992
                  %v2994 = vld [vmem:[%s2930 + $0xf8] sm:$0xff]
                  %2995 = vst [vmem:[%s2931 + $0xf8] sm:$0xff] %v2994
                  %v2996 = vld [vmem:[%s2930 + $0x100] sm:$0xff]
                  %2997 = vst [vmem:[%s2931 + $0x100] sm:$0xff] %v2996
                  %v2998 = vld [vmem:[%s2930 + $0x108] sm:$0xff]
                  %2999 = vst [vmem:[%s2931 + $0x108] sm:$0xff] %v2998
                  %v3000 = vld [vmem:[%s2930 + $0x110] sm:$0xff]
                  %3001 = vst [vmem:[%s2931 + $0x110] sm:$0xff] %v3000
                  %v3002 = vld [vmem:[%s2930 + $0x118] sm:$0xff]
                  %3003 = vst [vmem:[%s2931 + $0x118] sm:$0xff] %v3002
                  %v3004 = vld [vmem:[%s2930 + $0x120] sm:$0xff]
                  %3005 = vst [vmem:[%s2931 + $0x120] sm:$0xff] %v3004
                  %v3006 = vld [vmem:[%s2930 + $0x128] sm:$0xff]
                  %3007 = vst [vmem:[%s2931 + $0x128] sm:$0xff] %v3006
                  %v3008 = vld [vmem:[%s2930 + $0x130] sm:$0xff]
                  %3009 = vst [vmem:[%s2931 + $0x130] sm:$0xff] %v3008
                  %v3010 = vld [vmem:[%s2930 + $0x138] sm:$0xff]
                  %3011 = vst [vmem:[%s2931 + $0x138] sm:$0xff] %v3010
                  %v3012 = vld [vmem:[%s2930 + $0x140] sm:$0xff]
                  %3013 = vst [vmem:[%s2931 + $0x140] sm:$0xff] %v3012
                  %v3014 = vld [vmem:[%s2930 + $0x148] sm:$0xff]
                  %3015 = vst [vmem:[%s2931 + $0x148] sm:$0xff] %v3014
                  %v3016 = vld [vmem:[%s2930 + $0x150] sm:$0xff]
                  %3017 = vst [vmem:[%s2931 + $0x150] sm:$0xff] %v3016
                  %v3018 = vld [vmem:[%s2930 + $0x158] sm:$0xff]
                  %3019 = vst [vmem:[%s2931 + $0x158] sm:$0xff] %v3018
                  %v3020 = vld [vmem:[%s2930 + $0x160] sm:$0xff]
                  %3021 = vst [vmem:[%s2931 + $0x160] sm:$0xff] %v3020
                  %v3022 = vld [vmem:[%s2930 + $0x168] sm:$0xff]
                  %3023 = vst [vmem:[%s2931 + $0x168] sm:$0xff] %v3022
                  %v3024 = vld [vmem:[%s2930 + $0x170] sm:$0xff]
                  %3025 = vst [vmem:[%s2931 + $0x170] sm:$0xff] %v3024
                  %v3026 = vld [vmem:[%s2930 + $0x178] sm:$0xff]
                  %3027 = vst [vmem:[%s2931 + $0x178] sm:$0xff] %v3026
                  %v3028 = vld [vmem:[%s2930 + $0x180] sm:$0xff]
                  %3029 = vst [vmem:[%s2931 + $0x180] sm:$0xff] %v3028
                  %v3030 = vld [vmem:[%s2930 + $0x188] sm:$0xff]
                  %3031 = vst [vmem:[%s2931 + $0x188] sm:$0xff] %v3030
                  %v3032 = vld [vmem:[%s2930 + $0x190] sm:$0xff]
                  %3033 = vst [vmem:[%s2931 + $0x190] sm:$0xff] %v3032
                  %v3034 = vld [vmem:[%s2930 + $0x198] sm:$0xff]
                  %3035 = vst [vmem:[%s2931 + $0x198] sm:$0xff] %v3034
                  %v3036 = vld [vmem:[%s2930 + $0x1a0] sm:$0xff]
                  %3037 = vst [vmem:[%s2931 + $0x1a0] sm:$0xff] %v3036
                  %v3038 = vld [vmem:[%s2930 + $0x1a8] sm:$0xff]
                  %3039 = vst [vmem:[%s2931 + $0x1a8] sm:$0xff] %v3038
                  %v3040 = vld [vmem:[%s2930 + $0x1b0] sm:$0xff]
                  %3041 = vst [vmem:[%s2931 + $0x1b0] sm:$0xff] %v3040
                  %v3042 = vld [vmem:[%s2930 + $0x1b8] sm:$0xff]
                  %3043 = vst [vmem:[%s2931 + $0x1b8] sm:$0xff] %v3042
                  %v3044 = vld [vmem:[%s2930 + $0x1c0] sm:$0xff]
                  %3045 = vst [vmem:[%s2931 + $0x1c0] sm:$0xff] %v3044
                  %v3046 = vld [vmem:[%s2930 + $0x1c8] sm:$0xff]
                  %3047 = vst [vmem:[%s2931 + $0x1c8] sm:$0xff] %v3046
                  %v3048 = vld [vmem:[%s2930 + $0x1d0] sm:$0xff]
                  %3049 = vst [vmem:[%s2931 + $0x1d0] sm:$0xff] %v3048
                  %v3050 = vld [vmem:[%s2930 + $0x1d8] sm:$0xff]
                  %3051 = vst [vmem:[%s2931 + $0x1d8] sm:$0xff] %v3050
                  %v3052 = vld [vmem:[%s2930 + $0x1e0] sm:$0xff]
                  %3053 = vst [vmem:[%s2931 + $0x1e0] sm:$0xff] %v3052
                  %v3054 = vld [vmem:[%s2930 + $0x1e8] sm:$0xff]
                  %3055 = vst [vmem:[%s2931 + $0x1e8] sm:$0xff] %v3054
                  %v3056 = vld [vmem:[%s2930 + $0x1f0] sm:$0xff]
                  %3057 = vst [vmem:[%s2931 + $0x1f0] sm:$0xff] %v3056
                  %v3058 = vld [vmem:[%s2930 + $0x1f8] sm:$0xff]
                  %3059 = vst [vmem:[%s2931 + $0x1f8] sm:$0xff] %v3058
                  %s3060 = sadd.s32 1, %s2929
                  %p3061 = scmp.ge.s32.totalorder %s3060, %s2920
                  %s3062 = scalar_select %p3061, 0, %s3060
                  %s3063 = smul.u32 %s3062, 512
                  %s3064 = smul.u32 %s3062, 512
                  %s3065 = scalar_lea.vmem %s2452, %s3063 [#allocation4]
                  %s3066 = scalar_lea.vmem %s2892, %s3064
                $region200: #{vq_forward.1} parent=194 // loop_footer
                  %s2926 = sadd.s32 %s2924, 1
                $region201: #{vq_forward.1} parent=194 // loop_footer_branch
                  %2923 = sbr.rel target = $region197
                $region202: #{vq_forward.1} parent=194 // loop_exit
                  _
                %s3067 = sshrl.u32 %s2919, 6
                %s3068 = sand.u32 %s2919, 63
                %s3069 = smul.u32 %s3067, 64
                %s3070 = smul.u32 128, %s3069
                %s3071 = sshra.s32 %s3070, 4
                %s3072 = scalar_lea.vmem %s2452, %s3071 [#allocation4]
                %s3073 = smul.u32 128, %s3069
                %s3074 = sshra.s32 %s3073, 4
                %s3075 = scalar_lea.vmem %s2892, %s3074
                // While loop
                $region203: #{vq_forward.1} parent=194 // loop_pre_header
                  _
                $region204: #{vq_forward.1} parent=194 // loop_header
                  %s3079 = sphi 0, %s3081
                  %p3080 = scmp.ge.s32.totalorder %s3079, %s3068
                  %s3084 = sphi 0, %s3091
                  %s3085 = sphi %s3072, %s3094
                  %s3086 = sphi %s3075, %s3095
                $region205: #{vq_forward.1} parent=194 // loop_header_branch
                  %3083 = sbr.rel (%p3080) target = $region209
                $region206: #{vq_forward.1} parent=194 // loop_body
                  %v3087 = vld [vmem:[%s3085] sm:$0xff]
                  %3088 = vst [vmem:[%s3086] sm:$0xff] %v3087
                  %s3089 = sadd.s32 1, %s3084
                  %p3090 = scmp.ge.s32.totalorder %s3089, %s3068
                  %s3091 = scalar_select %p3090, 0, %s3089
                  %s3092 = smul.u32 %s3091, 8
                  %s3093 = smul.u32 %s3091, 8
                  %s3094 = scalar_lea.vmem %s3072, %s3092 [#allocation4]
                  %s3095 = scalar_lea.vmem %s3075, %s3093
                $region207: #{vq_forward.1} parent=194 // loop_footer
                  %s3081 = sadd.s32 %s3079, 1
                $region208: #{vq_forward.1} parent=194 // loop_footer_branch
                  %3078 = sbr.rel target = $region204
                $region209: #{vq_forward.1} parent=194 // loop_exit
                  _
              $region195: #{vq_forward.1} parent=179 // pred_fallthru
                _
              %p3096 = pneg %p2915
              // Predicated region
              $region210: #{vq_forward.1} parent=179 // pred_check
                _
              $region211: #{vq_forward.1} parent=179 // pred_check_branch
                %3098 = sbr.rel (%p2915) target = $region213
              $region212: #{vq_forward.1} parent=179 // pred_region
                %s3099 = sand.u32 %s2889, 7
                %s3100 = ssub.s32 %s2889, %s3099
                %s3101 = scalar_lea.vmem %s2452, %s3100 [#allocation4]
                %s3102 = ssub.s32 %s2889, %s3099
                %s3103 = scalar_lea.vmem %s2892, %s3102
                %s3104 = sshrl.u32 %s2889, 3
                %s3105 = sshrl.u32 %s3104, 6
                // While loop
                $region214: #{vq_forward.1} parent=212 // loop_pre_header
                  _
                $region215: #{vq_forward.1} parent=212 // loop_header
                  %s3109 = sphi 0, %s3111
                  %p3110 = scmp.ge.s32.totalorder %s3109, %s3105
                  %s3114 = sphi 0, %s3247
                  %s3115 = sphi %s2452, %s3250
                  %s3116 = sphi %s2892, %s3251
                $region216: #{vq_forward.1} parent=212 // loop_header_branch
                  %3113 = sbr.rel (%p3110) target = $region220
                $region217: #{vq_forward.1} parent=212 // loop_body
                  %v3117 = vld [vmem:[%s3115] sm:$0xff]
                  %3118 = vst [vmem:[%s3116] sm:$0xff] %v3117
                  %v3119 = vld [vmem:[%s3115 + $0x8] sm:$0xff]
                  %3120 = vst [vmem:[%s3116 + $0x8] sm:$0xff] %v3119
                  %v3121 = vld [vmem:[%s3115 + $0x10] sm:$0xff]
                  %3122 = vst [vmem:[%s3116 + $0x10] sm:$0xff] %v3121
                  %v3123 = vld [vmem:[%s3115 + $0x18] sm:$0xff]
                  %3124 = vst [vmem:[%s3116 + $0x18] sm:$0xff] %v3123
                  %v3125 = vld [vmem:[%s3115 + $0x20] sm:$0xff]
                  %3126 = vst [vmem:[%s3116 + $0x20] sm:$0xff] %v3125
                  %v3127 = vld [vmem:[%s3115 + $0x28] sm:$0xff]
                  %3128 = vst [vmem:[%s3116 + $0x28] sm:$0xff] %v3127
                  %v3129 = vld [vmem:[%s3115 + $0x30] sm:$0xff]
                  %3130 = vst [vmem:[%s3116 + $0x30] sm:$0xff] %v3129
                  %v3131 = vld [vmem:[%s3115 + $0x38] sm:$0xff]
                  %3132 = vst [vmem:[%s3116 + $0x38] sm:$0xff] %v3131
                  %v3133 = vld [vmem:[%s3115 + $0x40] sm:$0xff]
                  %3134 = vst [vmem:[%s3116 + $0x40] sm:$0xff] %v3133
                  %v3135 = vld [vmem:[%s3115 + $0x48] sm:$0xff]
                  %3136 = vst [vmem:[%s3116 + $0x48] sm:$0xff] %v3135
                  %v3137 = vld [vmem:[%s3115 + $0x50] sm:$0xff]
                  %3138 = vst [vmem:[%s3116 + $0x50] sm:$0xff] %v3137
                  %v3139 = vld [vmem:[%s3115 + $0x58] sm:$0xff]
                  %3140 = vst [vmem:[%s3116 + $0x58] sm:$0xff] %v3139
                  %v3141 = vld [vmem:[%s3115 + $0x60] sm:$0xff]
                  %3142 = vst [vmem:[%s3116 + $0x60] sm:$0xff] %v3141
                  %v3143 = vld [vmem:[%s3115 + $0x68] sm:$0xff]
                  %3144 = vst [vmem:[%s3116 + $0x68] sm:$0xff] %v3143
                  %v3145 = vld [vmem:[%s3115 + $0x70] sm:$0xff]
                  %3146 = vst [vmem:[%s3116 + $0x70] sm:$0xff] %v3145
                  %v3147 = vld [vmem:[%s3115 + $0x78] sm:$0xff]
                  %3148 = vst [vmem:[%s3116 + $0x78] sm:$0xff] %v3147
                  %v3149 = vld [vmem:[%s3115 + $0x80] sm:$0xff]
                  %3150 = vst [vmem:[%s3116 + $0x80] sm:$0xff] %v3149
                  %v3151 = vld [vmem:[%s3115 + $0x88] sm:$0xff]
                  %3152 = vst [vmem:[%s3116 + $0x88] sm:$0xff] %v3151
                  %v3153 = vld [vmem:[%s3115 + $0x90] sm:$0xff]
                  %3154 = vst [vmem:[%s3116 + $0x90] sm:$0xff] %v3153
                  %v3155 = vld [vmem:[%s3115 + $0x98] sm:$0xff]
                  %3156 = vst [vmem:[%s3116 + $0x98] sm:$0xff] %v3155
                  %v3157 = vld [vmem:[%s3115 + $0xa0] sm:$0xff]
                  %3158 = vst [vmem:[%s3116 + $0xa0] sm:$0xff] %v3157
                  %v3159 = vld [vmem:[%s3115 + $0xa8] sm:$0xff]
                  %3160 = vst [vmem:[%s3116 + $0xa8] sm:$0xff] %v3159
                  %v3161 = vld [vmem:[%s3115 + $0xb0] sm:$0xff]
                  %3162 = vst [vmem:[%s3116 + $0xb0] sm:$0xff] %v3161
                  %v3163 = vld [vmem:[%s3115 + $0xb8] sm:$0xff]
                  %3164 = vst [vmem:[%s3116 + $0xb8] sm:$0xff] %v3163
                  %v3165 = vld [vmem:[%s3115 + $0xc0] sm:$0xff]
                  %3166 = vst [vmem:[%s3116 + $0xc0] sm:$0xff] %v3165
                  %v3167 = vld [vmem:[%s3115 + $0xc8] sm:$0xff]
                  %3168 = vst [vmem:[%s3116 + $0xc8] sm:$0xff] %v3167
                  %v3169 = vld [vmem:[%s3115 + $0xd0] sm:$0xff]
                  %3170 = vst [vmem:[%s3116 + $0xd0] sm:$0xff] %v3169
                  %v3171 = vld [vmem:[%s3115 + $0xd8] sm:$0xff]
                  %3172 = vst [vmem:[%s3116 + $0xd8] sm:$0xff] %v3171
                  %v3173 = vld [vmem:[%s3115 + $0xe0] sm:$0xff]
                  %3174 = vst [vmem:[%s3116 + $0xe0] sm:$0xff] %v3173
                  %v3175 = vld [vmem:[%s3115 + $0xe8] sm:$0xff]
                  %3176 = vst [vmem:[%s3116 + $0xe8] sm:$0xff] %v3175
                  %v3177 = vld [vmem:[%s3115 + $0xf0] sm:$0xff]
                  %3178 = vst [vmem:[%s3116 + $0xf0] sm:$0xff] %v3177
                  %v3179 = vld [vmem:[%s3115 + $0xf8] sm:$0xff]
                  %3180 = vst [vmem:[%s3116 + $0xf8] sm:$0xff] %v3179
                  %v3181 = vld [vmem:[%s3115 + $0x100] sm:$0xff]
                  %3182 = vst [vmem:[%s3116 + $0x100] sm:$0xff] %v3181
                  %v3183 = vld [vmem:[%s3115 + $0x108] sm:$0xff]
                  %3184 = vst [vmem:[%s3116 + $0x108] sm:$0xff] %v3183
                  %v3185 = vld [vmem:[%s3115 + $0x110] sm:$0xff]
                  %3186 = vst [vmem:[%s3116 + $0x110] sm:$0xff] %v3185
                  %v3187 = vld [vmem:[%s3115 + $0x118] sm:$0xff]
                  %3188 = vst [vmem:[%s3116 + $0x118] sm:$0xff] %v3187
                  %v3189 = vld [vmem:[%s3115 + $0x120] sm:$0xff]
                  %3190 = vst [vmem:[%s3116 + $0x120] sm:$0xff] %v3189
                  %v3191 = vld [vmem:[%s3115 + $0x128] sm:$0xff]
                  %3192 = vst [vmem:[%s3116 + $0x128] sm:$0xff] %v3191
                  %v3193 = vld [vmem:[%s3115 + $0x130] sm:$0xff]
                  %3194 = vst [vmem:[%s3116 + $0x130] sm:$0xff] %v3193
                  %v3195 = vld [vmem:[%s3115 + $0x138] sm:$0xff]
                  %3196 = vst [vmem:[%s3116 + $0x138] sm:$0xff] %v3195
                  %v3197 = vld [vmem:[%s3115 + $0x140] sm:$0xff]
                  %3198 = vst [vmem:[%s3116 + $0x140] sm:$0xff] %v3197
                  %v3199 = vld [vmem:[%s3115 + $0x148] sm:$0xff]
                  %3200 = vst [vmem:[%s3116 + $0x148] sm:$0xff] %v3199
                  %v3201 = vld [vmem:[%s3115 + $0x150] sm:$0xff]
                  %3202 = vst [vmem:[%s3116 + $0x150] sm:$0xff] %v3201
                  %v3203 = vld [vmem:[%s3115 + $0x158] sm:$0xff]
                  %3204 = vst [vmem:[%s3116 + $0x158] sm:$0xff] %v3203
                  %v3205 = vld [vmem:[%s3115 + $0x160] sm:$0xff]
                  %3206 = vst [vmem:[%s3116 + $0x160] sm:$0xff] %v3205
                  %v3207 = vld [vmem:[%s3115 + $0x168] sm:$0xff]
                  %3208 = vst [vmem:[%s3116 + $0x168] sm:$0xff] %v3207
                  %v3209 = vld [vmem:[%s3115 + $0x170] sm:$0xff]
                  %3210 = vst [vmem:[%s3116 + $0x170] sm:$0xff] %v3209
                  %v3211 = vld [vmem:[%s3115 + $0x178] sm:$0xff]
                  %3212 = vst [vmem:[%s3116 + $0x178] sm:$0xff] %v3211
                  %v3213 = vld [vmem:[%s3115 + $0x180] sm:$0xff]
                  %3214 = vst [vmem:[%s3116 + $0x180] sm:$0xff] %v3213
                  %v3215 = vld [vmem:[%s3115 + $0x188] sm:$0xff]
                  %3216 = vst [vmem:[%s3116 + $0x188] sm:$0xff] %v3215
                  %v3217 = vld [vmem:[%s3115 + $0x190] sm:$0xff]
                  %3218 = vst [vmem:[%s3116 + $0x190] sm:$0xff] %v3217
                  %v3219 = vld [vmem:[%s3115 + $0x198] sm:$0xff]
                  %3220 = vst [vmem:[%s3116 + $0x198] sm:$0xff] %v3219
                  %v3221 = vld [vmem:[%s3115 + $0x1a0] sm:$0xff]
                  %3222 = vst [vmem:[%s3116 + $0x1a0] sm:$0xff] %v3221
                  %v3223 = vld [vmem:[%s3115 + $0x1a8] sm:$0xff]
                  %3224 = vst [vmem:[%s3116 + $0x1a8] sm:$0xff] %v3223
                  %v3225 = vld [vmem:[%s3115 + $0x1b0] sm:$0xff]
                  %3226 = vst [vmem:[%s3116 + $0x1b0] sm:$0xff] %v3225
                  %v3227 = vld [vmem:[%s3115 + $0x1b8] sm:$0xff]
                  %3228 = vst [vmem:[%s3116 + $0x1b8] sm:$0xff] %v3227
                  %v3229 = vld [vmem:[%s3115 + $0x1c0] sm:$0xff]
                  %3230 = vst [vmem:[%s3116 + $0x1c0] sm:$0xff] %v3229
                  %v3231 = vld [vmem:[%s3115 + $0x1c8] sm:$0xff]
                  %3232 = vst [vmem:[%s3116 + $0x1c8] sm:$0xff] %v3231
                  %v3233 = vld [vmem:[%s3115 + $0x1d0] sm:$0xff]
                  %3234 = vst [vmem:[%s3116 + $0x1d0] sm:$0xff] %v3233
                  %v3235 = vld [vmem:[%s3115 + $0x1d8] sm:$0xff]
                  %3236 = vst [vmem:[%s3116 + $0x1d8] sm:$0xff] %v3235
                  %v3237 = vld [vmem:[%s3115 + $0x1e0] sm:$0xff]
                  %3238 = vst [vmem:[%s3116 + $0x1e0] sm:$0xff] %v3237
                  %v3239 = vld [vmem:[%s3115 + $0x1e8] sm:$0xff]
                  %3240 = vst [vmem:[%s3116 + $0x1e8] sm:$0xff] %v3239
                  %v3241 = vld [vmem:[%s3115 + $0x1f0] sm:$0xff]
                  %3242 = vst [vmem:[%s3116 + $0x1f0] sm:$0xff] %v3241
                  %v3243 = vld [vmem:[%s3115 + $0x1f8] sm:$0xff]
                  %3244 = vst [vmem:[%s3116 + $0x1f8] sm:$0xff] %v3243
                  %s3245 = sadd.s32 1, %s3114
                  %p3246 = scmp.ge.s32.totalorder %s3245, %s3105
                  %s3247 = scalar_select %p3246, 0, %s3245
                  %s3248 = smul.u32 %s3247, 512
                  %s3249 = smul.u32 %s3247, 512
                  %s3250 = scalar_lea.vmem %s2452, %s3248 [#allocation4]
                  %s3251 = scalar_lea.vmem %s2892, %s3249
                $region218: #{vq_forward.1} parent=212 // loop_footer
                  %s3111 = sadd.s32 %s3109, 1
                $region219: #{vq_forward.1} parent=212 // loop_footer_branch
                  %3108 = sbr.rel target = $region215
                $region220: #{vq_forward.1} parent=212 // loop_exit
                  _
                %s3252 = sshrl.u32 %s3104, 6
                %s3253 = sand.u32 %s3104, 63
                %s3254 = smul.u32 %s3252, 64
                %s3255 = smul.u32 128, %s3254
                %s3256 = sshra.s32 %s3255, 4
                %s3257 = scalar_lea.vmem %s2452, %s3256 [#allocation4]
                %s3258 = smul.u32 128, %s3254
                %s3259 = sshra.s32 %s3258, 4
                %s3260 = scalar_lea.vmem %s2892, %s3259
                // While loop
                $region221: #{vq_forward.1} parent=212 // loop_pre_header
                  _
                $region222: #{vq_forward.1} parent=212 // loop_header
                  %s3264 = sphi 0, %s3266
                  %p3265 = scmp.ge.s32.totalorder %s3264, %s3253
                  %s3269 = sphi 0, %s3276
                  %s3270 = sphi %s3257, %s3279
                  %s3271 = sphi %s3260, %s3280
                $region223: #{vq_forward.1} parent=212 // loop_header_branch
                  %3268 = sbr.rel (%p3265) target = $region227
                $region224: #{vq_forward.1} parent=212 // loop_body
                  %v3272 = vld [vmem:[%s3270] sm:$0xff]
                  %3273 = vst [vmem:[%s3271] sm:$0xff] %v3272
                  %s3274 = sadd.s32 1, %s3269
                  %p3275 = scmp.ge.s32.totalorder %s3274, %s3253
                  %s3276 = scalar_select %p3275, 0, %s3274
                  %s3277 = smul.u32 %s3276, 8
                  %s3278 = smul.u32 %s3276, 8
                  %s3279 = scalar_lea.vmem %s3257, %s3277 [#allocation4]
                  %s3280 = scalar_lea.vmem %s3260, %s3278
                $region225: #{vq_forward.1} parent=212 // loop_footer
                  %s3266 = sadd.s32 %s3264, 1
                $region226: #{vq_forward.1} parent=212 // loop_footer_branch
                  %3263 = sbr.rel target = $region222
                $region227: #{vq_forward.1} parent=212 // loop_exit
                  _
                %s3281 = sshllo.u32 0, %s3099
                loop: start=0, step=1, limit=1
                $region228: #{vq_forward.1} parent=212 // loop_pre_header
                  _
                $region229: #{vq_forward.1} parent=212 // loop_header
                  %s3283 = sphi 0, %s3287
                  %p3284 = scmp.ge.s32.totalorder %s3283, 1
                  %s3288 = sphi %s3101, %s3101
                  %s3289 = sphi %s3103, %s3103
                $region230: #{vq_forward.1} parent=212 // loop_header_branch
                  %3286 = sbr.rel (%p3284) target = $region234
                $region231: #{vq_forward.1} parent=212 // loop_body
                  %v3290 = vld [vmem:[%s3288] sm:%s3281]
                  %3291 = vst [vmem:[%s3289] sm:%s3281] %v3290
                $region232: #{vq_forward.1} parent=212 // loop_footer
                  %s3287 = sadd.s32 1, %s3283
                $region233: #{vq_forward.1} parent=212 // loop_footer_branch
                  %3282 = sbr.rel target = $region229
                $region234: #{vq_forward.1} parent=212 // loop_exit
                  _
              $region213: #{vq_forward.1} parent=179 // pred_fallthru
                _
            $region180: #{vq_forward.1} parent=175 // pred_fallthru
              _
            // Predicated region
            $region181: #{vq_forward.1} parent=175 // pred_check
              %p2900 = pneg %p2896
            $region182: #{vq_forward.1} parent=175 // pred_check_branch
              %2902 = sbr.rel (%p2900) target = $region184
            $region183: #{vq_forward.1} parent=175 // pred_region
              %s2903 = sshllo.u32 0, %s2889
              loop: start=0, step=1, limit=1
              $region185: #{vq_forward.1} parent=183 // loop_pre_header
                _
              $region186: #{vq_forward.1} parent=183 // loop_header
                %s2905 = sphi 0, %s2909
                %p2906 = scmp.ge.s32.totalorder %s2905, 1
                %s2910 = sphi %s2452, %s2452
                %s2911 = sphi %s2892, %s2892
              $region187: #{vq_forward.1} parent=183 // loop_header_branch
                %2908 = sbr.rel (%p2906) target = $region191
              $region188: #{vq_forward.1} parent=183 // loop_body
                %v2912 = vld [vmem:[%s2910] sm:%s2903]
                %2913 = vst [vmem:[%s2911] sm:%s2903] %v2912
              $region189: #{vq_forward.1} parent=183 // loop_footer
                %s2909 = sadd.s32 1, %s2905
              $region190: #{vq_forward.1} parent=183 // loop_footer_branch
                %2904 = sbr.rel target = $region186
              $region191: #{vq_forward.1} parent=183 // loop_exit
                _
            $region184: #{vq_forward.1} parent=175 // pred_fallthru
              _
          $region176: #{vq_forward.1} parent=171 // pred_fallthru
            _
          %3292 = vnop
        $region172: #{vq_forward.1} parent=97 // pred_fallthru
          _
        // Predicated region
        $region235: #{vq_forward.1} parent=97 // pred_check
          %p3293 = pneg %p178
        $region236: #{vq_forward.1} parent=97 // pred_check_branch
          %3295 = sbr.rel (%p3293) target = $region238
        $region237: #{vq_forward.1} parent=97 // pred_region
          _
        $region238: #{vq_forward.1} parent=97 // pred_fallthru
          _
        // Predicated region
        $region239: #{vq_forward.1} parent=97 // pred_check
          %p3296 = pneg %p204
        $region240: #{vq_forward.1} parent=97 // pred_check_branch
          %3298 = sbr.rel (%p3296) target = $region242
        $region241: #{vq_forward.1} parent=97 // pred_region
          _
        $region242: #{vq_forward.1} parent=97 // pred_fallthru
          _
      $region98: #{vq_forward.1} parent=5 // pred_fallthru
        _
      %p3299 = scmp.le.s32.totalorder 2, %s14
      // Predicated region
      $region243: #{vq_forward.1} parent=5 // pred_check
        %p3300 = pneg %p3299
      $region244: #{vq_forward.1} parent=5 // pred_check_branch
        %3302 = sbr.rel (%p3300) target = $region246
      $region245: #{vq_forward.1} parent=5 // pred_region
        %s3303 = ssub.s32 %s14, 2
        // Predicated region
        $region247: #{vq_forward.1} parent=245 // pred_check
          %p3304 = pneg %p132
        $region248: #{vq_forward.1} parent=245 // pred_check_branch
          %3306 = sbr.rel (%p3304) target = $region250
        $region249: #{vq_forward.1} parent=245 // pred_region
          %s3307 = sand.u32 %s117, 1
          %s3308 = sand.u32 %s117, 1
          %s3309 = smul.addr %s3308, 64
          %s3310 = scalar_lea.vmem [#allocation3], %s3309
        $region250: #{vq_forward.1} parent=245 // pred_fallthru
          _
        // Predicated region
        $region251: #{vq_forward.1} parent=245 // pred_check
          %p3311 = pneg %p158
        $region252: #{vq_forward.1} parent=245 // pred_check_branch
          %3313 = sbr.rel (%p3311) target = $region254
        $region253: #{vq_forward.1} parent=245 // pred_region
          %s3314 = sand.u32 %s143, 1
          %s3315 = sand.u32 %s143, 1
          %s3316 = smul.addr %s3315, 4
          %s3317 = scalar_lea.vmem [#allocation4], %s3316
        $region254: #{vq_forward.1} parent=245 // pred_fallthru
          _
        // Predicated region
        $region255: #{vq_forward.1} parent=245 // pred_check
          %p3318 = pneg %p184
        $region256: #{vq_forward.1} parent=245 // pred_check_branch
          %3320 = sbr.rel (%p3318) target = $region258
        $region257: #{vq_forward.1} parent=245 // pred_region
          %p3321 = scmp.lt.s32.totalorder %s20, 1
          %s3322 = scalar_select %p3321, %s20, 1
          %s3323 = smul.addr %s3322, 2
          %s3324 = smul.addr %s3323, 8
          %s3325 = scalar_lea.vmem %s6, %s3324
        $region258: #{vq_forward.1} parent=245 // pred_fallthru
          _
        // Predicated region
        $region259: #{vq_forward.1} parent=245 // pred_check
          %p3326 = pneg %p210
        $region260: #{vq_forward.1} parent=245 // pred_check_branch
          %3328 = sbr.rel (%p3326) target = $region262
        $region261: #{vq_forward.1} parent=245 // pred_region
          %p3329 = scmp.lt.s32.totalorder %s20, 1
          %s3330 = scalar_select %p3329, %s20, 1
          %s3331 = smul.addr %s3330, 16
          %s3332 = smul.addr %s3331, 8
          %s3333 = scalar_lea.vmem %s7, %s3332
        $region262: #{vq_forward.1} parent=245 // pred_fallthru
          _
      $region246: #{vq_forward.1} parent=5 // pred_fallthru
        _
    $region6: #{vq_forward.1} parent=1 // loop_footer
      %s18 = sadd.s32 1, %s14
    $region7: #{vq_forward.1} parent=1 // loop_footer_branch
      %13 = sbr.rel target = $region3
    $region8: #{vq_forward.1} parent=1 // loop_exit
      _

</llo_original>
